<compile_context>
chip_gen: v5e
topology: v5e:2x2
jax: 0.10.0
libtpu: 0.0.40
codegen_flags: <defaults>
</compile_context>

<pallas_src>
import functools

import jax
import jax.numpy as jnp
from jax.experimental import pallas as pl
from jax.experimental.pallas import tpu as pltpu

LANE = 128  # TPU lane width (channel / K padding target)


def _round_up(x, m):
    return (x + m - 1) // m * m


def _double_conv_kernel(cols_ref, masks_ref, w1_ref, b1_ref, w2_ref, b2_ref,
                        o_ref, *, H, W, negative_slope, eps, matmul_dtype):
    """One batch element, fully VMEM-resident.

    cols_ref : (1, HW, K1p)   host-built im2col of the input (conv1 LHS)
    masks_ref: (HW, 9)        f32 boundary masks for the 9 conv2 taps
    w1_ref   : (K1p, Cp)      conv1 taps stacked along K, padded
    b1_ref   : (1, Cp)
    w2_ref   : (9*Cp, Cp)     conv2 taps stacked along K, padded
    b2_ref   : (1, Cp)
    o_ref    : (1, HW, Cp)    lane-dense flattened output tile (f32)
    """
    HW = H * W
    inv_hw = 1.0 / HW

    def instance_norm_lrelu(acc, b_ref):
        y = acc + b_ref[...]                              # (HW, Cp) f32
        # single-pass InstanceNorm (biased variance), f32 epilogue
        s = jnp.sum(y, axis=0, keepdims=True)
        ss = jnp.sum(y * y, axis=0, keepdims=True)
        mean = s * inv_hw
        var = jnp.maximum(ss * inv_hw - mean * mean, 0.0)  # clamp cancellation
        y = (y - mean) * jax.lax.rsqrt(var + eps)
        return jnp.where(y >= 0, y, negative_slope * y)    # LeakyReLU(0.2)

    # ---------------- conv1: single fused-K matmul --------------------------
    acc1 = jnp.dot(cols_ref[0], w1_ref[...], preferred_element_type=jnp.float32)
    y1 = instance_norm_lrelu(acc1, b1_ref)                 # (HW, Cp) f32
    # (padded output channels of y1 stay exactly zero: zero weights/bias,
    #  zero mean, clamped zero variance.)

    # ---------------- conv2: roll + mask + single stacked-K matmul ----------
    patches = []
    t = 0
    for di in (-1, 0, 1):
        for dj in (-1, 0, 1):
            d = di * W + dj
            if d == 0:
                p = y1
            else:
                # patch[p] = y1[p + d] with circular wrap on the sublane axis
                # (XLU rotate), then zero the wrapped / out-of-image rows via
                # the host-precomputed per-tap mask.
                p = pltpu.roll(y1, shift=(-d) % HW, axis=0)
                p = p * masks_ref[:, t:t + 1]
            patches.append(p.astype(matmul_dtype))
            t += 1
    lhs = jnp.concatenate(patches, axis=1)                  # (HW, 9*Cp)
    acc2 = jnp.dot(lhs, w2_ref[...], preferred_element_type=jnp.float32)
    o_ref[0] = instance_norm_lrelu(acc2, b2_ref)


def double_conv_block(x_nchw, w1, b1, w2, b2, *, negative_slope=0.2, eps=1e-5,
                      matmul_dtype=jnp.bfloat16):
    """DoubleConvBlock forward pass (PyTorch semantics).

    x_nchw : (N, Cin, H, W)
    w1     : (Cout, Cin, 3, 3)   torch OIHW layout
    b1     : (Cout,)
    w2     : (Cout, Cout, 3, 3)
    b2     : (Cout,)
    returns: (N, Cout, H, W)
    """
    n, cin, h, w = x_nchw.shape
    cout = w1.shape[0]
    assert tuple(w1.shape[2:]) == (3, 3) and tuple(w2.shape[2:]) == (3, 3)
    hw = h * w
    cp = _round_up(max(cout, LANE), LANE)          # lane-dense channel padding
    k1 = 9 * cin
    k1p = _round_up(k1, LANE)                      # lane-dense conv1 K padding

    # ---- host-side im2col for conv1 (tiny Cin -> only 9x a small tensor) ---
    x = jnp.transpose(x_nchw, (0, 2, 3, 1)).astype(jnp.float32)   # NHWC
    xp = jnp.pad(x, ((0, 0), (1, 1), (1, 1), (0, 0)))
    cols = jnp.concatenate(
        [xp[:, i:i + h, j:j + w, :] for i in range(3) for j in range(3)],
        axis=-1).reshape(n, hw, k1)
    cols = jnp.pad(cols, ((0, 0), (0, 0), (0, k1p - k1))).astype(matmul_dtype)

    # ---- weights stacked along K, channel-padded, pre-cast to matmul dtype -
    w1s = jnp.transpose(w1, (2, 3, 1, 0)).reshape(k1, cout)
    w1s = jnp.pad(w1s, ((0, k1p - k1), (0, cp - cout))).astype(matmul_dtype)

    w2s = jnp.transpose(w2, (2, 3, 1, 0)).reshape(9, cout, cout)
    w2s = jnp.pad(w2s, ((0, 0), (0, cp - cout), (0, cp - cout)))
    w2s = w2s.reshape(9 * cp, cp).astype(matmul_dtype)

    b1p = jnp.pad(b1, (0, cp - cout)).reshape(1, cp).astype(jnp.float32)
    b2p = jnp.pad(b2, (0, cp - cout)).reshape(1, cp).astype(jnp.float32)

    # ---- per-tap boundary masks over the flattened HW axis (9 KB total) ----
    rr = jnp.arange(h).reshape(h, 1)
    cc = jnp.arange(w).reshape(1, w)
    mlist = []
    for di in (-1, 0, 1):
        for dj in (-1, 0, 1):
            mr = (rr + di >= 0) & (rr + di < h)
            mc = (cc + dj >= 0) & (cc + dj < w)
            mlist.append((mr & mc).astype(jnp.float32).reshape(hw))
    masks = jnp.stack(mlist, axis=1)                        # (hw, 9)

    kern = functools.partial(_double_conv_kernel, H=h, W=w,
                             negative_slope=negative_slope, eps=eps,
                             matmul_dtype=matmul_dtype)

    out = pl.pallas_call(
        kern,
        out_shape=jax.ShapeDtypeStruct((n, hw, cp), jnp.float32),
        grid=(n,),
        in_specs=[
            pl.BlockSpec((1, hw, k1p), lambda b: (b, 0, 0)),
            pl.BlockSpec((hw, 9), lambda b: (0, 0)),
            pl.BlockSpec((k1p, cp), lambda b: (0, 0)),
            pl.BlockSpec((1, cp), lambda b: (0, 0)),
            pl.BlockSpec((9 * cp, cp), lambda b: (0, 0)),
            pl.BlockSpec((1, cp), lambda b: (0, 0)),
        ],
        out_specs=pl.BlockSpec((1, hw, cp), lambda b: (b, 0, 0)),
        compiler_params=pltpu.CompilerParams(
            dimension_semantics=("parallel",),
            vmem_limit_bytes=32 * 1024 * 1024),
    )(cols, masks, w1s, b1p, w2s, b2p)

    # Drop the channel padding, restore spatial dims and NCHW layout.
    out = out[:, :, :cout].reshape(n, h, w, cout)
    return jnp.transpose(out, (0, 3, 1, 2)).astype(x_nchw.dtype)


def _reference(x_nchw, w1, b1, w2, b2, negative_slope=0.2, eps=1e-5):
    """Pure-JAX reference matching the PyTorch module."""
    def layer(x, wt, b):
        y = jax.lax.conv_general_dilated(
            x, wt, window_strides=(1, 1), padding=((1, 1), (1, 1)),
            dimension_numbers=("NCHW", "OIHW", "NCHW"),
            precision=jax.lax.Precision.HIGHEST)
        y = y + b[None, :, None, None]
        mean = jnp.mean(y, axis=(2, 3), keepdims=True)
        var = jnp.mean(jnp.square(y - mean), axis=(2, 3), keepdims=True)
        y = (y - mean) * jax.lax.rsqrt(var + eps)
        return jnp.where(y >= 0, y, negative_slope * y)

    return layer(layer(x_nchw, w1, b1), w2, b2)


if __name__ == "__main__":
    BATCH, CIN, COUT, H, W = 2, 4, 32, 16, 16

    key = jax.random.PRNGKey(0)
    kx, k1, k2, k3, k4 = jax.random.split(key, 5)

    x = jax.random.normal(kx, (BATCH, CIN, H, W), jnp.float32)
    w1 = jax.random.normal(k1, (COUT, CIN, 3, 3), jnp.float32) / (9 * CIN) ** 0.5
    b1 = jax.random.normal(k2, (COUT,), jnp.float32) * 0.01
    w2 = jax.random.normal(k3, (COUT, COUT, 3, 3), jnp.float32) / (9 * COUT) ** 0.5
    b2 = jax.random.normal(k4, (COUT,), jnp.float32) * 0.01

    fwd = jax.jit(double_conv_block)           # default: bf16 MXU, f32 epilogue
    out = jax.block_until_ready(fwd(x, w1, b1, w2, b2))

    assert out.shape == (BATCH, COUT, H, W), out.shape
    assert bool(jnp.all(jnp.isfinite(out)))

    # numerical sanity check against a pure-JAX f32 reference
    # (tolerance accounts for bf16 MXU operands; structural errors would be O(1))
    ref = _reference(x, w1, b1, w2, b2)
    err = float(jnp.max(jnp.abs(out - ref)))
    assert err < 1e-1, f"max abs error vs reference: {err}"

    print("KERNEL_OK")
</pallas_src>

<mosaic_0001>
module attributes {stable_mosaic.version = 11 : i64} {
  func.func @_double_conv_kernel(%arg0: i32, %arg1: memref<1x256x128xbf16, #tpu.memory_space<vmem>>, %arg2: memref<256x9xf32, #tpu.memory_space<vmem>>, %arg3: memref<128x128xbf16, #tpu.memory_space<vmem>>, %arg4: memref<1x128xf32, #tpu.memory_space<vmem>>, %arg5: memref<1152x128xbf16, #tpu.memory_space<vmem>>, %arg6: memref<1x128xf32, #tpu.memory_space<vmem>>, %arg7: memref<1x256x128xf32, #tpu.memory_space<vmem>>) attributes {dimension_semantics = [#tpu.dimension_semantics<parallel>], iteration_bounds = array<i64: 2>, scalar_prefetch = 0 : i64, scratch_operands = 0 : i64, tpu.core_type = #tpu.core_type<tc>, window_params = [{transform_indices = @transform_0, window_bounds = array<i64: 1, 256, 128>}, {pipeline_mode = #tpu.pipeline_mode<synchronous>, transform_indices = @transform_1, window_bounds = array<i64: 256, 9>}, {pipeline_mode = #tpu.pipeline_mode<synchronous>, transform_indices = @transform_2, window_bounds = array<i64: 128, 128>}, {pipeline_mode = #tpu.pipeline_mode<synchronous>, transform_indices = @transform_3, window_bounds = array<i64: 1, 128>}, {pipeline_mode = #tpu.pipeline_mode<synchronous>, transform_indices = @transform_4, window_bounds = array<i64: 1152, 128>}, {pipeline_mode = #tpu.pipeline_mode<synchronous>, transform_indices = @transform_5, window_bounds = array<i64: 1, 128>}, {transform_indices = @transform_6, window_bounds = array<i64: 1, 256, 128>}]} {
    %c0 = arith.constant 0 : index
    %c0_0 = arith.constant 0 : index
    %c0_1 = arith.constant 0 : index
    %0 = vector.load %arg1[%c0, %c0_0, %c0_1] : memref<1x256x128xbf16, #tpu.memory_space<vmem>>, vector<1x256x128xbf16>
    %1 = vector.shape_cast %0 : vector<1x256x128xbf16> to vector<256x128xbf16>
    %c0_2 = arith.constant 0 : index
    %c0_3 = arith.constant 0 : index
    %2 = vector.load %arg3[%c0_2, %c0_3] : memref<128x128xbf16, #tpu.memory_space<vmem>>, vector<128x128xbf16>
    %cst = arith.constant dense<0.000000e+00> : vector<256x128xf32>
    %3 = tpu.matmul %1, %2, %cst {dimension_numbers = #tpu.dot_dimension_numbers<[1], [0], [0], [1], [0, 0, 1, 1], [], []>} : vector<256x128xbf16>, vector<128x128xbf16>, vector<256x128xf32> -> vector<256x128xf32>
    %c0_4 = arith.constant 0 : index
    %c0_5 = arith.constant 0 : index
    %4 = vector.load %arg4[%c0_4, %c0_5] : memref<1x128xf32, #tpu.memory_space<vmem>>, vector<1x128xf32>
    %5 = vector.broadcast %4 : vector<1x128xf32> to vector<256x128xf32>
    %6 = arith.addf %3, %5 : vector<256x128xf32>
    %cst_6 = arith.constant dense<0.000000e+00> : vector<128xf32>
    %7 = vector.multi_reduction <add>, %6, %cst_6 [0] : vector<256x128xf32> to vector<128xf32>
    %8 = vector.shape_cast %7 : vector<128xf32> to vector<1x128xf32>
    %9 = arith.mulf %6, %6 : vector<256x128xf32>
    %cst_7 = arith.constant dense<0.000000e+00> : vector<128xf32>
    %10 = vector.multi_reduction <add>, %9, %cst_7 [0] : vector<256x128xf32> to vector<128xf32>
    %11 = vector.shape_cast %10 : vector<128xf32> to vector<1x128xf32>
    %cst_8 = arith.constant 3.906250e-03 : f32
    %12 = vector.broadcast %cst_8 : f32 to vector<1x128xf32>
    %13 = arith.mulf %8, %12 : vector<1x128xf32>
    %cst_9 = arith.constant 3.906250e-03 : f32
    %14 = vector.broadcast %cst_9 : f32 to vector<1x128xf32>
    %15 = arith.mulf %11, %14 : vector<1x128xf32>
    %16 = arith.mulf %13, %13 : vector<1x128xf32>
    %17 = arith.subf %15, %16 : vector<1x128xf32>
    %cst_10 = arith.constant 0.000000e+00 : f32
    %18 = vector.broadcast %cst_10 : f32 to vector<1x128xf32>
    %19 = arith.maximumf %17, %18 : vector<1x128xf32>
    %20 = vector.broadcast %13 : vector<1x128xf32> to vector<256x128xf32>
    %21 = arith.subf %6, %20 : vector<256x128xf32>
    %cst_11 = arith.constant 9.99999974E-6 : f32
    %22 = vector.broadcast %cst_11 : f32 to vector<1x128xf32>
    %23 = arith.addf %19, %22 : vector<1x128xf32>
    %24 = math.rsqrt %23 : vector<1x128xf32>
    %25 = vector.broadcast %24 : vector<1x128xf32> to vector<256x128xf32>
    %26 = arith.mulf %21, %25 : vector<256x128xf32>
    %cst_12 = arith.constant 0.000000e+00 : f32
    %27 = vector.broadcast %cst_12 : f32 to vector<256x128xf32>
    %28 = arith.cmpf oge, %26, %27 : vector<256x128xf32>
    %cst_13 = arith.constant 2.000000e-01 : f32
    %29 = vector.broadcast %cst_13 : f32 to vector<256x128xf32>
    %30 = arith.mulf %29, %26 : vector<256x128xf32>
    %31 = arith.select %28, %26, %30 : vector<256x128xi1>, vector<256x128xf32>
    %c17_i32 = arith.constant 17 : i32
    %32 = tpu.dynamic_rotate %31 by %c17_i32 dim 0 : vector<256x128xf32>, i32 -> vector<256x128xf32>
    %c0_14 = arith.constant 0 : index
    %c0_15 = arith.constant 0 : index
    %33 = vector.load %arg2[%c0_14, %c0_15] : memref<256x9xf32, #tpu.memory_space<vmem>>, vector<256x1xf32>
    %34 = vector.broadcast %33 : vector<256x1xf32> to vector<256x128xf32>
    %35 = arith.mulf %32, %34 : vector<256x128xf32>
    %36 = arith.truncf %35 : vector<256x128xf32> to vector<256x128xbf16>
    %c16_i32 = arith.constant 16 : i32
    %37 = tpu.dynamic_rotate %31 by %c16_i32 dim 0 : vector<256x128xf32>, i32 -> vector<256x128xf32>
    %c0_16 = arith.constant 0 : index
    %c1 = arith.constant 1 : index
    %38 = vector.load %arg2[%c0_16, %c1] : memref<256x9xf32, #tpu.memory_space<vmem>>, vector<256x1xf32>
    %39 = vector.broadcast %38 : vector<256x1xf32> to vector<256x128xf32>
    %40 = arith.mulf %37, %39 : vector<256x128xf32>
    %41 = arith.truncf %40 : vector<256x128xf32> to vector<256x128xbf16>
    %c15_i32 = arith.constant 15 : i32
    %42 = tpu.dynamic_rotate %31 by %c15_i32 dim 0 : vector<256x128xf32>, i32 -> vector<256x128xf32>
    %c0_17 = arith.constant 0 : index
    %c2 = arith.constant 2 : index
    %43 = vector.load %arg2[%c0_17, %c2] : memref<256x9xf32, #tpu.memory_space<vmem>>, vector<256x1xf32>
    %44 = vector.broadcast %43 : vector<256x1xf32> to vector<256x128xf32>
    %45 = arith.mulf %42, %44 : vector<256x128xf32>
    %46 = arith.truncf %45 : vector<256x128xf32> to vector<256x128xbf16>
    %c1_i32 = arith.constant 1 : i32
    %47 = tpu.dynamic_rotate %31 by %c1_i32 dim 0 : vector<256x128xf32>, i32 -> vector<256x128xf32>
    %c0_18 = arith.constant 0 : index
    %c3 = arith.constant 3 : index
    %48 = vector.load %arg2[%c0_18, %c3] : memref<256x9xf32, #tpu.memory_space<vmem>>, vector<256x1xf32>
    %49 = vector.broadcast %48 : vector<256x1xf32> to vector<256x128xf32>
    %50 = arith.mulf %47, %49 : vector<256x128xf32>
    %51 = arith.truncf %50 : vector<256x128xf32> to vector<256x128xbf16>
    %52 = arith.truncf %31 : vector<256x128xf32> to vector<256x128xbf16>
    %c255_i32 = arith.constant 255 : i32
    %53 = tpu.dynamic_rotate %31 by %c255_i32 dim 0 : vector<256x128xf32>, i32 -> vector<256x128xf32>
    %c0_19 = arith.constant 0 : index
    %c5 = arith.constant 5 : index
    %54 = vector.load %arg2[%c0_19, %c5] : memref<256x9xf32, #tpu.memory_space<vmem>>, vector<256x1xf32>
    %55 = vector.broadcast %54 : vector<256x1xf32> to vector<256x128xf32>
    %56 = arith.mulf %53, %55 : vector<256x128xf32>
    %57 = arith.truncf %56 : vector<256x128xf32> to vector<256x128xbf16>
    %c241_i32 = arith.constant 241 : i32
    %58 = tpu.dynamic_rotate %31 by %c241_i32 dim 0 : vector<256x128xf32>, i32 -> vector<256x128xf32>
    %c0_20 = arith.constant 0 : index
    %c6 = arith.constant 6 : index
    %59 = vector.load %arg2[%c0_20, %c6] : memref<256x9xf32, #tpu.memory_space<vmem>>, vector<256x1xf32>
    %60 = vector.broadcast %59 : vector<256x1xf32> to vector<256x128xf32>
    %61 = arith.mulf %58, %60 : vector<256x128xf32>
    %62 = arith.truncf %61 : vector<256x128xf32> to vector<256x128xbf16>
    %c240_i32 = arith.constant 240 : i32
    %63 = tpu.dynamic_rotate %31 by %c240_i32 dim 0 : vector<256x128xf32>, i32 -> vector<256x128xf32>
    %c0_21 = arith.constant 0 : index
    %c7 = arith.constant 7 : index
    %64 = vector.load %arg2[%c0_21, %c7] : memref<256x9xf32, #tpu.memory_space<vmem>>, vector<256x1xf32>
    %65 = vector.broadcast %64 : vector<256x1xf32> to vector<256x128xf32>
    %66 = arith.mulf %63, %65 : vector<256x128xf32>
    %67 = arith.truncf %66 : vector<256x128xf32> to vector<256x128xbf16>
    %c239_i32 = arith.constant 239 : i32
    %68 = tpu.dynamic_rotate %31 by %c239_i32 dim 0 : vector<256x128xf32>, i32 -> vector<256x128xf32>
    %c0_22 = arith.constant 0 : index
    %c8 = arith.constant 8 : index
    %69 = vector.load %arg2[%c0_22, %c8] : memref<256x9xf32, #tpu.memory_space<vmem>>, vector<256x1xf32>
    %70 = vector.broadcast %69 : vector<256x1xf32> to vector<256x128xf32>
    %71 = arith.mulf %68, %70 : vector<256x128xf32>
    %72 = arith.truncf %71 : vector<256x128xf32> to vector<256x128xbf16>
    %73 = tpu.concatenate %36, %41, %46, %51, %52, %57, %62, %67, %72 in 1 : vector<256x128xbf16>, vector<256x128xbf16>, vector<256x128xbf16>, vector<256x128xbf16>, vector<256x128xbf16>, vector<256x128xbf16>, vector<256x128xbf16>, vector<256x128xbf16>, vector<256x128xbf16> -> vector<256x1152xbf16>
    %c0_23 = arith.constant 0 : index
    %c0_24 = arith.constant 0 : index
    %74 = vector.load %arg5[%c0_23, %c0_24] : memref<1152x128xbf16, #tpu.memory_space<vmem>>, vector<1152x128xbf16>
    %cst_25 = arith.constant dense<0.000000e+00> : vector<256x128xf32>
    %75 = tpu.matmul %73, %74, %cst_25 {dimension_numbers = #tpu.dot_dimension_numbers<[1], [0], [0], [1], [0, 0, 1, 1], [], []>} : vector<256x1152xbf16>, vector<1152x128xbf16>, vector<256x128xf32> -> vector<256x128xf32>
    %c0_26 = arith.constant 0 : index
    %c0_27 = arith.constant 0 : index
    %76 = vector.load %arg6[%c0_26, %c0_27] : memref<1x128xf32, #tpu.memory_space<vmem>>, vector<1x128xf32>
    %77 = vector.broadcast %76 : vector<1x128xf32> to vector<256x128xf32>
    %78 = arith.addf %75, %77 : vector<256x128xf32>
    %cst_28 = arith.constant dense<0.000000e+00> : vector<128xf32>
    %79 = vector.multi_reduction <add>, %78, %cst_28 [0] : vector<256x128xf32> to vector<128xf32>
    %80 = vector.shape_cast %79 : vector<128xf32> to vector<1x128xf32>
    %81 = arith.mulf %78, %78 : vector<256x128xf32>
    %cst_29 = arith.constant dense<0.000000e+00> : vector<128xf32>
    %82 = vector.multi_reduction <add>, %81, %cst_29 [0] : vector<256x128xf32> to vector<128xf32>
    %83 = vector.shape_cast %82 : vector<128xf32> to vector<1x128xf32>
    %cst_30 = arith.constant 3.906250e-03 : f32
    %84 = vector.broadcast %cst_30 : f32 to vector<1x128xf32>
    %85 = arith.mulf %80, %84 : vector<1x128xf32>
    %cst_31 = arith.constant 3.906250e-03 : f32
    %86 = vector.broadcast %cst_31 : f32 to vector<1x128xf32>
    %87 = arith.mulf %83, %86 : vector<1x128xf32>
    %88 = arith.mulf %85, %85 : vector<1x128xf32>
    %89 = arith.subf %87, %88 : vector<1x128xf32>
    %cst_32 = arith.constant 0.000000e+00 : f32
    %90 = vector.broadcast %cst_32 : f32 to vector<1x128xf32>
    %91 = arith.maximumf %89, %90 : vector<1x128xf32>
    %92 = vector.broadcast %85 : vector<1x128xf32> to vector<256x128xf32>
    %93 = arith.subf %78, %92 : vector<256x128xf32>
    %cst_33 = arith.constant 9.99999974E-6 : f32
    %94 = vector.broadcast %cst_33 : f32 to vector<1x128xf32>
    %95 = arith.addf %91, %94 : vector<1x128xf32>
    %96 = math.rsqrt %95 : vector<1x128xf32>
    %97 = vector.broadcast %96 : vector<1x128xf32> to vector<256x128xf32>
    %98 = arith.mulf %93, %97 : vector<256x128xf32>
    %cst_34 = arith.constant 0.000000e+00 : f32
    %99 = vector.broadcast %cst_34 : f32 to vector<256x128xf32>
    %100 = arith.cmpf oge, %98, %99 : vector<256x128xf32>
    %cst_35 = arith.constant 2.000000e-01 : f32
    %101 = vector.broadcast %cst_35 : f32 to vector<256x128xf32>
    %102 = arith.mulf %101, %98 : vector<256x128xf32>
    %103 = arith.select %100, %98, %102 : vector<256x128xi1>, vector<256x128xf32>
    %c0_36 = arith.constant 0 : index
    %c0_37 = arith.constant 0 : index
    %c0_38 = arith.constant 0 : index
    %104 = vector.load %arg7[%c0_36, %c0_37, %c0_38] : memref<1x256x128xf32, #tpu.memory_space<vmem>>, vector<1x256x128xf32>
    %105 = vector.shape_cast %104 : vector<1x256x128xf32> to vector<256x128xf32>
    %106 = vector.shape_cast %103 : vector<256x128xf32> to vector<1x256x128xf32>
    tpu.vector_store %arg7[%c0_36, %c0_37, %c0_38], %106 {strides = array<i32>} : memref<1x256x128xf32, #tpu.memory_space<vmem>>, vector<1x256x128xf32>,
    return
  }
  func.func @transform_0(%arg0: i32) -> (i32, i32, i32) {
    %c0_i32 = arith.constant 0 : i32
    %c0_i32_0 = arith.constant 0 : i32
    %c0_i32_1 = arith.constant 0 : i32
    return %arg0, %c0_i32, %c0_i32_0 : i32, i32, i32
  }
  func.func @transform_1(%arg0: i32) -> (i32, i32) {
    %c0_i32 = arith.constant 0 : i32
    %c0_i32_0 = arith.constant 0 : i32
    %c0_i32_1 = arith.constant 0 : i32
    return %c0_i32, %c0_i32_0 : i32, i32
  }
  func.func @transform_2(%arg0: i32) -> (i32, i32) {
    %c0_i32 = arith.constant 0 : i32
    %c0_i32_0 = arith.constant 0 : i32
    %c0_i32_1 = arith.constant 0 : i32
    return %c0_i32, %c0_i32_0 : i32, i32
  }
  func.func @transform_3(%arg0: i32) -> (i32, i32) {
    %c0_i32 = arith.constant 0 : i32
    %c0_i32_0 = arith.constant 0 : i32
    %c0_i32_1 = arith.constant 0 : i32
    return %c0_i32, %c0_i32_0 : i32, i32
  }
  func.func @transform_4(%arg0: i32) -> (i32, i32) {
    %c0_i32 = arith.constant 0 : i32
    %c0_i32_0 = arith.constant 0 : i32
    %c0_i32_1 = arith.constant 0 : i32
    return %c0_i32, %c0_i32_0 : i32, i32
  }
  func.func @transform_5(%arg0: i32) -> (i32, i32) {
    %c0_i32 = arith.constant 0 : i32
    %c0_i32_0 = arith.constant 0 : i32
    %c0_i32_1 = arith.constant 0 : i32
    return %c0_i32, %c0_i32_0 : i32, i32
  }
  func.func @transform_6(%arg0: i32) -> (i32, i32, i32) {
    %c0_i32 = arith.constant 0 : i32
    %c0_i32_0 = arith.constant 0 : i32
    %c0_i32_1 = arith.constant 0 : i32
    return %arg0, %c0_i32, %c0_i32_0 : i32, i32, i32
  }
}

</mosaic_0001>

<llo_original>
// kernel: double_conv_block.1
$region0: #{double_conv_block.1}
  #allocation0 [shape = 'u32[]', space=smem, size = 0x4, offset = 0x4, fixed_abs, tag = 'smem constant byte address 0x4 - core index']
  #allocation1 [shape = 'u32[72,128]{1,0:T(1,128)}', space=vmem, size = 0x9000, scoped, tag = 'internal scratch']
  %s0 = inlined_call_operand.vmem [shape: bf16[2,256,128], index: 0, kind: input, shape index: {}]
  %s1 = inlined_call_operand.vmem [shape: f32[256,9], index: 1, kind: input, shape index: {}]
  %s2 = inlined_call_operand.vmem [shape: bf16[128,128], index: 2, kind: input, shape index: {}]
  %s3 = inlined_call_operand.vmem [shape: f32[1,128], index: 3, kind: input, shape index: {}]
  %s4 = inlined_call_operand.vmem [shape: bf16[1152,128], index: 4, kind: input, shape index: {}]
  %s5 = inlined_call_operand.vmem [shape: f32[1,128], index: 5, kind: input, shape index: {}]
  %s6 = inlined_call_operand.hbm [shape: f32[2,256,128], index: 6, kind: output, shape index: {}]
  %s7 = sld [smem:[#allocation0]]
  $region57: #{double_conv_block.1} parent=0
    _
  %s9 = ssub.s32 1, %s7
  %s10 = scalar_select 0, %s9, %s7
  $region1: #{double_conv_block.1} parent=0
    #allocation2 [shape = 'u8[262144]{0}', space=vmem, size = 0x40000, scoped, tag = 'output window, operand 0']
    #allocation3 [shape = 's32[2]{0}', space=sflag, size = 0x8, scoped, tag = 'scoped memory for double_conv_block.1']
    %11 = vsyncpa [#allocation3], 0
    %s12 = scalar_lea.sflag [#allocation3], 1
    %13 = vsyncpa %s12, 0
    loop: start=0, step=1, limit=4
    $region2: #{double_conv_block.1} parent=1 // loop_pre_header
      _
    $region3: #{double_conv_block.1} parent=1 // loop_header
      %s15 = sphi 0, %s19
      %p16 = scmp.ge.s32.totalorder %s15, 4
      %s25 = sphi 0, %s27
      %s28 = sphi 0, %s25
      %s29 = sphi 0, %s28
      %s45 = sphi 0, %s29
      %s49 = sphi 0, %s49
      %s51 = sphi 0, %s49
      %s52 = sphi 0, %s51
      %s66 = sphi 0, %s52
      %s70 = sphi 0, %s70
      %s72 = sphi 0, %s70
      %s73 = sphi 0, %s72
      %s87 = sphi 0, %s73
      %s91 = sphi 0, %s91
      %s93 = sphi 0, %s91
      %s94 = sphi 0, %s93
      %s108 = sphi 0, %s94
      %s112 = sphi 0, %s112
      %s114 = sphi 0, %s112
      %s115 = sphi 0, %s114
      %s129 = sphi 0, %s115
      %s133 = sphi 0, %s133
      %s135 = sphi 0, %s133
      %s136 = sphi 0, %s135
      %s150 = sphi 0, %s136
      %s156 = sphi 0, %s158
      %s159 = sphi 0, %s156
      %s160 = sphi 0, %s159
      %s176 = sphi 0, %s160
    $region4: #{double_conv_block.1} parent=1 // loop_header_branch
      %18 = sbr.rel (%p16) target = $region8
    $region5: #{double_conv_block.1} parent=1 // loop_body
      %s20 = ssub.s32 %s15, 1
      %s21 = ssub.s32 %s15, 2
      %s22 = sadd.s32 %s15, 1
      %s23 = ssub.s32 %s15, %s22
      %p24 = scmp.eq.s32.totalorder %s23, 0
      %s26 = sadd.s32 %s25, 1
      %s27 = scalar_select %p24, %s25, %s26
      %p30 = pneg %p24
      %p31 = scmp.eq.s32.totalorder %s15, 1
      %p32 = por %p30, %p31
      %p33 = scmp.ne.s32.totalorder %s25, %s28
      %p34 = scmp.eq.s32.totalorder %s15, 0
      %p35 = por %p33, %p34
      %p36 = scmp.ne.s32.totalorder %s25, %s28
      %p37 = scmp.eq.s32.totalorder %s20, 1
      %p38 = por %p36, %p37
      %p39 = scmp.ne.s32.totalorder %s28, %s29
      %p40 = scmp.eq.s32.totalorder %s20, 0
      %p41 = por %p39, %p40
      %p42 = scmp.ne.s32.totalorder %s28, %s29
      %p43 = scmp.eq.s32.totalorder %s21, 1
      %p44 = por %p42, %p43
      %p46 = scmp.ne.s32.totalorder %s29, %s45
      %p47 = scmp.eq.s32.totalorder %s21, 0
      %p48 = por %p46, %p47
      %s50 = sadd.s32 %s49, 1
      %p53 = scmp.eq.s32.totalorder %s15, 1
      %p54 = scmp.ne.s32.totalorder %s49, %s51
      %p55 = scmp.eq.s32.totalorder %s15, 0
      %p56 = por %p54, %p55
      %p57 = scmp.ne.s32.totalorder %s49, %s51
      %p58 = scmp.eq.s32.totalorder %s20, 1
      %p59 = por %p57, %p58
      %p60 = scmp.ne.s32.totalorder %s51, %s52
      %p61 = scmp.eq.s32.totalorder %s20, 0
      %p62 = por %p60, %p61
      %p63 = scmp.ne.s32.totalorder %s51, %s52
      %p64 = scmp.eq.s32.totalorder %s21, 1
      %p65 = por %p63, %p64
      %p67 = scmp.ne.s32.totalorder %s52, %s66
      %p68 = scmp.eq.s32.totalorder %s21, 0
      %p69 = por %p67, %p68
      %s71 = sadd.s32 %s70, 1
      %p74 = scmp.eq.s32.totalorder %s15, 1
      %p75 = scmp.ne.s32.totalorder %s70, %s72
      %p76 = scmp.eq.s32.totalorder %s15, 0
      %p77 = por %p75, %p76
      %p78 = scmp.ne.s32.totalorder %s70, %s72
      %p79 = scmp.eq.s32.totalorder %s20, 1
      %p80 = por %p78, %p79
      %p81 = scmp.ne.s32.totalorder %s72, %s73
      %p82 = scmp.eq.s32.totalorder %s20, 0
      %p83 = por %p81, %p82
      %p84 = scmp.ne.s32.totalorder %s72, %s73
      %p85 = scmp.eq.s32.totalorder %s21, 1
      %p86 = por %p84, %p85
      %p88 = scmp.ne.s32.totalorder %s73, %s87
      %p89 = scmp.eq.s32.totalorder %s21, 0
      %p90 = por %p88, %p89
      %s92 = sadd.s32 %s91, 1
      %p95 = scmp.eq.s32.totalorder %s15, 1
      %p96 = scmp.ne.s32.totalorder %s91, %s93
      %p97 = scmp.eq.s32.totalorder %s15, 0
      %p98 = por %p96, %p97
      %p99 = scmp.ne.s32.totalorder %s91, %s93
      %p100 = scmp.eq.s32.totalorder %s20, 1
      %p101 = por %p99, %p100
      %p102 = scmp.ne.s32.totalorder %s93, %s94
      %p103 = scmp.eq.s32.totalorder %s20, 0
      %p104 = por %p102, %p103
      %p105 = scmp.ne.s32.totalorder %s93, %s94
      %p106 = scmp.eq.s32.totalorder %s21, 1
      %p107 = por %p105, %p106
      %p109 = scmp.ne.s32.totalorder %s94, %s108
      %p110 = scmp.eq.s32.totalorder %s21, 0
      %p111 = por %p109, %p110
      %s113 = sadd.s32 %s112, 1
      %p116 = scmp.eq.s32.totalorder %s15, 1
      %p117 = scmp.ne.s32.totalorder %s112, %s114
      %p118 = scmp.eq.s32.totalorder %s15, 0
      %p119 = por %p117, %p118
      %p120 = scmp.ne.s32.totalorder %s112, %s114
      %p121 = scmp.eq.s32.totalorder %s20, 1
      %p122 = por %p120, %p121
      %p123 = scmp.ne.s32.totalorder %s114, %s115
      %p124 = scmp.eq.s32.totalorder %s20, 0
      %p125 = por %p123, %p124
      %p126 = scmp.ne.s32.totalorder %s114, %s115
      %p127 = scmp.eq.s32.totalorder %s21, 1
      %p128 = por %p126, %p127
      %p130 = scmp.ne.s32.totalorder %s115, %s129
      %p131 = scmp.eq.s32.totalorder %s21, 0
      %p132 = por %p130, %p131
      %s134 = sadd.s32 %s133, 1
      %p137 = scmp.eq.s32.totalorder %s15, 1
      %p138 = scmp.ne.s32.totalorder %s133, %s135
      %p139 = scmp.eq.s32.totalorder %s15, 0
      %p140 = por %p138, %p139
      %p141 = scmp.ne.s32.totalorder %s133, %s135
      %p142 = scmp.eq.s32.totalorder %s20, 1
      %p143 = por %p141, %p142
      %p144 = scmp.ne.s32.totalorder %s135, %s136
      %p145 = scmp.eq.s32.totalorder %s20, 0
      %p146 = por %p144, %p145
      %p147 = scmp.ne.s32.totalorder %s135, %s136
      %p148 = scmp.eq.s32.totalorder %s21, 1
      %p149 = por %p147, %p148
      %p151 = scmp.ne.s32.totalorder %s136, %s150
      %p152 = scmp.eq.s32.totalorder %s21, 0
      %p153 = por %p151, %p152
      %s154 = ssub.s32 %s15, %s22
      %p155 = scmp.eq.s32.totalorder %s154, 0
      %s157 = sadd.s32 %s156, 1
      %s158 = scalar_select %p155, %s156, %s157
      %p161 = pneg %p155
      %p162 = scmp.eq.s32.totalorder %s15, 1
      %p163 = por %p161, %p162
      %p164 = scmp.ne.s32.totalorder %s156, %s159
      %p165 = scmp.eq.s32.totalorder %s15, 0
      %p166 = por %p164, %p165
      %p167 = scmp.ne.s32.totalorder %s156, %s159
      %p168 = scmp.eq.s32.totalorder %s20, 1
      %p169 = por %p167, %p168
      %p170 = scmp.ne.s32.totalorder %s159, %s160
      %p171 = scmp.eq.s32.totalorder %s20, 0
      %p172 = por %p170, %p171
      %p173 = scmp.ne.s32.totalorder %s159, %s160
      %p174 = scmp.eq.s32.totalorder %s21, 1
      %p175 = por %p173, %p174
      %p177 = scmp.ne.s32.totalorder %s160, %s176
      %p178 = scmp.eq.s32.totalorder %s21, 0
      %p179 = por %p177, %p178
      %p180 = scmp.le.s32.totalorder 1, %s15
      %p181 = scmp.lt.s32.totalorder %s15, 3
      %p182 = pnand %p180, %p181
      %p183 = pneg %p182
      // Predicated region
      $region9: #{double_conv_block.1} parent=5 // pred_check
        _
      $region10: #{double_conv_block.1} parent=5 // pred_check_branch
        %185 = sbr.rel (%p182) target = $region12
      $region11: #{double_conv_block.1} parent=5 // pred_region
        %s186 = ssub.s32 %s15, 1
        // Predicated region
        $region13: #{double_conv_block.1} parent=11 // pred_check
          %p187 = pneg %p62
        $region14: #{double_conv_block.1} parent=11 // pred_check_branch
          %189 = sbr.rel (%p187) target = $region16
        $region15: #{double_conv_block.1} parent=11 // pred_region
          _
        $region16: #{double_conv_block.1} parent=11 // pred_fallthru
          _
        // Predicated region
        $region17: #{double_conv_block.1} parent=11 // pred_check
          %p190 = pneg %p83
        $region18: #{double_conv_block.1} parent=11 // pred_check_branch
          %192 = sbr.rel (%p190) target = $region20
        $region19: #{double_conv_block.1} parent=11 // pred_region
          _
        $region20: #{double_conv_block.1} parent=11 // pred_fallthru
          _
        // Predicated region
        $region21: #{double_conv_block.1} parent=11 // pred_check
          %p193 = pneg %p104
        $region22: #{double_conv_block.1} parent=11 // pred_check_branch
          %195 = sbr.rel (%p193) target = $region24
        $region23: #{double_conv_block.1} parent=11 // pred_region
          _
        $region24: #{double_conv_block.1} parent=11 // pred_fallthru
          _
        // Predicated region
        $region25: #{double_conv_block.1} parent=11 // pred_check
          %p196 = pneg %p125
        $region26: #{double_conv_block.1} parent=11 // pred_check_branch
          %198 = sbr.rel (%p196) target = $region28
        $region27: #{double_conv_block.1} parent=11 // pred_region
          _
        $region28: #{double_conv_block.1} parent=11 // pred_fallthru
          _
        // Predicated region
        $region29: #{double_conv_block.1} parent=11 // pred_check
          %p199 = pneg %p146
        $region30: #{double_conv_block.1} parent=11 // pred_check_branch
          %201 = sbr.rel (%p199) target = $region32
        $region31: #{double_conv_block.1} parent=11 // pred_region
          _
        $region32: #{double_conv_block.1} parent=11 // pred_fallthru
          _
      $region12: #{double_conv_block.1} parent=5 // pred_fallthru
        _
      %p202 = scmp.lt.s32.totalorder %s15, 2
      // Predicated region
      $region33: #{double_conv_block.1} parent=5 // pred_check
        %p203 = pneg %p202
      $region34: #{double_conv_block.1} parent=5 // pred_check_branch
        %205 = sbr.rel (%p203) target = $region36
      $region35: #{double_conv_block.1} parent=5 // pred_region
        // Predicated region
        $region37: #{double_conv_block.1} parent=35 // pred_check
          %p206 = pneg %p35
        $region38: #{double_conv_block.1} parent=35 // pred_check_branch
          %208 = sbr.rel (%p206) target = $region40
        $region39: #{double_conv_block.1} parent=35 // pred_region
          %p209 = scmp.lt.s32.totalorder %s15, 1
          %s210 = scalar_select %p209, %s15, 1
          %s211 = smul.addr %s210, 32
          %s212 = smul.addr %s211, 4
          %s213 = scalar_lea.vmem %s0, %s212
        $region40: #{double_conv_block.1} parent=35 // pred_fallthru
          _
      $region36: #{double_conv_block.1} parent=5 // pred_fallthru
        _
      %p214 = scmp.le.s32.totalorder 1, %s15
      %p215 = scmp.lt.s32.totalorder %s15, 3
      %p216 = pnand %p214, %p215
      %p217 = pneg %p216
      // Predicated region
      $region41: #{double_conv_block.1} parent=5 // pred_check
        _
      $region42: #{double_conv_block.1} parent=5 // pred_check_branch
        %219 = sbr.rel (%p216) target = $region44
      $region43: #{double_conv_block.1} parent=5 // pred_region
        %s220 = ssub.s32 %s15, 1
        %p221 = scmp.lt.s32.totalorder %s20, 1
        %s222 = scalar_select %p221, %s20, 1
        %s223 = smul.addr %s222, 32
        %s224 = smul.addr %s223, 4
        %s225 = scalar_lea.vmem %s0, %s224
        %p226 = pneg %p41
        %p227 = pneg %p38
        %p228 = pneg %p62
        %p229 = pneg %p59
        %p230 = pneg %p83
        %p231 = pneg %p80
        %p232 = pneg %p104
        %p233 = pneg %p101
        %p234 = pneg %p125
        %p235 = pneg %p122
        %p236 = pneg %p146
        %p237 = pneg %p143
        %p238 = pneg %p172
        %p239 = pneg %p169
        %s240 = sand.u32 %s159, 1
        %s241 = scalar_lea.sflag [#allocation3], %s240
        %s242 = sand.u32 %s159, 1
        %s243 = smul.addr %s242, 256
        %s244 = scalar_lea.vmem [#allocation2], %s243
        %p245 = scmp.lt.s32.totalorder %s20, 1
        %s246 = scalar_select %p245, %s20, 1
        %s247 = smul.addr %s246, 32
        %s248 = smul.addr %s247, 4
        %s249 = scalar_lea.vmem %s0, %s248
        %v250 = vld [vmem:[%s249] sm:$0xf]
        %v251 = vld [vmem:[%s249 + $0x4] sm:$0xf]
        %v252 = vld [vmem:[%s249 + $0x8] sm:$0xf]
        %v253 = vld [vmem:[%s249 + $0xc] sm:$0xf]
        %v254 = vld [vmem:[%s249 + $0x10] sm:$0xf]
        %v255 = vld [vmem:[%s249 + $0x14] sm:$0xf]
        %v256 = vld [vmem:[%s249 + $0x18] sm:$0xf]
        %v257 = vld [vmem:[%s249 + $0x1c] sm:$0xf]
        %v258 = vld [vmem:[%s249 + $0x20] sm:$0xf]
        %v259 = vld [vmem:[%s249 + $0x24] sm:$0xf]
        %v260 = vld [vmem:[%s249 + $0x28] sm:$0xf]
        %v261 = vld [vmem:[%s249 + $0x2c] sm:$0xf]
        %v262 = vld [vmem:[%s249 + $0x30] sm:$0xf]
        %v263 = vld [vmem:[%s249 + $0x34] sm:$0xf]
        %v264 = vld [vmem:[%s249 + $0x38] sm:$0xf]
        %v265 = vld [vmem:[%s249 + $0x3c] sm:$0xf]
        %v266 = vld [vmem:[%s249 + $0x40] sm:$0xf]
        %v267 = vld [vmem:[%s249 + $0x44] sm:$0xf]
        %v268 = vld [vmem:[%s249 + $0x48] sm:$0xf]
        %v269 = vld [vmem:[%s249 + $0x4c] sm:$0xf]
        %v270 = vld [vmem:[%s249 + $0x50] sm:$0xf]
        %v271 = vld [vmem:[%s249 + $0x54] sm:$0xf]
        %v272 = vld [vmem:[%s249 + $0x58] sm:$0xf]
        %v273 = vld [vmem:[%s249 + $0x5c] sm:$0xf]
        %v274 = vld [vmem:[%s249 + $0x60] sm:$0xf]
        %v275 = vld [vmem:[%s249 + $0x64] sm:$0xf]
        %v276 = vld [vmem:[%s249 + $0x68] sm:$0xf]
        %v277 = vld [vmem:[%s249 + $0x6c] sm:$0xf]
        %v278 = vld [vmem:[%s249 + $0x70] sm:$0xf]
        %v279 = vld [vmem:[%s249 + $0x74] sm:$0xf]
        %v280 = vld [vmem:[%s249 + $0x78] sm:$0xf]
        %v281 = vld [vmem:[%s249 + $0x7c] sm:$0xf]
        %v282 = vld [vmem:[%s2] sm:$0xf]
        %v283 = vld [vmem:[%s2 + $0x4] sm:$0xf]
        %v284 = vld [vmem:[%s2 + $0x8] sm:$0xf]
        %v285 = vld [vmem:[%s2 + $0xc] sm:$0xf]
        %v286 = vld [vmem:[%s2 + $0x10] sm:$0xf]
        %v287 = vld [vmem:[%s2 + $0x14] sm:$0xf]
        %v288 = vld [vmem:[%s2 + $0x18] sm:$0xf]
        %v289 = vld [vmem:[%s2 + $0x1c] sm:$0xf]
        %v290 = vld [vmem:[%s2 + $0x20] sm:$0xf]
        %v291 = vld [vmem:[%s2 + $0x24] sm:$0xf]
        %v292 = vld [vmem:[%s2 + $0x28] sm:$0xf]
        %v293 = vld [vmem:[%s2 + $0x2c] sm:$0xf]
        %v294 = vld [vmem:[%s2 + $0x30] sm:$0xf]
        %v295 = vld [vmem:[%s2 + $0x34] sm:$0xf]
        %v296 = vld [vmem:[%s2 + $0x38] sm:$0xf]
        %v297 = vld [vmem:[%s2 + $0x3c] sm:$0xf]
        %v298 = vld [vmem:[%s3] sm:$0x1]
        %v300 = vperm.slane %v298, 0
        %v334 = vunpack.c.l.b16 %v250
        %v335 = vunpack.c.l.b16 %v251
        %v336 = vunpack.c.l.b16 %v252
        %v337 = vunpack.c.l.b16 %v253
        %v338 = vunpack.c.l.b16 %v254
        %v339 = vunpack.c.l.b16 %v255
        %v340 = vunpack.c.l.b16 %v256
        %v341 = vunpack.c.l.b16 %v257
        %v342 = vunpack.c.l.b16 %v258
        %v343 = vunpack.c.l.b16 %v259
        %v344 = vunpack.c.l.b16 %v260
        %v345 = vunpack.c.l.b16 %v261
        %v346 = vunpack.c.l.b16 %v262
        %v347 = vunpack.c.l.b16 %v263
        %v348 = vunpack.c.l.b16 %v264
        %v349 = vunpack.c.l.b16 %v265
        %v350 = vunpack.c.l.b16 %v266
        %v351 = vunpack.c.l.b16 %v267
        %v352 = vunpack.c.l.b16 %v268
        %v353 = vunpack.c.l.b16 %v269
        %v354 = vunpack.c.l.b16 %v270
        %v355 = vunpack.c.l.b16 %v271
        %v356 = vunpack.c.l.b16 %v272
        %v357 = vunpack.c.l.b16 %v273
        %v358 = vunpack.c.l.b16 %v274
        %v359 = vunpack.c.l.b16 %v275
        %v360 = vunpack.c.l.b16 %v276
        %v361 = vunpack.c.l.b16 %v277
        %v362 = vunpack.c.l.b16 %v278
        %v363 = vunpack.c.l.b16 %v279
        %v364 = vunpack.c.l.b16 %v280
        %v365 = vunpack.c.l.b16 %v281
        %v366 = vpack.c.b16 %v335, %v334
        %v367 = vpack.c.b16 %v337, %v336
        %v368 = vpack.c.b16 %v339, %v338
        %v369 = vpack.c.b16 %v341, %v340
        %v370 = vpack.c.b16 %v343, %v342
        %v371 = vpack.c.b16 %v345, %v344
        %v372 = vpack.c.b16 %v347, %v346
        %v373 = vpack.c.b16 %v349, %v348
        %v374 = vpack.c.b16 %v351, %v350
        %v375 = vpack.c.b16 %v353, %v352
        %v376 = vpack.c.b16 %v355, %v354
        %v377 = vpack.c.b16 %v357, %v356
        %v378 = vpack.c.b16 %v359, %v358
        %v379 = vpack.c.b16 %v361, %v360
        %v380 = vpack.c.b16 %v363, %v362
        %v381 = vpack.c.b16 %v365, %v364
        %v414 = vunpack.c.l.b16 %v282
        %v415 = vunpack.c.l.b16 %v283
        %v416 = vunpack.c.l.b16 %v284
        %v417 = vunpack.c.l.b16 %v285
        %v418 = vunpack.c.l.b16 %v286
        %v419 = vunpack.c.l.b16 %v287
        %v420 = vunpack.c.l.b16 %v288
        %v421 = vunpack.c.l.b16 %v289
        %v422 = vunpack.c.l.b16 %v290
        %v423 = vunpack.c.l.b16 %v291
        %v424 = vunpack.c.l.b16 %v292
        %v425 = vunpack.c.l.b16 %v293
        %v426 = vunpack.c.l.b16 %v294
        %v427 = vunpack.c.l.b16 %v295
        %v428 = vunpack.c.l.b16 %v296
        %v429 = vunpack.c.l.b16 %v297
        %v430 = vpack.c.b16 %v415, %v414
        %v431 = vpack.c.b16 %v417, %v416
        %v432 = vpack.c.b16 %v419, %v418
        %v433 = vpack.c.b16 %v421, %v420
        %v434 = vpack.c.b16 %v423, %v422
        %v435 = vpack.c.b16 %v425, %v424
        %v436 = vpack.c.b16 %v427, %v426
        %v437 = vpack.c.b16 %v429, %v428
        %446 = vmatpush.bf16.msra.mxu0 %v437
        %447 = vmatpush.bf16.msra.mxu0 %v436
        %448 = vmatpush.bf16.msra.mxu0 %v435
        %449 = vmatpush.bf16.msra.mxu0 %v434
        %450 = vmatpush.bf16.msra.mxu0 %v433
        %451 = vmatpush.bf16.msra.mxu0 %v432
        %452 = vmatpush.bf16.msra.mxu0 %v431
        %453 = vmatpush.bf16.msra.mxu0 %v430
        %454 = vmatmul.bf16.gmra.mxu0 %v366
        %v455 = vpop.f32.mrf.mxu0
        %v456 = vadd.f32 %v300, %v455
        %v457 = vpop.f32.mrf.mxu0
        %v458 = vadd.f32 %v300, %v457
        %459 = vmatmul.bf16.gmra.mxu0 %v367
        %v460 = vpop.f32.mrf.mxu0
        %v461 = vadd.f32 %v300, %v460
        %v462 = vpop.f32.mrf.mxu0
        %v463 = vadd.f32 %v300, %v462
        %464 = vmatmul.bf16.gmra.mxu0 %v368
        %v465 = vpop.f32.mrf.mxu0
        %v466 = vadd.f32 %v300, %v465
        %v467 = vpop.f32.mrf.mxu0
        %v468 = vadd.f32 %v300, %v467
        %469 = vmatmul.bf16.gmra.mxu0 %v369
        %v470 = vpop.f32.mrf.mxu0
        %v471 = vadd.f32 %v300, %v470
        %v472 = vpop.f32.mrf.mxu0
        %v473 = vadd.f32 %v300, %v472
        %474 = vmatmul.bf16.gmra.mxu0 %v370
        %v475 = vpop.f32.mrf.mxu0
        %v476 = vadd.f32 %v300, %v475
        %v477 = vpop.f32.mrf.mxu0
        %v478 = vadd.f32 %v300, %v477
        %479 = vmatmul.bf16.gmra.mxu0 %v371
        %v480 = vpop.f32.mrf.mxu0
        %v481 = vadd.f32 %v300, %v480
        %v482 = vpop.f32.mrf.mxu0
        %v483 = vadd.f32 %v300, %v482
        %484 = vmatmul.bf16.gmra.mxu0 %v372
        %v485 = vpop.f32.mrf.mxu0
        %v486 = vadd.f32 %v300, %v485
        %v487 = vpop.f32.mrf.mxu0
        %v488 = vadd.f32 %v300, %v487
        %489 = vmatmul.bf16.gmra.mxu0 %v373
        %v490 = vpop.f32.mrf.mxu0
        %v491 = vadd.f32 %v300, %v490
        %v492 = vpop.f32.mrf.mxu0
        %v493 = vadd.f32 %v300, %v492
        %494 = vmatmul.bf16.gmra.mxu0 %v374
        %v495 = vpop.f32.mrf.mxu0
        %v496 = vadd.f32 %v300, %v495
        %v497 = vpop.f32.mrf.mxu0
        %v498 = vadd.f32 %v300, %v497
        %499 = vmatmul.bf16.gmra.mxu0 %v375
        %v500 = vpop.f32.mrf.mxu0
        %v501 = vadd.f32 %v300, %v500
        %v502 = vpop.f32.mrf.mxu0
        %v503 = vadd.f32 %v300, %v502
        %504 = vmatmul.bf16.gmra.mxu0 %v376
        %v505 = vpop.f32.mrf.mxu0
        %v506 = vadd.f32 %v300, %v505
        %v507 = vpop.f32.mrf.mxu0
        %v508 = vadd.f32 %v300, %v507
        %509 = vmatmul.bf16.gmra.mxu0 %v377
        %v510 = vpop.f32.mrf.mxu0
        %v511 = vadd.f32 %v300, %v510
        %v512 = vpop.f32.mrf.mxu0
        %v513 = vadd.f32 %v300, %v512
        %514 = vmatmul.bf16.gmra.mxu0 %v378
        %v515 = vpop.f32.mrf.mxu0
        %v516 = vadd.f32 %v300, %v515
        %v517 = vpop.f32.mrf.mxu0
        %v518 = vadd.f32 %v300, %v517
        %519 = vmatmul.bf16.gmra.mxu0 %v379
        %v520 = vpop.f32.mrf.mxu0
        %v521 = vadd.f32 %v300, %v520
        %v522 = vpop.f32.mrf.mxu0
        %v523 = vadd.f32 %v300, %v522
        %524 = vmatmul.bf16.gmra.mxu0 %v380
        %v525 = vpop.f32.mrf.mxu0
        %v526 = vadd.f32 %v300, %v525
        %v527 = vpop.f32.mrf.mxu0
        %v528 = vadd.f32 %v300, %v527
        %529 = vmatmul.bf16.gmra.mxu0 %v381
        %v530 = vpop.f32.mrf.mxu0
        %v531 = vadd.f32 %v300, %v530
        %v532 = vpop.f32.mrf.mxu0
        %v533 = vadd.f32 %v300, %v532
        %534 = vdwg.mxu0
        %v535 = vadd.f32 %v456, %v458
        %v536 = vadd.f32 %v535, %v461
        %v537 = vadd.f32 %v536, %v463
        %v538 = vadd.f32 %v537, %v466
        %v539 = vadd.f32 %v538, %v468
        %v540 = vadd.f32 %v539, %v471
        %v541 = vadd.f32 %v540, %v473
        %v542 = vadd.f32 %v541, %v476
        %v543 = vadd.f32 %v542, %v478
        %v544 = vadd.f32 %v543, %v481
        %v545 = vadd.f32 %v544, %v483
        %v546 = vadd.f32 %v545, %v486
        %v547 = vadd.f32 %v546, %v488
        %v548 = vadd.f32 %v547, %v491
        %v549 = vadd.f32 %v548, %v493
        %v550 = vadd.f32 %v549, %v496
        %v551 = vadd.f32 %v550, %v498
        %v552 = vadd.f32 %v551, %v501
        %v553 = vadd.f32 %v552, %v503
        %v554 = vadd.f32 %v553, %v506
        %v555 = vadd.f32 %v554, %v508
        %v556 = vadd.f32 %v555, %v511
        %v557 = vadd.f32 %v556, %v513
        %v558 = vadd.f32 %v557, %v516
        %v559 = vadd.f32 %v558, %v518
        %v560 = vadd.f32 %v559, %v521
        %v561 = vadd.f32 %v560, %v523
        %v562 = vadd.f32 %v561, %v526
        %v563 = vadd.f32 %v562, %v528
        %v564 = vadd.f32 %v563, %v531
        %v565 = vadd.f32 %v564, %v533
        %v566 = vrot.slane %v565, 4
        %v567 = vadd.f32 %v565, %v566
        %v568 = vrot.slane %v567, 2
        %v569 = vadd.f32 %v567, %v568
        %v570 = vrot.slane %v569, 1
        %v571 = vadd.f32 %v569, %v570
        %v572 = vmul.f32 %v456, %v456
        %v573 = vmul.f32 %v458, %v458
        %v574 = vmul.f32 %v461, %v461
        %v575 = vmul.f32 %v463, %v463
        %v576 = vmul.f32 %v466, %v466
        %v577 = vmul.f32 %v468, %v468
        %v578 = vmul.f32 %v471, %v471
        %v579 = vmul.f32 %v473, %v473
        %v580 = vmul.f32 %v476, %v476
        %v581 = vmul.f32 %v478, %v478
        %v582 = vmul.f32 %v481, %v481
        %v583 = vmul.f32 %v483, %v483
        %v584 = vmul.f32 %v486, %v486
        %v585 = vmul.f32 %v488, %v488
        %v586 = vmul.f32 %v491, %v491
        %v587 = vmul.f32 %v493, %v493
        %v588 = vmul.f32 %v496, %v496
        %v589 = vmul.f32 %v498, %v498
        %v590 = vmul.f32 %v501, %v501
        %v591 = vmul.f32 %v503, %v503
        %v592 = vmul.f32 %v506, %v506
        %v593 = vmul.f32 %v508, %v508
        %v594 = vmul.f32 %v511, %v511
        %v595 = vmul.f32 %v513, %v513
        %v596 = vmul.f32 %v516, %v516
        %v597 = vmul.f32 %v518, %v518
        %v598 = vmul.f32 %v521, %v521
        %v599 = vmul.f32 %v523, %v523
        %v600 = vmul.f32 %v526, %v526
        %v601 = vmul.f32 %v528, %v528
        %v602 = vmul.f32 %v531, %v531
        %v603 = vmul.f32 %v533, %v533
        %v604 = vadd.f32 %v572, %v573
        %v605 = vadd.f32 %v604, %v574
        %v606 = vadd.f32 %v605, %v575
        %v607 = vadd.f32 %v606, %v576
        %v608 = vadd.f32 %v607, %v577
        %v609 = vadd.f32 %v608, %v578
        %v610 = vadd.f32 %v609, %v579
        %v611 = vadd.f32 %v610, %v580
        %v612 = vadd.f32 %v611, %v581
        %v613 = vadd.f32 %v612, %v582
        %v614 = vadd.f32 %v613, %v583
        %v615 = vadd.f32 %v614, %v584
        %v616 = vadd.f32 %v615, %v585
        %v617 = vadd.f32 %v616, %v586
        %v618 = vadd.f32 %v617, %v587
        %v619 = vadd.f32 %v618, %v588
        %v620 = vadd.f32 %v619, %v589
        %v621 = vadd.f32 %v620, %v590
        %v622 = vadd.f32 %v621, %v591
        %v623 = vadd.f32 %v622, %v592
        %v624 = vadd.f32 %v623, %v593
        %v625 = vadd.f32 %v624, %v594
        %v626 = vadd.f32 %v625, %v595
        %v627 = vadd.f32 %v626, %v596
        %v628 = vadd.f32 %v627, %v597
        %v629 = vadd.f32 %v628, %v598
        %v630 = vadd.f32 %v629, %v599
        %v631 = vadd.f32 %v630, %v600
        %v632 = vadd.f32 %v631, %v601
        %v633 = vadd.f32 %v632, %v602
        %v634 = vadd.f32 %v633, %v603
        %v635 = vrot.slane %v634, 4
        %v636 = vadd.f32 %v634, %v635
        %v637 = vrot.slane %v636, 2
        %v638 = vadd.f32 %v636, %v637
        %v639 = vrot.slane %v638, 1
        %v640 = vadd.f32 %v638, %v639
        %v641 = vmul.f32 %v571, 0.00390625
        %v642 = vmul.f32 %v640, 0.00390625
        %v643 = vmul.f32 %v641, %v641
        %v644 = vsub.f32 %v642, %v643
        %v645 = vmax.f32 %v644, 0.0
        %v646 = vsub.f32 %v456, %v641
        %v647 = vsub.f32 %v458, %v641
        %v648 = vsub.f32 %v461, %v641
        %v649 = vsub.f32 %v463, %v641
        %v650 = vsub.f32 %v466, %v641
        %v651 = vsub.f32 %v468, %v641
        %v652 = vsub.f32 %v471, %v641
        %v653 = vsub.f32 %v473, %v641
        %v654 = vsub.f32 %v476, %v641
        %v655 = vsub.f32 %v478, %v641
        %v656 = vsub.f32 %v481, %v641
        %v657 = vsub.f32 %v483, %v641
        %v658 = vsub.f32 %v486, %v641
        %v659 = vsub.f32 %v488, %v641
        %v660 = vsub.f32 %v491, %v641
        %v661 = vsub.f32 %v493, %v641
        %v662 = vsub.f32 %v496, %v641
        %v663 = vsub.f32 %v498, %v641
        %v664 = vsub.f32 %v501, %v641
        %v665 = vsub.f32 %v503, %v641
        %v666 = vsub.f32 %v506, %v641
        %v667 = vsub.f32 %v508, %v641
        %v668 = vsub.f32 %v511, %v641
        %v669 = vsub.f32 %v513, %v641
        %v670 = vsub.f32 %v516, %v641
        %v671 = vsub.f32 %v518, %v641
        %v672 = vsub.f32 %v521, %v641
        %v673 = vsub.f32 %v523, %v641
        %v674 = vsub.f32 %v526, %v641
        %v675 = vsub.f32 %v528, %v641
        %v676 = vsub.f32 %v531, %v641
        %v677 = vsub.f32 %v533, %v641
        %v678 = vadd.f32 %v645, 1e-05
        %v679 = vrsqrt.pop %v678
        %v680 = vmul.f32 %v679, %v678
        %v681 = vmul.f32 %v680, %v679
        %v682 = vmul.f32 0.5, %v681
        %v683 = vsub.f32 1.5, %v682
        %v684 = vmul.f32 %v679, %v683
        %vm685 = vweird.f32 %v678
        %vm686 = vweird.f32 %v679
        %vm687 = vmor %vm685, %vm686
        %v688 = vsel %vm687, %v679, %v684
        %v689 = vmul.f32 %v646, %v688
        %v690 = vmul.f32 %v647, %v688
        %v691 = vmul.f32 %v648, %v688
        %v692 = vmul.f32 %v649, %v688
        %v693 = vmul.f32 %v650, %v688
        %v694 = vmul.f32 %v651, %v688
        %v695 = vmul.f32 %v652, %v688
        %v696 = vmul.f32 %v653, %v688
        %v697 = vmul.f32 %v654, %v688
        %v698 = vmul.f32 %v655, %v688
        %v699 = vmul.f32 %v656, %v688
        %v700 = vmul.f32 %v657, %v688
        %v701 = vmul.f32 %v658, %v688
        %v702 = vmul.f32 %v659, %v688
        %v703 = vmul.f32 %v660, %v688
        %v704 = vmul.f32 %v661, %v688
        %v705 = vmul.f32 %v662, %v688
        %v706 = vmul.f32 %v663, %v688
        %v707 = vmul.f32 %v664, %v688
        %v708 = vmul.f32 %v665, %v688
        %v709 = vmul.f32 %v666, %v688
        %v710 = vmul.f32 %v667, %v688
        %v711 = vmul.f32 %v668, %v688
        %v712 = vmul.f32 %v669, %v688
        %v713 = vmul.f32 %v670, %v688
        %v714 = vmul.f32 %v671, %v688
        %v715 = vmul.f32 %v672, %v688
        %v716 = vmul.f32 %v673, %v688
        %v717 = vmul.f32 %v674, %v688
        %v718 = vmul.f32 %v675, %v688
        %v719 = vmul.f32 %v676, %v688
        %v720 = vmul.f32 %v677, %v688
        %vm721 = vcmp.ge.f32.partialorder %v689, 0.0
        %vm722 = vcmp.ge.f32.partialorder %v690, 0.0
        %vm723 = vcmp.ge.f32.partialorder %v691, 0.0
        %vm724 = vcmp.ge.f32.partialorder %v692, 0.0
        %vm725 = vcmp.ge.f32.partialorder %v693, 0.0
        %vm726 = vcmp.ge.f32.partialorder %v694, 0.0
        %vm727 = vcmp.ge.f32.partialorder %v695, 0.0
        %vm728 = vcmp.ge.f32.partialorder %v696, 0.0
        %vm729 = vcmp.ge.f32.partialorder %v697, 0.0
        %vm730 = vcmp.ge.f32.partialorder %v698, 0.0
        %vm731 = vcmp.ge.f32.partialorder %v699, 0.0
        %vm732 = vcmp.ge.f32.partialorder %v700, 0.0
        %vm733 = vcmp.ge.f32.partialorder %v701, 0.0
        %vm734 = vcmp.ge.f32.partialorder %v702, 0.0
        %vm735 = vcmp.ge.f32.partialorder %v703, 0.0
        %vm736 = vcmp.ge.f32.partialorder %v704, 0.0
        %vm737 = vcmp.ge.f32.partialorder %v705, 0.0
        %vm738 = vcmp.ge.f32.partialorder %v706, 0.0
        %vm739 = vcmp.ge.f32.partialorder %v707, 0.0
        %vm740 = vcmp.ge.f32.partialorder %v708, 0.0
        %vm741 = vcmp.ge.f32.partialorder %v709, 0.0
        %vm742 = vcmp.ge.f32.partialorder %v710, 0.0
        %vm743 = vcmp.ge.f32.partialorder %v711, 0.0
        %vm744 = vcmp.ge.f32.partialorder %v712, 0.0
        %vm745 = vcmp.ge.f32.partialorder %v713, 0.0
        %vm746 = vcmp.ge.f32.partialorder %v714, 0.0
        %vm747 = vcmp.ge.f32.partialorder %v715, 0.0
        %vm748 = vcmp.ge.f32.partialorder %v716, 0.0
        %vm749 = vcmp.ge.f32.partialorder %v717, 0.0
        %vm750 = vcmp.ge.f32.partialorder %v718, 0.0
        %vm751 = vcmp.ge.f32.partialorder %v719, 0.0
        %vm752 = vcmp.ge.f32.partialorder %v720, 0.0
        %v753 = vmul.f32 %v689, 0.2
        %v754 = vmul.f32 %v690, 0.2
        %v755 = vmul.f32 %v691, 0.2
        %v756 = vmul.f32 %v692, 0.2
        %v757 = vmul.f32 %v693, 0.2
        %v758 = vmul.f32 %v694, 0.2
        %v759 = vmul.f32 %v695, 0.2
        %v760 = vmul.f32 %v696, 0.2
        %v761 = vmul.f32 %v697, 0.2
        %v762 = vmul.f32 %v698, 0.2
        %v763 = vmul.f32 %v699, 0.2
        %v764 = vmul.f32 %v700, 0.2
        %v765 = vmul.f32 %v701, 0.2
        %v766 = vmul.f32 %v702, 0.2
        %v767 = vmul.f32 %v703, 0.2
        %v768 = vmul.f32 %v704, 0.2
        %v769 = vmul.f32 %v705, 0.2
        %v770 = vmul.f32 %v706, 0.2
        %v771 = vmul.f32 %v707, 0.2
        %v772 = vmul.f32 %v708, 0.2
        %v773 = vmul.f32 %v709, 0.2
        %v774 = vmul.f32 %v710, 0.2
        %v775 = vmul.f32 %v711, 0.2
        %v776 = vmul.f32 %v712, 0.2
        %v777 = vmul.f32 %v713, 0.2
        %v778 = vmul.f32 %v714, 0.2
        %v779 = vmul.f32 %v715, 0.2
        %v780 = vmul.f32 %v716, 0.2
        %v781 = vmul.f32 %v717, 0.2
        %v782 = vmul.f32 %v718, 0.2
        %v783 = vmul.f32 %v719, 0.2
        %v784 = vmul.f32 %v720, 0.2
        %v785 = vsel %vm721, %v689, %v753
        %v786 = vsel %vm722, %v690, %v754
        %v787 = vsel %vm723, %v691, %v755
        %v788 = vsel %vm724, %v692, %v756
        %v789 = vsel %vm725, %v693, %v757
        %v790 = vsel %vm726, %v694, %v758
        %v791 = vsel %vm727, %v695, %v759
        %v792 = vsel %vm728, %v696, %v760
        %v793 = vsel %vm729, %v697, %v761
        %v794 = vsel %vm730, %v698, %v762
        %v795 = vsel %vm731, %v699, %v763
        %v796 = vsel %vm732, %v700, %v764
        %v797 = vsel %vm733, %v701, %v765
        %v798 = vsel %vm734, %v702, %v766
        %v799 = vsel %vm735, %v703, %v767
        %v800 = vsel %vm736, %v704, %v768
        %v801 = vsel %vm737, %v705, %v769
        %v802 = vsel %vm738, %v706, %v770
        %v803 = vsel %vm739, %v707, %v771
        %v804 = vsel %vm740, %v708, %v772
        %v805 = vsel %vm741, %v709, %v773
        %v806 = vsel %vm742, %v710, %v774
        %v807 = vsel %vm743, %v711, %v775
        %v808 = vsel %vm744, %v712, %v776
        %v809 = vsel %vm745, %v713, %v777
        %v810 = vsel %vm746, %v714, %v778
        %v811 = vsel %vm747, %v715, %v779
        %v812 = vsel %vm748, %v716, %v780
        %v813 = vsel %vm749, %v717, %v781
        %v814 = vsel %vm750, %v718, %v782
        %v815 = vsel %vm751, %v719, %v783
        %v816 = vsel %vm752, %v720, %v784
        %v817 = vrot.slane %v785, 7
        %v818 = vrot.slane %v786, 7
        %v819 = vrot.slane %v787, 7
        %v820 = vrot.slane %v788, 7
        %v821 = vrot.slane %v789, 7
        %v822 = vrot.slane %v790, 7
        %v823 = vrot.slane %v791, 7
        %v824 = vrot.slane %v792, 7
        %v825 = vrot.slane %v793, 7
        %v826 = vrot.slane %v794, 7
        %v827 = vrot.slane %v795, 7
        %v828 = vrot.slane %v796, 7
        %v829 = vrot.slane %v797, 7
        %v830 = vrot.slane %v798, 7
        %v831 = vrot.slane %v799, 7
        %v832 = vrot.slane %v800, 7
        %v833 = vrot.slane %v801, 7
        %v834 = vrot.slane %v802, 7
        %v835 = vrot.slane %v803, 7
        %v836 = vrot.slane %v804, 7
        %v837 = vrot.slane %v805, 7
        %v838 = vrot.slane %v806, 7
        %v839 = vrot.slane %v807, 7
        %v840 = vrot.slane %v808, 7
        %v841 = vrot.slane %v809, 7
        %v842 = vrot.slane %v810, 7
        %v843 = vrot.slane %v811, 7
        %v844 = vrot.slane %v812, 7
        %v845 = vrot.slane %v813, 7
        %v846 = vrot.slane %v814, 7
        %v847 = vrot.slane %v815, 7
        %v848 = vrot.slane %v816, 7
        %v849 = vlaneseq
        %v850 = vshrl.u32 %v849, 7
        %vm851 = vcmp.lt.s32.totalorder %v850, 1
        %v852 = vsel %vm851, %v847, %v848
        %v853 = vsel %vm851, %v846, %v847
        %v854 = vsel %vm851, %v845, %v846
        %v855 = vsel %vm851, %v844, %v845
        %v856 = vsel %vm851, %v843, %v844
        %v857 = vsel %vm851, %v842, %v843
        %v858 = vsel %vm851, %v841, %v842
        %v859 = vsel %vm851, %v840, %v841
        %v860 = vsel %vm851, %v839, %v840
        %v861 = vsel %vm851, %v838, %v839
        %v862 = vsel %vm851, %v837, %v838
        %v863 = vsel %vm851, %v836, %v837
        %v864 = vsel %vm851, %v835, %v836
        %v865 = vsel %vm851, %v834, %v835
        %v866 = vsel %vm851, %v833, %v834
        %v867 = vsel %vm851, %v832, %v833
        %v868 = vsel %vm851, %v831, %v832
        %v869 = vsel %vm851, %v830, %v831
        %v870 = vsel %vm851, %v829, %v830
        %v871 = vsel %vm851, %v828, %v829
        %v872 = vsel %vm851, %v827, %v828
        %v873 = vsel %vm851, %v826, %v827
        %v874 = vsel %vm851, %v825, %v826
        %v875 = vsel %vm851, %v824, %v825
        %v876 = vsel %vm851, %v823, %v824
        %v877 = vsel %vm851, %v822, %v823
        %v878 = vsel %vm851, %v821, %v822
        %v879 = vsel %vm851, %v820, %v821
        %v880 = vsel %vm851, %v819, %v820
        %v881 = vsel %vm851, %v818, %v819
        %v882 = vsel %vm851, %v817, %v818
        %v883 = vsel %vm851, %v848, %v817
        %v884 = vld [vmem:[%s1] sm:$0xff]
        %v885 = vld [vmem:[%s1 + $0x8] sm:$0xff]
        %v886 = vld [vmem:[%s1 + $0x10] sm:$0xff]
        %v887 = vld [vmem:[%s1 + $0x18] sm:$0xff]
        %v888 = vld [vmem:[%s1 + $0x20] sm:$0xff]
        %v889 = vld [vmem:[%s1 + $0x28] sm:$0xff]
        %v890 = vld [vmem:[%s1 + $0x30] sm:$0xff]
        %v891 = vld [vmem:[%s1 + $0x38] sm:$0xff]
        %v892 = vld [vmem:[%s1 + $0x40] sm:$0xff]
        %v893 = vld [vmem:[%s1 + $0x48] sm:$0xff]
        %v894 = vld [vmem:[%s1 + $0x50] sm:$0xff]
        %v895 = vld [vmem:[%s1 + $0x58] sm:$0xff]
        %v896 = vld [vmem:[%s1 + $0x60] sm:$0xff]
        %v897 = vld [vmem:[%s1 + $0x68] sm:$0xff]
        %v898 = vld [vmem:[%s1 + $0x70] sm:$0xff]
        %v899 = vld [vmem:[%s1 + $0x78] sm:$0xff]
        %v900 = vld [vmem:[%s1 + $0x80] sm:$0xff]
        %v901 = vld [vmem:[%s1 + $0x88] sm:$0xff]
        %v902 = vld [vmem:[%s1 + $0x90] sm:$0xff]
        %v903 = vld [vmem:[%s1 + $0x98] sm:$0xff]
        %v904 = vld [vmem:[%s1 + $0xa0] sm:$0xff]
        %v905 = vld [vmem:[%s1 + $0xa8] sm:$0xff]
        %v906 = vld [vmem:[%s1 + $0xb0] sm:$0xff]
        %v907 = vld [vmem:[%s1 + $0xb8] sm:$0xff]
        %v908 = vld [vmem:[%s1 + $0xc0] sm:$0xff]
        %v909 = vld [vmem:[%s1 + $0xc8] sm:$0xff]
        %v910 = vld [vmem:[%s1 + $0xd0] sm:$0xff]
        %v911 = vld [vmem:[%s1 + $0xd8] sm:$0xff]
        %v912 = vld [vmem:[%s1 + $0xe0] sm:$0xff]
        %v913 = vld [vmem:[%s1 + $0xe8] sm:$0xff]
        %v914 = vld [vmem:[%s1 + $0xf0] sm:$0xff]
        %v915 = vld [vmem:[%s1 + $0xf8] sm:$0xff]
        %917 = vset.pattern.permute.xlu0 0
        %918 = vperm.xlu0 %917, %v884
        %v919 = vpop.permute.xlu0 %918
        %922 = vset.pattern.permute.xlu0 0
        %923 = vperm.xlu0 %922, %v885
        %v924 = vpop.permute.xlu0 %923
        %927 = vset.pattern.permute.xlu0 0
        %928 = vperm.xlu0 %927, %v886
        %v929 = vpop.permute.xlu0 %928
        %932 = vset.pattern.permute.xlu0 0
        %933 = vperm.xlu0 %932, %v887
        %v934 = vpop.permute.xlu0 %933
        %937 = vset.pattern.permute.xlu0 0
        %938 = vperm.xlu0 %937, %v888
        %v939 = vpop.permute.xlu0 %938
        %942 = vset.pattern.permute.xlu0 0
        %943 = vperm.xlu0 %942, %v889
        %v944 = vpop.permute.xlu0 %943
        %947 = vset.pattern.permute.xlu0 0
        %948 = vperm.xlu0 %947, %v890
        %v949 = vpop.permute.xlu0 %948
        %952 = vset.pattern.permute.xlu0 0
        %953 = vperm.xlu0 %952, %v891
        %v954 = vpop.permute.xlu0 %953
        %957 = vset.pattern.permute.xlu0 0
        %958 = vperm.xlu0 %957, %v892
        %v959 = vpop.permute.xlu0 %958
        %962 = vset.pattern.permute.xlu0 0
        %963 = vperm.xlu0 %962, %v893
        %v964 = vpop.permute.xlu0 %963
        %967 = vset.pattern.permute.xlu0 0
        %968 = vperm.xlu0 %967, %v894
        %v969 = vpop.permute.xlu0 %968
        %972 = vset.pattern.permute.xlu0 0
        %973 = vperm.xlu0 %972, %v895
        %v974 = vpop.permute.xlu0 %973
        %977 = vset.pattern.permute.xlu0 0
        %978 = vperm.xlu0 %977, %v896
        %v979 = vpop.permute.xlu0 %978
        %982 = vset.pattern.permute.xlu0 0
        %983 = vperm.xlu0 %982, %v897
        %v984 = vpop.permute.xlu0 %983
        %987 = vset.pattern.permute.xlu0 0
        %988 = vperm.xlu0 %987, %v898
        %v989 = vpop.permute.xlu0 %988
        %992 = vset.pattern.permute.xlu0 0
        %993 = vperm.xlu0 %992, %v899
        %v994 = vpop.permute.xlu0 %993
        %997 = vset.pattern.permute.xlu0 0
        %998 = vperm.xlu0 %997, %v900
        %v999 = vpop.permute.xlu0 %998
        %1002 = vset.pattern.permute.xlu0 0
        %1003 = vperm.xlu0 %1002, %v901
        %v1004 = vpop.permute.xlu0 %1003
        %1007 = vset.pattern.permute.xlu0 0
        %1008 = vperm.xlu0 %1007, %v902
        %v1009 = vpop.permute.xlu0 %1008
        %1012 = vset.pattern.permute.xlu0 0
        %1013 = vperm.xlu0 %1012, %v903
        %v1014 = vpop.permute.xlu0 %1013
        %1017 = vset.pattern.permute.xlu0 0
        %1018 = vperm.xlu0 %1017, %v904
        %v1019 = vpop.permute.xlu0 %1018
        %1022 = vset.pattern.permute.xlu0 0
        %1023 = vperm.xlu0 %1022, %v905
        %v1024 = vpop.permute.xlu0 %1023
        %1027 = vset.pattern.permute.xlu0 0
        %1028 = vperm.xlu0 %1027, %v906
        %v1029 = vpop.permute.xlu0 %1028
        %1032 = vset.pattern.permute.xlu0 0
        %1033 = vperm.xlu0 %1032, %v907
        %v1034 = vpop.permute.xlu0 %1033
        %1037 = vset.pattern.permute.xlu0 0
        %1038 = vperm.xlu0 %1037, %v908
        %v1039 = vpop.permute.xlu0 %1038
        %1042 = vset.pattern.permute.xlu0 0
        %1043 = vperm.xlu0 %1042, %v909
        %v1044 = vpop.permute.xlu0 %1043
        %1047 = vset.pattern.permute.xlu0 0
        %1048 = vperm.xlu0 %1047, %v910
        %v1049 = vpop.permute.xlu0 %1048
        %1052 = vset.pattern.permute.xlu0 0
        %1053 = vperm.xlu0 %1052, %v911
        %v1054 = vpop.permute.xlu0 %1053
        %1057 = vset.pattern.permute.xlu0 0
        %1058 = vperm.xlu0 %1057, %v912
        %v1059 = vpop.permute.xlu0 %1058
        %1062 = vset.pattern.permute.xlu0 0
        %1063 = vperm.xlu0 %1062, %v913
        %v1064 = vpop.permute.xlu0 %1063
        %1067 = vset.pattern.permute.xlu0 0
        %1068 = vperm.xlu0 %1067, %v914
        %v1069 = vpop.permute.xlu0 %1068
        %1072 = vset.pattern.permute.xlu0 0
        %1073 = vperm.xlu0 %1072, %v915
        %v1074 = vpop.permute.xlu0 %1073
        %v1076 = vmul.f32 %v853, %v919
        %v1077 = vmul.f32 %v852, %v924
        %v1078 = vmul.f32 %v883, %v929
        %v1079 = vmul.f32 %v882, %v934
        %v1080 = vmul.f32 %v881, %v939
        %v1081 = vmul.f32 %v880, %v944
        %v1082 = vmul.f32 %v879, %v949
        %v1083 = vmul.f32 %v878, %v954
        %v1084 = vmul.f32 %v877, %v959
        %v1085 = vmul.f32 %v876, %v964
        %v1086 = vmul.f32 %v875, %v969
        %v1087 = vmul.f32 %v874, %v974
        %v1088 = vmul.f32 %v873, %v979
        %v1089 = vmul.f32 %v872, %v984
        %v1090 = vmul.f32 %v871, %v989
        %v1091 = vmul.f32 %v870, %v994
        %v1092 = vmul.f32 %v869, %v999
        %v1093 = vmul.f32 %v868, %v1004
        %v1094 = vmul.f32 %v867, %v1009
        %v1095 = vmul.f32 %v866, %v1014
        %v1096 = vmul.f32 %v865, %v1019
        %v1097 = vmul.f32 %v864, %v1024
        %v1098 = vmul.f32 %v863, %v1029
        %v1099 = vmul.f32 %v862, %v1034
        %v1100 = vmul.f32 %v861, %v1039
        %v1101 = vmul.f32 %v860, %v1044
        %v1102 = vmul.f32 %v859, %v1049
        %v1103 = vmul.f32 %v858, %v1054
        %v1104 = vmul.f32 %v857, %v1059
        %v1105 = vmul.f32 %v856, %v1064
        %v1106 = vmul.f32 %v855, %v1069
        %v1107 = vmul.f32 %v854, %v1074
        %v1108 = vpack.c.bf16 %v1076, %v1076
        %v1109 = vpack.c.bf16 %v1077, %v1077
        %v1110 = vpack.c.bf16 %v1078, %v1078
        %v1111 = vpack.c.bf16 %v1079, %v1079
        %v1112 = vpack.c.bf16 %v1080, %v1080
        %v1113 = vpack.c.bf16 %v1081, %v1081
        %v1114 = vpack.c.bf16 %v1082, %v1082
        %v1115 = vpack.c.bf16 %v1083, %v1083
        %v1116 = vpack.c.bf16 %v1084, %v1084
        %v1117 = vpack.c.bf16 %v1085, %v1085
        %v1118 = vpack.c.bf16 %v1086, %v1086
        %v1119 = vpack.c.bf16 %v1087, %v1087
        %v1120 = vpack.c.bf16 %v1088, %v1088
        %v1121 = vpack.c.bf16 %v1089, %v1089
        %v1122 = vpack.c.bf16 %v1090, %v1090
        %v1123 = vpack.c.bf16 %v1091, %v1091
        %v1124 = vpack.c.bf16 %v1092, %v1092
        %v1125 = vpack.c.bf16 %v1093, %v1093
        %v1126 = vpack.c.bf16 %v1094, %v1094
        %v1127 = vpack.c.bf16 %v1095, %v1095
        %v1128 = vpack.c.bf16 %v1096, %v1096
        %v1129 = vpack.c.bf16 %v1097, %v1097
        %v1130 = vpack.c.bf16 %v1098, %v1098
        %v1131 = vpack.c.bf16 %v1099, %v1099
        %v1132 = vpack.c.bf16 %v1100, %v1100
        %v1133 = vpack.c.bf16 %v1101, %v1101
        %v1134 = vpack.c.bf16 %v1102, %v1102
        %v1135 = vpack.c.bf16 %v1103, %v1103
        %v1136 = vpack.c.bf16 %v1104, %v1104
        %v1137 = vpack.c.bf16 %v1105, %v1105
        %v1138 = vpack.c.bf16 %v1106, %v1106
        %v1139 = vpack.c.bf16 %v1107, %v1107
        %1140 = vset.pattern.permute.xlu0 1
        %1141 = vperm.xlu0 %1140, %v884
        %v1142 = vpop.permute.xlu0 %1141
        %1144 = vset.pattern.permute.xlu0 1
        %1145 = vperm.xlu0 %1144, %v885
        %v1146 = vpop.permute.xlu0 %1145
        %1148 = vset.pattern.permute.xlu0 1
        %1149 = vperm.xlu0 %1148, %v886
        %v1150 = vpop.permute.xlu0 %1149
        %1152 = vset.pattern.permute.xlu0 1
        %1153 = vperm.xlu0 %1152, %v887
        %v1154 = vpop.permute.xlu0 %1153
        %1156 = vset.pattern.permute.xlu0 1
        %1157 = vperm.xlu0 %1156, %v888
        %v1158 = vpop.permute.xlu0 %1157
        %1160 = vset.pattern.permute.xlu0 1
        %1161 = vperm.xlu0 %1160, %v889
        %v1162 = vpop.permute.xlu0 %1161
        %1164 = vset.pattern.permute.xlu0 1
        %1165 = vperm.xlu0 %1164, %v890
        %v1166 = vpop.permute.xlu0 %1165
        %1168 = vset.pattern.permute.xlu0 1
        %1169 = vperm.xlu0 %1168, %v891
        %v1170 = vpop.permute.xlu0 %1169
        %1172 = vset.pattern.permute.xlu0 1
        %1173 = vperm.xlu0 %1172, %v892
        %v1174 = vpop.permute.xlu0 %1173
        %1176 = vset.pattern.permute.xlu0 1
        %1177 = vperm.xlu0 %1176, %v893
        %v1178 = vpop.permute.xlu0 %1177
        %1180 = vset.pattern.permute.xlu0 1
        %1181 = vperm.xlu0 %1180, %v894
        %v1182 = vpop.permute.xlu0 %1181
        %1184 = vset.pattern.permute.xlu0 1
        %1185 = vperm.xlu0 %1184, %v895
        %v1186 = vpop.permute.xlu0 %1185
        %1188 = vset.pattern.permute.xlu0 1
        %1189 = vperm.xlu0 %1188, %v896
        %v1190 = vpop.permute.xlu0 %1189
        %1192 = vset.pattern.permute.xlu0 1
        %1193 = vperm.xlu0 %1192, %v897
        %v1194 = vpop.permute.xlu0 %1193
        %1196 = vset.pattern.permute.xlu0 1
        %1197 = vperm.xlu0 %1196, %v898
        %v1198 = vpop.permute.xlu0 %1197
        %1200 = vset.pattern.permute.xlu0 1
        %1201 = vperm.xlu0 %1200, %v899
        %v1202 = vpop.permute.xlu0 %1201
        %1204 = vset.pattern.permute.xlu0 1
        %1205 = vperm.xlu0 %1204, %v900
        %v1206 = vpop.permute.xlu0 %1205
        %1208 = vset.pattern.permute.xlu0 1
        %1209 = vperm.xlu0 %1208, %v901
        %v1210 = vpop.permute.xlu0 %1209
        %1212 = vset.pattern.permute.xlu0 1
        %1213 = vperm.xlu0 %1212, %v902
        %v1214 = vpop.permute.xlu0 %1213
        %1216 = vset.pattern.permute.xlu0 1
        %1217 = vperm.xlu0 %1216, %v903
        %v1218 = vpop.permute.xlu0 %1217
        %1220 = vset.pattern.permute.xlu0 1
        %1221 = vperm.xlu0 %1220, %v904
        %v1222 = vpop.permute.xlu0 %1221
        %1224 = vset.pattern.permute.xlu0 1
        %1225 = vperm.xlu0 %1224, %v905
        %v1226 = vpop.permute.xlu0 %1225
        %1228 = vset.pattern.permute.xlu0 1
        %1229 = vperm.xlu0 %1228, %v906
        %v1230 = vpop.permute.xlu0 %1229
        %1232 = vset.pattern.permute.xlu0 1
        %1233 = vperm.xlu0 %1232, %v907
        %v1234 = vpop.permute.xlu0 %1233
        %1236 = vset.pattern.permute.xlu0 1
        %1237 = vperm.xlu0 %1236, %v908
        %v1238 = vpop.permute.xlu0 %1237
        %1240 = vset.pattern.permute.xlu0 1
        %1241 = vperm.xlu0 %1240, %v909
        %v1242 = vpop.permute.xlu0 %1241
        %1244 = vset.pattern.permute.xlu0 1
        %1245 = vperm.xlu0 %1244, %v910
        %v1246 = vpop.permute.xlu0 %1245
        %1248 = vset.pattern.permute.xlu0 1
        %1249 = vperm.xlu0 %1248, %v911
        %v1250 = vpop.permute.xlu0 %1249
        %1252 = vset.pattern.permute.xlu0 1
        %1253 = vperm.xlu0 %1252, %v912
        %v1254 = vpop.permute.xlu0 %1253
        %1256 = vset.pattern.permute.xlu0 1
        %1257 = vperm.xlu0 %1256, %v913
        %v1258 = vpop.permute.xlu0 %1257
        %1260 = vset.pattern.permute.xlu0 1
        %1261 = vperm.xlu0 %1260, %v914
        %v1262 = vpop.permute.xlu0 %1261
        %1264 = vset.pattern.permute.xlu0 1
        %1265 = vperm.xlu0 %1264, %v915
        %v1266 = vpop.permute.xlu0 %1265
        %v1268 = vmul.f32 %v815, %v1142
        %v1269 = vmul.f32 %v816, %v1146
        %v1270 = vmul.f32 %v785, %v1150
        %v1271 = vmul.f32 %v786, %v1154
        %v1272 = vmul.f32 %v787, %v1158
        %v1273 = vmul.f32 %v788, %v1162
        %v1274 = vmul.f32 %v789, %v1166
        %v1275 = vmul.f32 %v790, %v1170
        %v1276 = vmul.f32 %v791, %v1174
        %v1277 = vmul.f32 %v792, %v1178
        %v1278 = vmul.f32 %v793, %v1182
        %v1279 = vmul.f32 %v794, %v1186
        %v1280 = vmul.f32 %v795, %v1190
        %v1281 = vmul.f32 %v796, %v1194
        %v1282 = vmul.f32 %v797, %v1198
        %v1283 = vmul.f32 %v798, %v1202
        %v1284 = vmul.f32 %v799, %v1206
        %v1285 = vmul.f32 %v800, %v1210
        %v1286 = vmul.f32 %v801, %v1214
        %v1287 = vmul.f32 %v802, %v1218
        %v1288 = vmul.f32 %v803, %v1222
        %v1289 = vmul.f32 %v804, %v1226
        %v1290 = vmul.f32 %v805, %v1230
        %v1291 = vmul.f32 %v806, %v1234
        %v1292 = vmul.f32 %v807, %v1238
        %v1293 = vmul.f32 %v808, %v1242
        %v1294 = vmul.f32 %v809, %v1246
        %v1295 = vmul.f32 %v810, %v1250
        %v1296 = vmul.f32 %v811, %v1254
        %v1297 = vmul.f32 %v812, %v1258
        %v1298 = vmul.f32 %v813, %v1262
        %v1299 = vmul.f32 %v814, %v1266
        %v1300 = vpack.c.bf16 %v1268, %v1268
        %v1301 = vpack.c.bf16 %v1269, %v1269
        %v1302 = vpack.c.bf16 %v1270, %v1270
        %v1303 = vpack.c.bf16 %v1271, %v1271
        %v1304 = vpack.c.bf16 %v1272, %v1272
        %v1305 = vpack.c.bf16 %v1273, %v1273
        %v1306 = vpack.c.bf16 %v1274, %v1274
        %v1307 = vpack.c.bf16 %v1275, %v1275
        %v1308 = vpack.c.bf16 %v1276, %v1276
        %v1309 = vpack.c.bf16 %v1277, %v1277
        %v1310 = vpack.c.bf16 %v1278, %v1278
        %v1311 = vpack.c.bf16 %v1279, %v1279
        %v1312 = vpack.c.bf16 %v1280, %v1280
        %v1313 = vpack.c.bf16 %v1281, %v1281
        %v1314 = vpack.c.bf16 %v1282, %v1282
        %v1315 = vpack.c.bf16 %v1283, %v1283
        %v1316 = vpack.c.bf16 %v1284, %v1284
        %v1317 = vpack.c.bf16 %v1285, %v1285
        %v1318 = vpack.c.bf16 %v1286, %v1286
        %v1319 = vpack.c.bf16 %v1287, %v1287
        %v1320 = vpack.c.bf16 %v1288, %v1288
        %v1321 = vpack.c.bf16 %v1289, %v1289
        %v1322 = vpack.c.bf16 %v1290, %v1290
        %v1323 = vpack.c.bf16 %v1291, %v1291
        %v1324 = vpack.c.bf16 %v1292, %v1292
        %v1325 = vpack.c.bf16 %v1293, %v1293
        %v1326 = vpack.c.bf16 %v1294, %v1294
        %v1327 = vpack.c.bf16 %v1295, %v1295
        %v1328 = vpack.c.bf16 %v1296, %v1296
        %v1329 = vpack.c.bf16 %v1297, %v1297
        %v1330 = vpack.c.bf16 %v1298, %v1298
        %v1331 = vpack.c.bf16 %v1299, %v1299
        %v1332 = vrot.slane %v785, 1
        %v1333 = vrot.slane %v786, 1
        %v1334 = vrot.slane %v787, 1
        %v1335 = vrot.slane %v788, 1
        %v1336 = vrot.slane %v789, 1
        %v1337 = vrot.slane %v790, 1
        %v1338 = vrot.slane %v791, 1
        %v1339 = vrot.slane %v792, 1
        %v1340 = vrot.slane %v793, 1
        %v1341 = vrot.slane %v794, 1
        %v1342 = vrot.slane %v795, 1
        %v1343 = vrot.slane %v796, 1
        %v1344 = vrot.slane %v797, 1
        %v1345 = vrot.slane %v798, 1
        %v1346 = vrot.slane %v799, 1
        %v1347 = vrot.slane %v800, 1
        %v1348 = vrot.slane %v801, 1
        %v1349 = vrot.slane %v802, 1
        %v1350 = vrot.slane %v803, 1
        %v1351 = vrot.slane %v804, 1
        %v1352 = vrot.slane %v805, 1
        %v1353 = vrot.slane %v806, 1
        %v1354 = vrot.slane %v807, 1
        %v1355 = vrot.slane %v808, 1
        %v1356 = vrot.slane %v809, 1
        %v1357 = vrot.slane %v810, 1
        %v1358 = vrot.slane %v811, 1
        %v1359 = vrot.slane %v812, 1
        %v1360 = vrot.slane %v813, 1
        %v1361 = vrot.slane %v814, 1
        %v1362 = vrot.slane %v815, 1
        %v1363 = vrot.slane %v816, 1
        %vm1364 = vcmp.lt.s32.totalorder %v850, 7
        %v1365 = vsel %vm1364, %v1362, %v1363
        %v1366 = vsel %vm1364, %v1361, %v1362
        %v1367 = vsel %vm1364, %v1360, %v1361
        %v1368 = vsel %vm1364, %v1359, %v1360
        %v1369 = vsel %vm1364, %v1358, %v1359
        %v1370 = vsel %vm1364, %v1357, %v1358
        %v1371 = vsel %vm1364, %v1356, %v1357
        %v1372 = vsel %vm1364, %v1355, %v1356
        %v1373 = vsel %vm1364, %v1354, %v1355
        %v1374 = vsel %vm1364, %v1353, %v1354
        %v1375 = vsel %vm1364, %v1352, %v1353
        %v1376 = vsel %vm1364, %v1351, %v1352
        %v1377 = vsel %vm1364, %v1350, %v1351
        %v1378 = vsel %vm1364, %v1349, %v1350
        %v1379 = vsel %vm1364, %v1348, %v1349
        %v1380 = vsel %vm1364, %v1347, %v1348
        %v1381 = vsel %vm1364, %v1346, %v1347
        %v1382 = vsel %vm1364, %v1345, %v1346
        %v1383 = vsel %vm1364, %v1344, %v1345
        %v1384 = vsel %vm1364, %v1343, %v1344
        %v1385 = vsel %vm1364, %v1342, %v1343
        %v1386 = vsel %vm1364, %v1341, %v1342
        %v1387 = vsel %vm1364, %v1340, %v1341
        %v1388 = vsel %vm1364, %v1339, %v1340
        %v1389 = vsel %vm1364, %v1338, %v1339
        %v1390 = vsel %vm1364, %v1337, %v1338
        %v1391 = vsel %vm1364, %v1336, %v1337
        %v1392 = vsel %vm1364, %v1335, %v1336
        %v1393 = vsel %vm1364, %v1334, %v1335
        %v1394 = vsel %vm1364, %v1333, %v1334
        %v1395 = vsel %vm1364, %v1332, %v1333
        %v1396 = vsel %vm1364, %v1363, %v1332
        %1397 = vset.pattern.permute.xlu0 2
        %1398 = vperm.xlu0 %1397, %v884
        %v1399 = vpop.permute.xlu0 %1398
        %1401 = vset.pattern.permute.xlu0 2
        %1402 = vperm.xlu0 %1401, %v885
        %v1403 = vpop.permute.xlu0 %1402
        %1405 = vset.pattern.permute.xlu0 2
        %1406 = vperm.xlu0 %1405, %v886
        %v1407 = vpop.permute.xlu0 %1406
        %1409 = vset.pattern.permute.xlu0 2
        %1410 = vperm.xlu0 %1409, %v887
        %v1411 = vpop.permute.xlu0 %1410
        %1413 = vset.pattern.permute.xlu0 2
        %1414 = vperm.xlu0 %1413, %v888
        %v1415 = vpop.permute.xlu0 %1414
        %1417 = vset.pattern.permute.xlu0 2
        %1418 = vperm.xlu0 %1417, %v889
        %v1419 = vpop.permute.xlu0 %1418
        %1421 = vset.pattern.permute.xlu0 2
        %1422 = vperm.xlu0 %1421, %v890
        %v1423 = vpop.permute.xlu0 %1422
        %1425 = vset.pattern.permute.xlu0 2
        %1426 = vperm.xlu0 %1425, %v891
        %v1427 = vpop.permute.xlu0 %1426
        %1429 = vset.pattern.permute.xlu0 2
        %1430 = vperm.xlu0 %1429, %v892
        %v1431 = vpop.permute.xlu0 %1430
        %1433 = vset.pattern.permute.xlu0 2
        %1434 = vperm.xlu0 %1433, %v893
        %v1435 = vpop.permute.xlu0 %1434
        %1437 = vset.pattern.permute.xlu0 2
        %1438 = vperm.xlu0 %1437, %v894
        %v1439 = vpop.permute.xlu0 %1438
        %1441 = vset.pattern.permute.xlu0 2
        %1442 = vperm.xlu0 %1441, %v895
        %v1443 = vpop.permute.xlu0 %1442
        %1445 = vset.pattern.permute.xlu0 2
        %1446 = vperm.xlu0 %1445, %v896
        %v1447 = vpop.permute.xlu0 %1446
        %1449 = vset.pattern.permute.xlu0 2
        %1450 = vperm.xlu0 %1449, %v897
        %v1451 = vpop.permute.xlu0 %1450
        %1453 = vset.pattern.permute.xlu0 2
        %1454 = vperm.xlu0 %1453, %v898
        %v1455 = vpop.permute.xlu0 %1454
        %1457 = vset.pattern.permute.xlu0 2
        %1458 = vperm.xlu0 %1457, %v899
        %v1459 = vpop.permute.xlu0 %1458
        %1461 = vset.pattern.permute.xlu0 2
        %1462 = vperm.xlu0 %1461, %v900
        %v1463 = vpop.permute.xlu0 %1462
        %1465 = vset.pattern.permute.xlu0 2
        %1466 = vperm.xlu0 %1465, %v901
        %v1467 = vpop.permute.xlu0 %1466
        %1469 = vset.pattern.permute.xlu0 2
        %1470 = vperm.xlu0 %1469, %v902
        %v1471 = vpop.permute.xlu0 %1470
        %1473 = vset.pattern.permute.xlu0 2
        %1474 = vperm.xlu0 %1473, %v903
        %v1475 = vpop.permute.xlu0 %1474
        %1477 = vset.pattern.permute.xlu0 2
        %1478 = vperm.xlu0 %1477, %v904
        %v1479 = vpop.permute.xlu0 %1478
        %1481 = vset.pattern.permute.xlu0 2
        %1482 = vperm.xlu0 %1481, %v905
        %v1483 = vpop.permute.xlu0 %1482
        %1485 = vset.pattern.permute.xlu0 2
        %1486 = vperm.xlu0 %1485, %v906
        %v1487 = vpop.permute.xlu0 %1486
        %1489 = vset.pattern.permute.xlu0 2
        %1490 = vperm.xlu0 %1489, %v907
        %v1491 = vpop.permute.xlu0 %1490
        %1493 = vset.pattern.permute.xlu0 2
        %1494 = vperm.xlu0 %1493, %v908
        %v1495 = vpop.permute.xlu0 %1494
        %1497 = vset.pattern.permute.xlu0 2
        %1498 = vperm.xlu0 %1497, %v909
        %v1499 = vpop.permute.xlu0 %1498
        %1501 = vset.pattern.permute.xlu0 2
        %1502 = vperm.xlu0 %1501, %v910
        %v1503 = vpop.permute.xlu0 %1502
        %1505 = vset.pattern.permute.xlu0 2
        %1506 = vperm.xlu0 %1505, %v911
        %v1507 = vpop.permute.xlu0 %1506
        %1509 = vset.pattern.permute.xlu0 2
        %1510 = vperm.xlu0 %1509, %v912
        %v1511 = vpop.permute.xlu0 %1510
        %1513 = vset.pattern.permute.xlu0 2
        %1514 = vperm.xlu0 %1513, %v913
        %v1515 = vpop.permute.xlu0 %1514
        %1517 = vset.pattern.permute.xlu0 2
        %1518 = vperm.xlu0 %1517, %v914
        %v1519 = vpop.permute.xlu0 %1518
        %1521 = vset.pattern.permute.xlu0 2
        %1522 = vperm.xlu0 %1521, %v915
        %v1523 = vpop.permute.xlu0 %1522
        %v1525 = vmul.f32 %v1365, %v1399
        %v1526 = vmul.f32 %v1396, %v1403
        %v1527 = vmul.f32 %v1395, %v1407
        %v1528 = vmul.f32 %v1394, %v1411
        %v1529 = vmul.f32 %v1393, %v1415
        %v1530 = vmul.f32 %v1392, %v1419
        %v1531 = vmul.f32 %v1391, %v1423
        %v1532 = vmul.f32 %v1390, %v1427
        %v1533 = vmul.f32 %v1389, %v1431
        %v1534 = vmul.f32 %v1388, %v1435
        %v1535 = vmul.f32 %v1387, %v1439
        %v1536 = vmul.f32 %v1386, %v1443
        %v1537 = vmul.f32 %v1385, %v1447
        %v1538 = vmul.f32 %v1384, %v1451
        %v1539 = vmul.f32 %v1383, %v1455
        %v1540 = vmul.f32 %v1382, %v1459
        %v1541 = vmul.f32 %v1381, %v1463
        %v1542 = vmul.f32 %v1380, %v1467
        %v1543 = vmul.f32 %v1379, %v1471
        %v1544 = vmul.f32 %v1378, %v1475
        %v1545 = vmul.f32 %v1377, %v1479
        %v1546 = vmul.f32 %v1376, %v1483
        %v1547 = vmul.f32 %v1375, %v1487
        %v1548 = vmul.f32 %v1374, %v1491
        %v1549 = vmul.f32 %v1373, %v1495
        %v1550 = vmul.f32 %v1372, %v1499
        %v1551 = vmul.f32 %v1371, %v1503
        %v1552 = vmul.f32 %v1370, %v1507
        %v1553 = vmul.f32 %v1369, %v1511
        %v1554 = vmul.f32 %v1368, %v1515
        %v1555 = vmul.f32 %v1367, %v1519
        %v1556 = vmul.f32 %v1366, %v1523
        %v1557 = vpack.c.bf16 %v1525, %v1525
        %v1558 = vpack.c.bf16 %v1526, %v1526
        %v1559 = vpack.c.bf16 %v1527, %v1527
        %v1560 = vpack.c.bf16 %v1528, %v1528
        %v1561 = vpack.c.bf16 %v1529, %v1529
        %v1562 = vpack.c.bf16 %v1530, %v1530
        %v1563 = vpack.c.bf16 %v1531, %v1531
        %v1564 = vpack.c.bf16 %v1532, %v1532
        %v1565 = vpack.c.bf16 %v1533, %v1533
        %v1566 = vpack.c.bf16 %v1534, %v1534
        %v1567 = vpack.c.bf16 %v1535, %v1535
        %v1568 = vpack.c.bf16 %v1536, %v1536
        %v1569 = vpack.c.bf16 %v1537, %v1537
        %v1570 = vpack.c.bf16 %v1538, %v1538
        %v1571 = vpack.c.bf16 %v1539, %v1539
        %v1572 = vpack.c.bf16 %v1540, %v1540
        %v1573 = vpack.c.bf16 %v1541, %v1541
        %v1574 = vpack.c.bf16 %v1542, %v1542
        %v1575 = vpack.c.bf16 %v1543, %v1543
        %v1576 = vpack.c.bf16 %v1544, %v1544
        %v1577 = vpack.c.bf16 %v1545, %v1545
        %v1578 = vpack.c.bf16 %v1546, %v1546
        %v1579 = vpack.c.bf16 %v1547, %v1547
        %v1580 = vpack.c.bf16 %v1548, %v1548
        %v1581 = vpack.c.bf16 %v1549, %v1549
        %v1582 = vpack.c.bf16 %v1550, %v1550
        %v1583 = vpack.c.bf16 %v1551, %v1551
        %v1584 = vpack.c.bf16 %v1552, %v1552
        %v1585 = vpack.c.bf16 %v1553, %v1553
        %v1586 = vpack.c.bf16 %v1554, %v1554
        %v1587 = vpack.c.bf16 %v1555, %v1555
        %v1588 = vpack.c.bf16 %v1556, %v1556
        %1589 = vset.pattern.permute.xlu0 3
        %1590 = vperm.xlu0 %1589, %v884
        %v1591 = vpop.permute.xlu0 %1590
        %1593 = vset.pattern.permute.xlu0 3
        %1594 = vperm.xlu0 %1593, %v885
        %v1595 = vpop.permute.xlu0 %1594
        %1597 = vset.pattern.permute.xlu0 3
        %1598 = vperm.xlu0 %1597, %v886
        %v1599 = vpop.permute.xlu0 %1598
        %1601 = vset.pattern.permute.xlu0 3
        %1602 = vperm.xlu0 %1601, %v887
        %v1603 = vpop.permute.xlu0 %1602
        %1605 = vset.pattern.permute.xlu0 3
        %1606 = vperm.xlu0 %1605, %v888
        %v1607 = vpop.permute.xlu0 %1606
        %1609 = vset.pattern.permute.xlu0 3
        %1610 = vperm.xlu0 %1609, %v889
        %v1611 = vpop.permute.xlu0 %1610
        %1613 = vset.pattern.permute.xlu0 3
        %1614 = vperm.xlu0 %1613, %v890
        %v1615 = vpop.permute.xlu0 %1614
        %1617 = vset.pattern.permute.xlu0 3
        %1618 = vperm.xlu0 %1617, %v891
        %v1619 = vpop.permute.xlu0 %1618
        %1621 = vset.pattern.permute.xlu0 3
        %1622 = vperm.xlu0 %1621, %v892
        %v1623 = vpop.permute.xlu0 %1622
        %1625 = vset.pattern.permute.xlu0 3
        %1626 = vperm.xlu0 %1625, %v893
        %v1627 = vpop.permute.xlu0 %1626
        %1629 = vset.pattern.permute.xlu0 3
        %1630 = vperm.xlu0 %1629, %v894
        %v1631 = vpop.permute.xlu0 %1630
        %1633 = vset.pattern.permute.xlu0 3
        %1634 = vperm.xlu0 %1633, %v895
        %v1635 = vpop.permute.xlu0 %1634
        %1637 = vset.pattern.permute.xlu0 3
        %1638 = vperm.xlu0 %1637, %v896
        %v1639 = vpop.permute.xlu0 %1638
        %1641 = vset.pattern.permute.xlu0 3
        %1642 = vperm.xlu0 %1641, %v897
        %v1643 = vpop.permute.xlu0 %1642
        %1645 = vset.pattern.permute.xlu0 3
        %1646 = vperm.xlu0 %1645, %v898
        %v1647 = vpop.permute.xlu0 %1646
        %1649 = vset.pattern.permute.xlu0 3
        %1650 = vperm.xlu0 %1649, %v899
        %v1651 = vpop.permute.xlu0 %1650
        %1653 = vset.pattern.permute.xlu0 3
        %1654 = vperm.xlu0 %1653, %v900
        %v1655 = vpop.permute.xlu0 %1654
        %1657 = vset.pattern.permute.xlu0 3
        %1658 = vperm.xlu0 %1657, %v901
        %v1659 = vpop.permute.xlu0 %1658
        %1661 = vset.pattern.permute.xlu0 3
        %1662 = vperm.xlu0 %1661, %v902
        %v1663 = vpop.permute.xlu0 %1662
        %1665 = vset.pattern.permute.xlu0 3
        %1666 = vperm.xlu0 %1665, %v903
        %v1667 = vpop.permute.xlu0 %1666
        %1669 = vset.pattern.permute.xlu0 3
        %1670 = vperm.xlu0 %1669, %v904
        %v1671 = vpop.permute.xlu0 %1670
        %1673 = vset.pattern.permute.xlu0 3
        %1674 = vperm.xlu0 %1673, %v905
        %v1675 = vpop.permute.xlu0 %1674
        %1677 = vset.pattern.permute.xlu0 3
        %1678 = vperm.xlu0 %1677, %v906
        %v1679 = vpop.permute.xlu0 %1678
        %1681 = vset.pattern.permute.xlu0 3
        %1682 = vperm.xlu0 %1681, %v907
        %v1683 = vpop.permute.xlu0 %1682
        %1685 = vset.pattern.permute.xlu0 3
        %1686 = vperm.xlu0 %1685, %v908
        %v1687 = vpop.permute.xlu0 %1686
        %1689 = vset.pattern.permute.xlu0 3
        %1690 = vperm.xlu0 %1689, %v909
        %v1691 = vpop.permute.xlu0 %1690
        %1693 = vset.pattern.permute.xlu0 3
        %1694 = vperm.xlu0 %1693, %v910
        %v1695 = vpop.permute.xlu0 %1694
        %1697 = vset.pattern.permute.xlu0 3
        %1698 = vperm.xlu0 %1697, %v911
        %v1699 = vpop.permute.xlu0 %1698
        %1701 = vset.pattern.permute.xlu0 3
        %1702 = vperm.xlu0 %1701, %v912
        %v1703 = vpop.permute.xlu0 %1702
        %1705 = vset.pattern.permute.xlu0 3
        %1706 = vperm.xlu0 %1705, %v913
        %v1707 = vpop.permute.xlu0 %1706
        %1709 = vset.pattern.permute.xlu0 3
        %1710 = vperm.xlu0 %1709, %v914
        %v1711 = vpop.permute.xlu0 %1710
        %1713 = vset.pattern.permute.xlu0 3
        %1714 = vperm.xlu0 %1713, %v915
        %v1715 = vpop.permute.xlu0 %1714
        %v1717 = vmul.f32 %v883, %v1591
        %v1718 = vmul.f32 %v882, %v1595
        %v1719 = vmul.f32 %v881, %v1599
        %v1720 = vmul.f32 %v880, %v1603
        %v1721 = vmul.f32 %v879, %v1607
        %v1722 = vmul.f32 %v878, %v1611
        %v1723 = vmul.f32 %v877, %v1615
        %v1724 = vmul.f32 %v876, %v1619
        %v1725 = vmul.f32 %v875, %v1623
        %v1726 = vmul.f32 %v874, %v1627
        %v1727 = vmul.f32 %v873, %v1631
        %v1728 = vmul.f32 %v872, %v1635
        %v1729 = vmul.f32 %v871, %v1639
        %v1730 = vmul.f32 %v870, %v1643
        %v1731 = vmul.f32 %v869, %v1647
        %v1732 = vmul.f32 %v868, %v1651
        %v1733 = vmul.f32 %v867, %v1655
        %v1734 = vmul.f32 %v866, %v1659
        %v1735 = vmul.f32 %v865, %v1663
        %v1736 = vmul.f32 %v864, %v1667
        %v1737 = vmul.f32 %v863, %v1671
        %v1738 = vmul.f32 %v862, %v1675
        %v1739 = vmul.f32 %v861, %v1679
        %v1740 = vmul.f32 %v860, %v1683
        %v1741 = vmul.f32 %v859, %v1687
        %v1742 = vmul.f32 %v858, %v1691
        %v1743 = vmul.f32 %v857, %v1695
        %v1744 = vmul.f32 %v856, %v1699
        %v1745 = vmul.f32 %v855, %v1703
        %v1746 = vmul.f32 %v854, %v1707
        %v1747 = vmul.f32 %v853, %v1711
        %v1748 = vmul.f32 %v852, %v1715
        %v1749 = vpack.c.bf16 %v1717, %v1717
        %v1750 = vpack.c.bf16 %v1718, %v1718
        %v1751 = vpack.c.bf16 %v1719, %v1719
        %v1752 = vpack.c.bf16 %v1720, %v1720
        %v1753 = vpack.c.bf16 %v1721, %v1721
        %v1754 = vpack.c.bf16 %v1722, %v1722
        %v1755 = vpack.c.bf16 %v1723, %v1723
        %v1756 = vpack.c.bf16 %v1724, %v1724
        %v1757 = vpack.c.bf16 %v1725, %v1725
        %v1758 = vpack.c.bf16 %v1726, %v1726
        %v1759 = vpack.c.bf16 %v1727, %v1727
        %v1760 = vpack.c.bf16 %v1728, %v1728
        %v1761 = vpack.c.bf16 %v1729, %v1729
        %v1762 = vpack.c.bf16 %v1730, %v1730
        %v1763 = vpack.c.bf16 %v1731, %v1731
        %v1764 = vpack.c.bf16 %v1732, %v1732
        %v1765 = vpack.c.bf16 %v1733, %v1733
        %v1766 = vpack.c.bf16 %v1734, %v1734
        %v1767 = vpack.c.bf16 %v1735, %v1735
        %v1768 = vpack.c.bf16 %v1736, %v1736
        %v1769 = vpack.c.bf16 %v1737, %v1737
        %v1770 = vpack.c.bf16 %v1738, %v1738
        %v1771 = vpack.c.bf16 %v1739, %v1739
        %v1772 = vpack.c.bf16 %v1740, %v1740
        %v1773 = vpack.c.bf16 %v1741, %v1741
        %v1774 = vpack.c.bf16 %v1742, %v1742
        %v1775 = vpack.c.bf16 %v1743, %v1743
        %v1776 = vpack.c.bf16 %v1744, %v1744
        %v1777 = vpack.c.bf16 %v1745, %v1745
        %v1778 = vpack.c.bf16 %v1746, %v1746
        %v1779 = vpack.c.bf16 %v1747, %v1747
        %v1780 = vpack.c.bf16 %v1748, %v1748
        %v1781 = vpack.c.bf16 %v785, %v785
        %v1782 = vpack.c.bf16 %v786, %v786
        %v1783 = vpack.c.bf16 %v787, %v787
        %v1784 = vpack.c.bf16 %v788, %v788
        %v1785 = vpack.c.bf16 %v789, %v789
        %v1786 = vpack.c.bf16 %v790, %v790
        %v1787 = vpack.c.bf16 %v791, %v791
        %v1788 = vpack.c.bf16 %v792, %v792
        %v1789 = vpack.c.bf16 %v793, %v793
        %v1790 = vpack.c.bf16 %v794, %v794
        %v1791 = vpack.c.bf16 %v795, %v795
        %v1792 = vpack.c.bf16 %v796, %v796
        %v1793 = vpack.c.bf16 %v797, %v797
        %v1794 = vpack.c.bf16 %v798, %v798
        %v1795 = vpack.c.bf16 %v799, %v799
        %v1796 = vpack.c.bf16 %v800, %v800
        %v1797 = vpack.c.bf16 %v801, %v801
        %v1798 = vpack.c.bf16 %v802, %v802
        %v1799 = vpack.c.bf16 %v803, %v803
        %v1800 = vpack.c.bf16 %v804, %v804
        %v1801 = vpack.c.bf16 %v805, %v805
        %v1802 = vpack.c.bf16 %v806, %v806
        %v1803 = vpack.c.bf16 %v807, %v807
        %v1804 = vpack.c.bf16 %v808, %v808
        %v1805 = vpack.c.bf16 %v809, %v809
        %v1806 = vpack.c.bf16 %v810, %v810
        %v1807 = vpack.c.bf16 %v811, %v811
        %v1808 = vpack.c.bf16 %v812, %v812
        %v1809 = vpack.c.bf16 %v813, %v813
        %v1810 = vpack.c.bf16 %v814, %v814
        %v1811 = vpack.c.bf16 %v815, %v815
        %v1812 = vpack.c.bf16 %v816, %v816
        %1813 = vset.pattern.permute.xlu0 5
        %1814 = vperm.xlu0 %1813, %v884
        %v1815 = vpop.permute.xlu0 %1814
        %1817 = vset.pattern.permute.xlu0 5
        %1818 = vperm.xlu0 %1817, %v885
        %v1819 = vpop.permute.xlu0 %1818
        %1821 = vset.pattern.permute.xlu0 5
        %1822 = vperm.xlu0 %1821, %v886
        %v1823 = vpop.permute.xlu0 %1822
        %1825 = vset.pattern.permute.xlu0 5
        %1826 = vperm.xlu0 %1825, %v887
        %v1827 = vpop.permute.xlu0 %1826
        %1829 = vset.pattern.permute.xlu0 5
        %1830 = vperm.xlu0 %1829, %v888
        %v1831 = vpop.permute.xlu0 %1830
        %1833 = vset.pattern.permute.xlu0 5
        %1834 = vperm.xlu0 %1833, %v889
        %v1835 = vpop.permute.xlu0 %1834
        %1837 = vset.pattern.permute.xlu0 5
        %1838 = vperm.xlu0 %1837, %v890
        %v1839 = vpop.permute.xlu0 %1838
        %1841 = vset.pattern.permute.xlu0 5
        %1842 = vperm.xlu0 %1841, %v891
        %v1843 = vpop.permute.xlu0 %1842
        %1845 = vset.pattern.permute.xlu0 5
        %1846 = vperm.xlu0 %1845, %v892
        %v1847 = vpop.permute.xlu0 %1846
        %1849 = vset.pattern.permute.xlu0 5
        %1850 = vperm.xlu0 %1849, %v893
        %v1851 = vpop.permute.xlu0 %1850
        %1853 = vset.pattern.permute.xlu0 5
        %1854 = vperm.xlu0 %1853, %v894
        %v1855 = vpop.permute.xlu0 %1854
        %1857 = vset.pattern.permute.xlu0 5
        %1858 = vperm.xlu0 %1857, %v895
        %v1859 = vpop.permute.xlu0 %1858
        %1861 = vset.pattern.permute.xlu0 5
        %1862 = vperm.xlu0 %1861, %v896
        %v1863 = vpop.permute.xlu0 %1862
        %1865 = vset.pattern.permute.xlu0 5
        %1866 = vperm.xlu0 %1865, %v897
        %v1867 = vpop.permute.xlu0 %1866
        %1869 = vset.pattern.permute.xlu0 5
        %1870 = vperm.xlu0 %1869, %v898
        %v1871 = vpop.permute.xlu0 %1870
        %1873 = vset.pattern.permute.xlu0 5
        %1874 = vperm.xlu0 %1873, %v899
        %v1875 = vpop.permute.xlu0 %1874
        %1877 = vset.pattern.permute.xlu0 5
        %1878 = vperm.xlu0 %1877, %v900
        %v1879 = vpop.permute.xlu0 %1878
        %1881 = vset.pattern.permute.xlu0 5
        %1882 = vperm.xlu0 %1881, %v901
        %v1883 = vpop.permute.xlu0 %1882
        %1885 = vset.pattern.permute.xlu0 5
        %1886 = vperm.xlu0 %1885, %v902
        %v1887 = vpop.permute.xlu0 %1886
        %1889 = vset.pattern.permute.xlu0 5
        %1890 = vperm.xlu0 %1889, %v903
        %v1891 = vpop.permute.xlu0 %1890
        %1893 = vset.pattern.permute.xlu0 5
        %1894 = vperm.xlu0 %1893, %v904
        %v1895 = vpop.permute.xlu0 %1894
        %1897 = vset.pattern.permute.xlu0 5
        %1898 = vperm.xlu0 %1897, %v905
        %v1899 = vpop.permute.xlu0 %1898
        %1901 = vset.pattern.permute.xlu0 5
        %1902 = vperm.xlu0 %1901, %v906
        %v1903 = vpop.permute.xlu0 %1902
        %1905 = vset.pattern.permute.xlu0 5
        %1906 = vperm.xlu0 %1905, %v907
        %v1907 = vpop.permute.xlu0 %1906
        %1909 = vset.pattern.permute.xlu0 5
        %1910 = vperm.xlu0 %1909, %v908
        %v1911 = vpop.permute.xlu0 %1910
        %1913 = vset.pattern.permute.xlu0 5
        %1914 = vperm.xlu0 %1913, %v909
        %v1915 = vpop.permute.xlu0 %1914
        %1917 = vset.pattern.permute.xlu0 5
        %1918 = vperm.xlu0 %1917, %v910
        %v1919 = vpop.permute.xlu0 %1918
        %1921 = vset.pattern.permute.xlu0 5
        %1922 = vperm.xlu0 %1921, %v911
        %v1923 = vpop.permute.xlu0 %1922
        %1925 = vset.pattern.permute.xlu0 5
        %1926 = vperm.xlu0 %1925, %v912
        %v1927 = vpop.permute.xlu0 %1926
        %1929 = vset.pattern.permute.xlu0 5
        %1930 = vperm.xlu0 %1929, %v913
        %v1931 = vpop.permute.xlu0 %1930
        %1933 = vset.pattern.permute.xlu0 5
        %1934 = vperm.xlu0 %1933, %v914
        %v1935 = vpop.permute.xlu0 %1934
        %1937 = vset.pattern.permute.xlu0 5
        %1938 = vperm.xlu0 %1937, %v915
        %v1939 = vpop.permute.xlu0 %1938
        %v1941 = vmul.f32 %v1395, %v1815
        %v1942 = vmul.f32 %v1394, %v1819
        %v1943 = vmul.f32 %v1393, %v1823
        %v1944 = vmul.f32 %v1392, %v1827
        %v1945 = vmul.f32 %v1391, %v1831
        %v1946 = vmul.f32 %v1390, %v1835
        %v1947 = vmul.f32 %v1389, %v1839
        %v1948 = vmul.f32 %v1388, %v1843
        %v1949 = vmul.f32 %v1387, %v1847
        %v1950 = vmul.f32 %v1386, %v1851
        %v1951 = vmul.f32 %v1385, %v1855
        %v1952 = vmul.f32 %v1384, %v1859
        %v1953 = vmul.f32 %v1383, %v1863
        %v1954 = vmul.f32 %v1382, %v1867
        %v1955 = vmul.f32 %v1381, %v1871
        %v1956 = vmul.f32 %v1380, %v1875
        %v1957 = vmul.f32 %v1379, %v1879
        %v1958 = vmul.f32 %v1378, %v1883
        %v1959 = vmul.f32 %v1377, %v1887
        %v1960 = vmul.f32 %v1376, %v1891
        %v1961 = vmul.f32 %v1375, %v1895
        %v1962 = vmul.f32 %v1374, %v1899
        %v1963 = vmul.f32 %v1373, %v1903
        %v1964 = vmul.f32 %v1372, %v1907
        %v1965 = vmul.f32 %v1371, %v1911
        %v1966 = vmul.f32 %v1370, %v1915
        %v1967 = vmul.f32 %v1369, %v1919
        %v1968 = vmul.f32 %v1368, %v1923
        %v1969 = vmul.f32 %v1367, %v1927
        %v1970 = vmul.f32 %v1366, %v1931
        %v1971 = vmul.f32 %v1365, %v1935
        %v1972 = vmul.f32 %v1396, %v1939
        %v1973 = vpack.c.bf16 %v1941, %v1941
        %v1974 = vpack.c.bf16 %v1942, %v1942
        %v1975 = vpack.c.bf16 %v1943, %v1943
        %v1976 = vpack.c.bf16 %v1944, %v1944
        %v1977 = vpack.c.bf16 %v1945, %v1945
        %v1978 = vpack.c.bf16 %v1946, %v1946
        %v1979 = vpack.c.bf16 %v1947, %v1947
        %v1980 = vpack.c.bf16 %v1948, %v1948
        %v1981 = vpack.c.bf16 %v1949, %v1949
        %v1982 = vpack.c.bf16 %v1950, %v1950
        %v1983 = vpack.c.bf16 %v1951, %v1951
        %v1984 = vpack.c.bf16 %v1952, %v1952
        %v1985 = vpack.c.bf16 %v1953, %v1953
        %v1986 = vpack.c.bf16 %v1954, %v1954
        %v1987 = vpack.c.bf16 %v1955, %v1955
        %v1988 = vpack.c.bf16 %v1956, %v1956
        %v1989 = vpack.c.bf16 %v1957, %v1957
        %v1990 = vpack.c.bf16 %v1958, %v1958
        %v1991 = vpack.c.bf16 %v1959, %v1959
        %v1992 = vpack.c.bf16 %v1960, %v1960
        %v1993 = vpack.c.bf16 %v1961, %v1961
        %v1994 = vpack.c.bf16 %v1962, %v1962
        %v1995 = vpack.c.bf16 %v1963, %v1963
        %v1996 = vpack.c.bf16 %v1964, %v1964
        %v1997 = vpack.c.bf16 %v1965, %v1965
        %v1998 = vpack.c.bf16 %v1966, %v1966
        %v1999 = vpack.c.bf16 %v1967, %v1967
        %v2000 = vpack.c.bf16 %v1968, %v1968
        %v2001 = vpack.c.bf16 %v1969, %v1969
        %v2002 = vpack.c.bf16 %v1970, %v1970
        %v2003 = vpack.c.bf16 %v1971, %v1971
        %v2004 = vpack.c.bf16 %v1972, %v1972
        %2005 = vset.pattern.permute.xlu0 6
        %2006 = vperm.xlu0 %2005, %v884
        %v2007 = vpop.permute.xlu0 %2006
        %2009 = vset.pattern.permute.xlu0 6
        %2010 = vperm.xlu0 %2009, %v885
        %v2011 = vpop.permute.xlu0 %2010
        %2013 = vset.pattern.permute.xlu0 6
        %2014 = vperm.xlu0 %2013, %v886
        %v2015 = vpop.permute.xlu0 %2014
        %2017 = vset.pattern.permute.xlu0 6
        %2018 = vperm.xlu0 %2017, %v887
        %v2019 = vpop.permute.xlu0 %2018
        %2021 = vset.pattern.permute.xlu0 6
        %2022 = vperm.xlu0 %2021, %v888
        %v2023 = vpop.permute.xlu0 %2022
        %2025 = vset.pattern.permute.xlu0 6
        %2026 = vperm.xlu0 %2025, %v889
        %v2027 = vpop.permute.xlu0 %2026
        %2029 = vset.pattern.permute.xlu0 6
        %2030 = vperm.xlu0 %2029, %v890
        %v2031 = vpop.permute.xlu0 %2030
        %2033 = vset.pattern.permute.xlu0 6
        %2034 = vperm.xlu0 %2033, %v891
        %v2035 = vpop.permute.xlu0 %2034
        %2037 = vset.pattern.permute.xlu0 6
        %2038 = vperm.xlu0 %2037, %v892
        %v2039 = vpop.permute.xlu0 %2038
        %2041 = vset.pattern.permute.xlu0 6
        %2042 = vperm.xlu0 %2041, %v893
        %v2043 = vpop.permute.xlu0 %2042
        %2045 = vset.pattern.permute.xlu0 6
        %2046 = vperm.xlu0 %2045, %v894
        %v2047 = vpop.permute.xlu0 %2046
        %2049 = vset.pattern.permute.xlu0 6
        %2050 = vperm.xlu0 %2049, %v895
        %v2051 = vpop.permute.xlu0 %2050
        %2053 = vset.pattern.permute.xlu0 6
        %2054 = vperm.xlu0 %2053, %v896
        %v2055 = vpop.permute.xlu0 %2054
        %2057 = vset.pattern.permute.xlu0 6
        %2058 = vperm.xlu0 %2057, %v897
        %v2059 = vpop.permute.xlu0 %2058
        %2061 = vset.pattern.permute.xlu0 6
        %2062 = vperm.xlu0 %2061, %v898
        %v2063 = vpop.permute.xlu0 %2062
        %2065 = vset.pattern.permute.xlu0 6
        %2066 = vperm.xlu0 %2065, %v899
        %v2067 = vpop.permute.xlu0 %2066
        %2069 = vset.pattern.permute.xlu0 6
        %2070 = vperm.xlu0 %2069, %v900
        %v2071 = vpop.permute.xlu0 %2070
        %2073 = vset.pattern.permute.xlu0 6
        %2074 = vperm.xlu0 %2073, %v901
        %v2075 = vpop.permute.xlu0 %2074
        %2077 = vset.pattern.permute.xlu0 6
        %2078 = vperm.xlu0 %2077, %v902
        %v2079 = vpop.permute.xlu0 %2078
        %2081 = vset.pattern.permute.xlu0 6
        %2082 = vperm.xlu0 %2081, %v903
        %v2083 = vpop.permute.xlu0 %2082
        %2085 = vset.pattern.permute.xlu0 6
        %2086 = vperm.xlu0 %2085, %v904
        %v2087 = vpop.permute.xlu0 %2086
        %2089 = vset.pattern.permute.xlu0 6
        %2090 = vperm.xlu0 %2089, %v905
        %v2091 = vpop.permute.xlu0 %2090
        %2093 = vset.pattern.permute.xlu0 6
        %2094 = vperm.xlu0 %2093, %v906
        %v2095 = vpop.permute.xlu0 %2094
        %2097 = vset.pattern.permute.xlu0 6
        %2098 = vperm.xlu0 %2097, %v907
        %v2099 = vpop.permute.xlu0 %2098
        %2101 = vset.pattern.permute.xlu0 6
        %2102 = vperm.xlu0 %2101, %v908
        %v2103 = vpop.permute.xlu0 %2102
        %2105 = vset.pattern.permute.xlu0 6
        %2106 = vperm.xlu0 %2105, %v909
        %v2107 = vpop.permute.xlu0 %2106
        %2109 = vset.pattern.permute.xlu0 6
        %2110 = vperm.xlu0 %2109, %v910
        %v2111 = vpop.permute.xlu0 %2110
        %2113 = vset.pattern.permute.xlu0 6
        %2114 = vperm.xlu0 %2113, %v911
        %v2115 = vpop.permute.xlu0 %2114
        %2117 = vset.pattern.permute.xlu0 6
        %2118 = vperm.xlu0 %2117, %v912
        %v2119 = vpop.permute.xlu0 %2118
        %2121 = vset.pattern.permute.xlu0 6
        %2122 = vperm.xlu0 %2121, %v913
        %v2123 = vpop.permute.xlu0 %2122
        %2125 = vset.pattern.permute.xlu0 6
        %2126 = vperm.xlu0 %2125, %v914
        %v2127 = vpop.permute.xlu0 %2126
        %2129 = vset.pattern.permute.xlu0 6
        %2130 = vperm.xlu0 %2129, %v915
        %v2131 = vpop.permute.xlu0 %2130
        %v2133 = vmul.f32 %v881, %v2007
        %v2134 = vmul.f32 %v880, %v2011
        %v2135 = vmul.f32 %v879, %v2015
        %v2136 = vmul.f32 %v878, %v2019
        %v2137 = vmul.f32 %v877, %v2023
        %v2138 = vmul.f32 %v876, %v2027
        %v2139 = vmul.f32 %v875, %v2031
        %v2140 = vmul.f32 %v874, %v2035
        %v2141 = vmul.f32 %v873, %v2039
        %v2142 = vmul.f32 %v872, %v2043
        %v2143 = vmul.f32 %v871, %v2047
        %v2144 = vmul.f32 %v870, %v2051
        %v2145 = vmul.f32 %v869, %v2055
        %v2146 = vmul.f32 %v868, %v2059
        %v2147 = vmul.f32 %v867, %v2063
        %v2148 = vmul.f32 %v866, %v2067
        %v2149 = vmul.f32 %v865, %v2071
        %v2150 = vmul.f32 %v864, %v2075
        %v2151 = vmul.f32 %v863, %v2079
        %v2152 = vmul.f32 %v862, %v2083
        %v2153 = vmul.f32 %v861, %v2087
        %v2154 = vmul.f32 %v860, %v2091
        %v2155 = vmul.f32 %v859, %v2095
        %v2156 = vmul.f32 %v858, %v2099
        %v2157 = vmul.f32 %v857, %v2103
        %v2158 = vmul.f32 %v856, %v2107
        %v2159 = vmul.f32 %v855, %v2111
        %v2160 = vmul.f32 %v854, %v2115
        %v2161 = vmul.f32 %v853, %v2119
        %v2162 = vmul.f32 %v852, %v2123
        %v2163 = vmul.f32 %v883, %v2127
        %v2164 = vmul.f32 %v882, %v2131
        %v2165 = vpack.c.bf16 %v2133, %v2133
        %v2166 = vpack.c.bf16 %v2134, %v2134
        %v2167 = vpack.c.bf16 %v2135, %v2135
        %v2168 = vpack.c.bf16 %v2136, %v2136
        %v2169 = vpack.c.bf16 %v2137, %v2137
        %v2170 = vpack.c.bf16 %v2138, %v2138
        %v2171 = vpack.c.bf16 %v2139, %v2139
        %v2172 = vpack.c.bf16 %v2140, %v2140
        %v2173 = vpack.c.bf16 %v2141, %v2141
        %v2174 = vpack.c.bf16 %v2142, %v2142
        %v2175 = vpack.c.bf16 %v2143, %v2143
        %v2176 = vpack.c.bf16 %v2144, %v2144
        %v2177 = vpack.c.bf16 %v2145, %v2145
        %v2178 = vpack.c.bf16 %v2146, %v2146
        %v2179 = vpack.c.bf16 %v2147, %v2147
        %v2180 = vpack.c.bf16 %v2148, %v2148
        %v2181 = vpack.c.bf16 %v2149, %v2149
        %v2182 = vpack.c.bf16 %v2150, %v2150
        %v2183 = vpack.c.bf16 %v2151, %v2151
        %v2184 = vpack.c.bf16 %v2152, %v2152
        %v2185 = vpack.c.bf16 %v2153, %v2153
        %v2186 = vpack.c.bf16 %v2154, %v2154
        %v2187 = vpack.c.bf16 %v2155, %v2155
        %v2188 = vpack.c.bf16 %v2156, %v2156
        %v2189 = vpack.c.bf16 %v2157, %v2157
        %v2190 = vpack.c.bf16 %v2158, %v2158
        %v2191 = vpack.c.bf16 %v2159, %v2159
        %v2192 = vpack.c.bf16 %v2160, %v2160
        %v2193 = vpack.c.bf16 %v2161, %v2161
        %v2194 = vpack.c.bf16 %v2162, %v2162
        %v2195 = vpack.c.bf16 %v2163, %v2163
        %v2196 = vpack.c.bf16 %v2164, %v2164
        %2197 = vset.pattern.permute.xlu0 7
        %2198 = vperm.xlu0 %2197, %v884
        %v2199 = vpop.permute.xlu0 %2198
        %2201 = vset.pattern.permute.xlu0 7
        %2202 = vperm.xlu0 %2201, %v885
        %v2203 = vpop.permute.xlu0 %2202
        %2205 = vset.pattern.permute.xlu0 7
        %2206 = vperm.xlu0 %2205, %v886
        %v2207 = vpop.permute.xlu0 %2206
        %2209 = vset.pattern.permute.xlu0 7
        %2210 = vperm.xlu0 %2209, %v887
        %v2211 = vpop.permute.xlu0 %2210
        %2213 = vset.pattern.permute.xlu0 7
        %2214 = vperm.xlu0 %2213, %v888
        %v2215 = vpop.permute.xlu0 %2214
        %2217 = vset.pattern.permute.xlu0 7
        %2218 = vperm.xlu0 %2217, %v889
        %v2219 = vpop.permute.xlu0 %2218
        %2221 = vset.pattern.permute.xlu0 7
        %2222 = vperm.xlu0 %2221, %v890
        %v2223 = vpop.permute.xlu0 %2222
        %2225 = vset.pattern.permute.xlu0 7
        %2226 = vperm.xlu0 %2225, %v891
        %v2227 = vpop.permute.xlu0 %2226
        %2229 = vset.pattern.permute.xlu0 7
        %2230 = vperm.xlu0 %2229, %v892
        %v2231 = vpop.permute.xlu0 %2230
        %2233 = vset.pattern.permute.xlu0 7
        %2234 = vperm.xlu0 %2233, %v893
        %v2235 = vpop.permute.xlu0 %2234
        %2237 = vset.pattern.permute.xlu0 7
        %2238 = vperm.xlu0 %2237, %v894
        %v2239 = vpop.permute.xlu0 %2238
        %2241 = vset.pattern.permute.xlu0 7
        %2242 = vperm.xlu0 %2241, %v895
        %v2243 = vpop.permute.xlu0 %2242
        %2245 = vset.pattern.permute.xlu0 7
        %2246 = vperm.xlu0 %2245, %v896
        %v2247 = vpop.permute.xlu0 %2246
        %2249 = vset.pattern.permute.xlu0 7
        %2250 = vperm.xlu0 %2249, %v897
        %v2251 = vpop.permute.xlu0 %2250
        %2253 = vset.pattern.permute.xlu0 7
        %2254 = vperm.xlu0 %2253, %v898
        %v2255 = vpop.permute.xlu0 %2254
        %2257 = vset.pattern.permute.xlu0 7
        %2258 = vperm.xlu0 %2257, %v899
        %v2259 = vpop.permute.xlu0 %2258
        %2261 = vset.pattern.permute.xlu0 7
        %2262 = vperm.xlu0 %2261, %v900
        %v2263 = vpop.permute.xlu0 %2262
        %2265 = vset.pattern.permute.xlu0 7
        %2266 = vperm.xlu0 %2265, %v901
        %v2267 = vpop.permute.xlu0 %2266
        %2269 = vset.pattern.permute.xlu0 7
        %2270 = vperm.xlu0 %2269, %v902
        %v2271 = vpop.permute.xlu0 %2270
        %2273 = vset.pattern.permute.xlu0 7
        %2274 = vperm.xlu0 %2273, %v903
        %v2275 = vpop.permute.xlu0 %2274
        %2277 = vset.pattern.permute.xlu0 7
        %2278 = vperm.xlu0 %2277, %v904
        %v2279 = vpop.permute.xlu0 %2278
        %2281 = vset.pattern.permute.xlu0 7
        %2282 = vperm.xlu0 %2281, %v905
        %v2283 = vpop.permute.xlu0 %2282
        %2285 = vset.pattern.permute.xlu0 7
        %2286 = vperm.xlu0 %2285, %v906
        %v2287 = vpop.permute.xlu0 %2286
        %2289 = vset.pattern.permute.xlu0 7
        %2290 = vperm.xlu0 %2289, %v907
        %v2291 = vpop.permute.xlu0 %2290
        %2293 = vset.pattern.permute.xlu0 7
        %2294 = vperm.xlu0 %2293, %v908
        %v2295 = vpop.permute.xlu0 %2294
        %2297 = vset.pattern.permute.xlu0 7
        %2298 = vperm.xlu0 %2297, %v909
        %v2299 = vpop.permute.xlu0 %2298
        %2301 = vset.pattern.permute.xlu0 7
        %2302 = vperm.xlu0 %2301, %v910
        %v2303 = vpop.permute.xlu0 %2302
        %2305 = vset.pattern.permute.xlu0 7
        %2306 = vperm.xlu0 %2305, %v911
        %v2307 = vpop.permute.xlu0 %2306
        %2309 = vset.pattern.permute.xlu0 7
        %2310 = vperm.xlu0 %2309, %v912
        %v2311 = vpop.permute.xlu0 %2310
        %2313 = vset.pattern.permute.xlu0 7
        %2314 = vperm.xlu0 %2313, %v913
        %v2315 = vpop.permute.xlu0 %2314
        %2317 = vset.pattern.permute.xlu0 7
        %2318 = vperm.xlu0 %2317, %v914
        %v2319 = vpop.permute.xlu0 %2318
        %2321 = vset.pattern.permute.xlu0 7
        %2322 = vperm.xlu0 %2321, %v915
        %v2323 = vpop.permute.xlu0 %2322
        %v2325 = vmul.f32 %v787, %v2199
        %v2326 = vmul.f32 %v788, %v2203
        %v2327 = vmul.f32 %v789, %v2207
        %v2328 = vmul.f32 %v790, %v2211
        %v2329 = vmul.f32 %v791, %v2215
        %v2330 = vmul.f32 %v792, %v2219
        %v2331 = vmul.f32 %v793, %v2223
        %v2332 = vmul.f32 %v794, %v2227
        %v2333 = vmul.f32 %v795, %v2231
        %v2334 = vmul.f32 %v796, %v2235
        %v2335 = vmul.f32 %v797, %v2239
        %v2336 = vmul.f32 %v798, %v2243
        %v2337 = vmul.f32 %v799, %v2247
        %v2338 = vmul.f32 %v800, %v2251
        %v2339 = vmul.f32 %v801, %v2255
        %v2340 = vmul.f32 %v802, %v2259
        %v2341 = vmul.f32 %v803, %v2263
        %v2342 = vmul.f32 %v804, %v2267
        %v2343 = vmul.f32 %v805, %v2271
        %v2344 = vmul.f32 %v806, %v2275
        %v2345 = vmul.f32 %v807, %v2279
        %v2346 = vmul.f32 %v808, %v2283
        %v2347 = vmul.f32 %v809, %v2287
        %v2348 = vmul.f32 %v810, %v2291
        %v2349 = vmul.f32 %v811, %v2295
        %v2350 = vmul.f32 %v812, %v2299
        %v2351 = vmul.f32 %v813, %v2303
        %v2352 = vmul.f32 %v814, %v2307
        %v2353 = vmul.f32 %v815, %v2311
        %v2354 = vmul.f32 %v816, %v2315
        %v2355 = vmul.f32 %v785, %v2319
        %v2356 = vmul.f32 %v786, %v2323
        %v2357 = vpack.c.bf16 %v2325, %v2325
        %v2358 = vpack.c.bf16 %v2326, %v2326
        %v2359 = vpack.c.bf16 %v2327, %v2327
        %v2360 = vpack.c.bf16 %v2328, %v2328
        %v2361 = vpack.c.bf16 %v2329, %v2329
        %v2362 = vpack.c.bf16 %v2330, %v2330
        %v2363 = vpack.c.bf16 %v2331, %v2331
        %v2364 = vpack.c.bf16 %v2332, %v2332
        %v2365 = vpack.c.bf16 %v2333, %v2333
        %v2366 = vpack.c.bf16 %v2334, %v2334
        %v2367 = vpack.c.bf16 %v2335, %v2335
        %v2368 = vpack.c.bf16 %v2336, %v2336
        %v2369 = vpack.c.bf16 %v2337, %v2337
        %v2370 = vpack.c.bf16 %v2338, %v2338
        %v2371 = vpack.c.bf16 %v2339, %v2339
        %v2372 = vpack.c.bf16 %v2340, %v2340
        %v2373 = vpack.c.bf16 %v2341, %v2341
        %v2374 = vpack.c.bf16 %v2342, %v2342
        %v2375 = vpack.c.bf16 %v2343, %v2343
        %v2376 = vpack.c.bf16 %v2344, %v2344
        %v2377 = vpack.c.bf16 %v2345, %v2345
        %v2378 = vpack.c.bf16 %v2346, %v2346
        %v2379 = vpack.c.bf16 %v2347, %v2347
        %v2380 = vpack.c.bf16 %v2348, %v2348
        %v2381 = vpack.c.bf16 %v2349, %v2349
        %v2382 = vpack.c.bf16 %v2350, %v2350
        %v2383 = vpack.c.bf16 %v2351, %v2351
        %v2384 = vpack.c.bf16 %v2352, %v2352
        %v2385 = vpack.c.bf16 %v2353, %v2353
        %v2386 = vpack.c.bf16 %v2354, %v2354
        %v2387 = vpack.c.bf16 %v2355, %v2355
        %v2388 = vpack.c.bf16 %v2356, %v2356
        %2389 = vset.pattern.permute.xlu0 8
        %2390 = vperm.xlu0 %2389, %v884
        %v2391 = vpop.permute.xlu0 %2390
        %2393 = vset.pattern.permute.xlu0 8
        %2394 = vperm.xlu0 %2393, %v885
        %v2395 = vpop.permute.xlu0 %2394
        %2397 = vset.pattern.permute.xlu0 8
        %2398 = vperm.xlu0 %2397, %v886
        %v2399 = vpop.permute.xlu0 %2398
        %2401 = vset.pattern.permute.xlu0 8
        %2402 = vperm.xlu0 %2401, %v887
        %v2403 = vpop.permute.xlu0 %2402
        %2405 = vset.pattern.permute.xlu0 8
        %2406 = vperm.xlu0 %2405, %v888
        %v2407 = vpop.permute.xlu0 %2406
        %2409 = vset.pattern.permute.xlu0 8
        %2410 = vperm.xlu0 %2409, %v889
        %v2411 = vpop.permute.xlu0 %2410
        %2413 = vset.pattern.permute.xlu0 8
        %2414 = vperm.xlu0 %2413, %v890
        %v2415 = vpop.permute.xlu0 %2414
        %2417 = vset.pattern.permute.xlu0 8
        %2418 = vperm.xlu0 %2417, %v891
        %v2419 = vpop.permute.xlu0 %2418
        %2421 = vset.pattern.permute.xlu0 8
        %2422 = vperm.xlu0 %2421, %v892
        %v2423 = vpop.permute.xlu0 %2422
        %2425 = vset.pattern.permute.xlu0 8
        %2426 = vperm.xlu0 %2425, %v893
        %v2427 = vpop.permute.xlu0 %2426
        %2429 = vset.pattern.permute.xlu0 8
        %2430 = vperm.xlu0 %2429, %v894
        %v2431 = vpop.permute.xlu0 %2430
        %2433 = vset.pattern.permute.xlu0 8
        %2434 = vperm.xlu0 %2433, %v895
        %v2435 = vpop.permute.xlu0 %2434
        %2437 = vset.pattern.permute.xlu0 8
        %2438 = vperm.xlu0 %2437, %v896
        %v2439 = vpop.permute.xlu0 %2438
        %2441 = vset.pattern.permute.xlu0 8
        %2442 = vperm.xlu0 %2441, %v897
        %v2443 = vpop.permute.xlu0 %2442
        %2445 = vset.pattern.permute.xlu0 8
        %2446 = vperm.xlu0 %2445, %v898
        %v2447 = vpop.permute.xlu0 %2446
        %2449 = vset.pattern.permute.xlu0 8
        %2450 = vperm.xlu0 %2449, %v899
        %v2451 = vpop.permute.xlu0 %2450
        %2453 = vset.pattern.permute.xlu0 8
        %2454 = vperm.xlu0 %2453, %v900
        %v2455 = vpop.permute.xlu0 %2454
        %2457 = vset.pattern.permute.xlu0 8
        %2458 = vperm.xlu0 %2457, %v901
        %v2459 = vpop.permute.xlu0 %2458
        %2461 = vset.pattern.permute.xlu0 8
        %2462 = vperm.xlu0 %2461, %v902
        %v2463 = vpop.permute.xlu0 %2462
        %2465 = vset.pattern.permute.xlu0 8
        %2466 = vperm.xlu0 %2465, %v903
        %v2467 = vpop.permute.xlu0 %2466
        %2469 = vset.pattern.permute.xlu0 8
        %2470 = vperm.xlu0 %2469, %v904
        %v2471 = vpop.permute.xlu0 %2470
        %2473 = vset.pattern.permute.xlu0 8
        %2474 = vperm.xlu0 %2473, %v905
        %v2475 = vpop.permute.xlu0 %2474
        %2477 = vset.pattern.permute.xlu0 8
        %2478 = vperm.xlu0 %2477, %v906
        %v2479 = vpop.permute.xlu0 %2478
        %2481 = vset.pattern.permute.xlu0 8
        %2482 = vperm.xlu0 %2481, %v907
        %v2483 = vpop.permute.xlu0 %2482
        %2485 = vset.pattern.permute.xlu0 8
        %2486 = vperm.xlu0 %2485, %v908
        %v2487 = vpop.permute.xlu0 %2486
        %2489 = vset.pattern.permute.xlu0 8
        %2490 = vperm.xlu0 %2489, %v909
        %v2491 = vpop.permute.xlu0 %2490
        %2493 = vset.pattern.permute.xlu0 8
        %2494 = vperm.xlu0 %2493, %v910
        %v2495 = vpop.permute.xlu0 %2494
        %2497 = vset.pattern.permute.xlu0 8
        %2498 = vperm.xlu0 %2497, %v911
        %v2499 = vpop.permute.xlu0 %2498
        %2501 = vset.pattern.permute.xlu0 8
        %2502 = vperm.xlu0 %2501, %v912
        %v2503 = vpop.permute.xlu0 %2502
        %2505 = vset.pattern.permute.xlu0 8
        %2506 = vperm.xlu0 %2505, %v913
        %v2507 = vpop.permute.xlu0 %2506
        %2509 = vset.pattern.permute.xlu0 8
        %2510 = vperm.xlu0 %2509, %v914
        %v2511 = vpop.permute.xlu0 %2510
        %2513 = vset.pattern.permute.xlu0 8
        %2514 = vperm.xlu0 %2513, %v915
        %v2515 = vpop.permute.xlu0 %2514
        %v2517 = vmul.f32 %v1393, %v2391
        %v2518 = vmul.f32 %v1392, %v2395
        %v2519 = vmul.f32 %v1391, %v2399
        %v2520 = vmul.f32 %v1390, %v2403
        %v2521 = vmul.f32 %v1389, %v2407
        %v2522 = vmul.f32 %v1388, %v2411
        %v2523 = vmul.f32 %v1387, %v2415
        %v2524 = vmul.f32 %v1386, %v2419
        %v2525 = vmul.f32 %v1385, %v2423
        %v2526 = vmul.f32 %v1384, %v2427
        %v2527 = vmul.f32 %v1383, %v2431
        %v2528 = vmul.f32 %v1382, %v2435
        %v2529 = vmul.f32 %v1381, %v2439
        %v2530 = vmul.f32 %v1380, %v2443
        %v2531 = vmul.f32 %v1379, %v2447
        %v2532 = vmul.f32 %v1378, %v2451
        %v2533 = vmul.f32 %v1377, %v2455
        %v2534 = vmul.f32 %v1376, %v2459
        %v2535 = vmul.f32 %v1375, %v2463
        %v2536 = vmul.f32 %v1374, %v2467
        %v2537 = vmul.f32 %v1373, %v2471
        %v2538 = vmul.f32 %v1372, %v2475
        %v2539 = vmul.f32 %v1371, %v2479
        %v2540 = vmul.f32 %v1370, %v2483
        %v2541 = vmul.f32 %v1369, %v2487
        %v2542 = vmul.f32 %v1368, %v2491
        %v2543 = vmul.f32 %v1367, %v2495
        %v2544 = vmul.f32 %v1366, %v2499
        %v2545 = vmul.f32 %v1365, %v2503
        %v2546 = vmul.f32 %v1396, %v2507
        %v2547 = vmul.f32 %v1395, %v2511
        %v2548 = vmul.f32 %v1394, %v2515
        %v2549 = vpack.c.bf16 %v2517, %v2517
        %v2550 = vpack.c.bf16 %v2518, %v2518
        %v2551 = vpack.c.bf16 %v2519, %v2519
        %v2552 = vpack.c.bf16 %v2520, %v2520
        %v2553 = vpack.c.bf16 %v2521, %v2521
        %v2554 = vpack.c.bf16 %v2522, %v2522
        %v2555 = vpack.c.bf16 %v2523, %v2523
        %v2556 = vpack.c.bf16 %v2524, %v2524
        %v2557 = vpack.c.bf16 %v2525, %v2525
        %v2558 = vpack.c.bf16 %v2526, %v2526
        %v2559 = vpack.c.bf16 %v2527, %v2527
        %v2560 = vpack.c.bf16 %v2528, %v2528
        %v2561 = vpack.c.bf16 %v2529, %v2529
        %v2562 = vpack.c.bf16 %v2530, %v2530
        %v2563 = vpack.c.bf16 %v2531, %v2531
        %v2564 = vpack.c.bf16 %v2532, %v2532
        %v2565 = vpack.c.bf16 %v2533, %v2533
        %v2566 = vpack.c.bf16 %v2534, %v2534
        %v2567 = vpack.c.bf16 %v2535, %v2535
        %v2568 = vpack.c.bf16 %v2536, %v2536
        %v2569 = vpack.c.bf16 %v2537, %v2537
        %v2570 = vpack.c.bf16 %v2538, %v2538
        %v2571 = vpack.c.bf16 %v2539, %v2539
        %v2572 = vpack.c.bf16 %v2540, %v2540
        %v2573 = vpack.c.bf16 %v2541, %v2541
        %v2574 = vpack.c.bf16 %v2542, %v2542
        %v2575 = vpack.c.bf16 %v2543, %v2543
        %v2576 = vpack.c.bf16 %v2544, %v2544
        %v2577 = vpack.c.bf16 %v2545, %v2545
        %v2578 = vpack.c.bf16 %v2546, %v2546
        %v2579 = vpack.c.bf16 %v2547, %v2547
        %v2580 = vpack.c.bf16 %v2548, %v2548
        %v2613 = vunpack.c.l.b16 %v1108
        %v2614 = vunpack.c.l.b16 %v1109
        %v2615 = vunpack.c.l.b16 %v1110
        %v2616 = vunpack.c.l.b16 %v1111
        %v2617 = vunpack.c.l.b16 %v1112
        %v2618 = vunpack.c.l.b16 %v1113
        %v2619 = vunpack.c.l.b16 %v1114
        %v2620 = vunpack.c.l.b16 %v1115
        %v2621 = vunpack.c.l.b16 %v1116
        %v2622 = vunpack.c.l.b16 %v1117
        %v2623 = vunpack.c.l.b16 %v1118
        %v2624 = vunpack.c.l.b16 %v1119
        %v2625 = vunpack.c.l.b16 %v1120
        %v2626 = vunpack.c.l.b16 %v1121
        %v2627 = vunpack.c.l.b16 %v1122
        %v2628 = vunpack.c.l.b16 %v1123
        %v2629 = vunpack.c.l.b16 %v1124
        %v2630 = vunpack.c.l.b16 %v1125
        %v2631 = vunpack.c.l.b16 %v1126
        %v2632 = vunpack.c.l.b16 %v1127
        %v2633 = vunpack.c.l.b16 %v1128
        %v2634 = vunpack.c.l.b16 %v1129
        %v2635 = vunpack.c.l.b16 %v1130
        %v2636 = vunpack.c.l.b16 %v1131
        %v2637 = vunpack.c.l.b16 %v1132
        %v2638 = vunpack.c.l.b16 %v1133
        %v2639 = vunpack.c.l.b16 %v1134
        %v2640 = vunpack.c.l.b16 %v1135
        %v2641 = vunpack.c.l.b16 %v1136
        %v2642 = vunpack.c.l.b16 %v1137
        %v2643 = vunpack.c.l.b16 %v1138
        %v2644 = vunpack.c.l.b16 %v1139
        %v2645 = vpack.c.b16 %v2614, %v2613
        %v2646 = vpack.c.b16 %v2616, %v2615
        %v2647 = vpack.c.b16 %v2618, %v2617
        %v2648 = vpack.c.b16 %v2620, %v2619
        %v2649 = vpack.c.b16 %v2622, %v2621
        %v2650 = vpack.c.b16 %v2624, %v2623
        %v2651 = vpack.c.b16 %v2626, %v2625
        %v2652 = vpack.c.b16 %v2628, %v2627
        %v2653 = vpack.c.b16 %v2630, %v2629
        %v2654 = vpack.c.b16 %v2632, %v2631
        %v2655 = vpack.c.b16 %v2634, %v2633
        %v2656 = vpack.c.b16 %v2636, %v2635
        %v2657 = vpack.c.b16 %v2638, %v2637
        %v2658 = vpack.c.b16 %v2640, %v2639
        %v2659 = vpack.c.b16 %v2642, %v2641
        %v2660 = vpack.c.b16 %v2644, %v2643
        %v2709 = vunpack.c.l.b16 %v1300
        %v2710 = vunpack.c.l.b16 %v1301
        %v2711 = vunpack.c.l.b16 %v1302
        %v2712 = vunpack.c.l.b16 %v1303
        %v2713 = vunpack.c.l.b16 %v1304
        %v2714 = vunpack.c.l.b16 %v1305
        %v2715 = vunpack.c.l.b16 %v1306
        %v2716 = vunpack.c.l.b16 %v1307
        %v2717 = vunpack.c.l.b16 %v1308
        %v2718 = vunpack.c.l.b16 %v1309
        %v2719 = vunpack.c.l.b16 %v1310
        %v2720 = vunpack.c.l.b16 %v1311
        %v2721 = vunpack.c.l.b16 %v1312
        %v2722 = vunpack.c.l.b16 %v1313
        %v2723 = vunpack.c.l.b16 %v1314
        %v2724 = vunpack.c.l.b16 %v1315
        %v2725 = vunpack.c.l.b16 %v1316
        %v2726 = vunpack.c.l.b16 %v1317
        %v2727 = vunpack.c.l.b16 %v1318
        %v2728 = vunpack.c.l.b16 %v1319
        %v2729 = vunpack.c.l.b16 %v1320
        %v2730 = vunpack.c.l.b16 %v1321
        %v2731 = vunpack.c.l.b16 %v1322
        %v2732 = vunpack.c.l.b16 %v1323
        %v2733 = vunpack.c.l.b16 %v1324
        %v2734 = vunpack.c.l.b16 %v1325
        %v2735 = vunpack.c.l.b16 %v1326
        %v2736 = vunpack.c.l.b16 %v1327
        %v2737 = vunpack.c.l.b16 %v1328
        %v2738 = vunpack.c.l.b16 %v1329
        %v2739 = vunpack.c.l.b16 %v1330
        %v2740 = vunpack.c.l.b16 %v1331
        %v2741 = vpack.c.b16 %v2710, %v2709
        %v2742 = vpack.c.b16 %v2712, %v2711
        %v2743 = vpack.c.b16 %v2714, %v2713
        %v2744 = vpack.c.b16 %v2716, %v2715
        %v2745 = vpack.c.b16 %v2718, %v2717
        %v2746 = vpack.c.b16 %v2720, %v2719
        %v2747 = vpack.c.b16 %v2722, %v2721
        %v2748 = vpack.c.b16 %v2724, %v2723
        %v2749 = vpack.c.b16 %v2726, %v2725
        %v2750 = vpack.c.b16 %v2728, %v2727
        %v2751 = vpack.c.b16 %v2730, %v2729
        %v2752 = vpack.c.b16 %v2732, %v2731
        %v2753 = vpack.c.b16 %v2734, %v2733
        %v2754 = vpack.c.b16 %v2736, %v2735
        %v2755 = vpack.c.b16 %v2738, %v2737
        %v2756 = vpack.c.b16 %v2740, %v2739
        %v2805 = vunpack.c.l.b16 %v1557
        %v2806 = vunpack.c.l.b16 %v1558
        %v2807 = vunpack.c.l.b16 %v1559
        %v2808 = vunpack.c.l.b16 %v1560
        %v2809 = vunpack.c.l.b16 %v1561
        %v2810 = vunpack.c.l.b16 %v1562
        %v2811 = vunpack.c.l.b16 %v1563
        %v2812 = vunpack.c.l.b16 %v1564
        %v2813 = vunpack.c.l.b16 %v1565
        %v2814 = vunpack.c.l.b16 %v1566
        %v2815 = vunpack.c.l.b16 %v1567
        %v2816 = vunpack.c.l.b16 %v1568
        %v2817 = vunpack.c.l.b16 %v1569
        %v2818 = vunpack.c.l.b16 %v1570
        %v2819 = vunpack.c.l.b16 %v1571
        %v2820 = vunpack.c.l.b16 %v1572
        %v2821 = vunpack.c.l.b16 %v1573
        %v2822 = vunpack.c.l.b16 %v1574
        %v2823 = vunpack.c.l.b16 %v1575
        %v2824 = vunpack.c.l.b16 %v1576
        %v2825 = vunpack.c.l.b16 %v1577
        %v2826 = vunpack.c.l.b16 %v1578
        %v2827 = vunpack.c.l.b16 %v1579
        %v2828 = vunpack.c.l.b16 %v1580
        %v2829 = vunpack.c.l.b16 %v1581
        %v2830 = vunpack.c.l.b16 %v1582
        %v2831 = vunpack.c.l.b16 %v1583
        %v2832 = vunpack.c.l.b16 %v1584
        %v2833 = vunpack.c.l.b16 %v1585
        %v2834 = vunpack.c.l.b16 %v1586
        %v2835 = vunpack.c.l.b16 %v1587
        %v2836 = vunpack.c.l.b16 %v1588
        %v2837 = vpack.c.b16 %v2806, %v2805
        %v2838 = vpack.c.b16 %v2808, %v2807
        %v2839 = vpack.c.b16 %v2810, %v2809
        %v2840 = vpack.c.b16 %v2812, %v2811
        %v2841 = vpack.c.b16 %v2814, %v2813
        %v2842 = vpack.c.b16 %v2816, %v2815
        %v2843 = vpack.c.b16 %v2818, %v2817
        %v2844 = vpack.c.b16 %v2820, %v2819
        %v2845 = vpack.c.b16 %v2822, %v2821
        %v2846 = vpack.c.b16 %v2824, %v2823
        %v2847 = vpack.c.b16 %v2826, %v2825
        %v2848 = vpack.c.b16 %v2828, %v2827
        %v2849 = vpack.c.b16 %v2830, %v2829
        %v2850 = vpack.c.b16 %v2832, %v2831
        %v2851 = vpack.c.b16 %v2834, %v2833
        %v2852 = vpack.c.b16 %v2836, %v2835
        %v2901 = vunpack.c.l.b16 %v1749
        %v2902 = vunpack.c.l.b16 %v1750
        %v2903 = vunpack.c.l.b16 %v1751
        %v2904 = vunpack.c.l.b16 %v1752
        %v2905 = vunpack.c.l.b16 %v1753
        %v2906 = vunpack.c.l.b16 %v1754
        %v2907 = vunpack.c.l.b16 %v1755
        %v2908 = vunpack.c.l.b16 %v1756
        %v2909 = vunpack.c.l.b16 %v1757
        %v2910 = vunpack.c.l.b16 %v1758
        %v2911 = vunpack.c.l.b16 %v1759
        %v2912 = vunpack.c.l.b16 %v1760
        %v2913 = vunpack.c.l.b16 %v1761
        %v2914 = vunpack.c.l.b16 %v1762
        %v2915 = vunpack.c.l.b16 %v1763
        %v2916 = vunpack.c.l.b16 %v1764
        %v2917 = vunpack.c.l.b16 %v1765
        %v2918 = vunpack.c.l.b16 %v1766
        %v2919 = vunpack.c.l.b16 %v1767
        %v2920 = vunpack.c.l.b16 %v1768
        %v2921 = vunpack.c.l.b16 %v1769
        %v2922 = vunpack.c.l.b16 %v1770
        %v2923 = vunpack.c.l.b16 %v1771
        %v2924 = vunpack.c.l.b16 %v1772
        %v2925 = vunpack.c.l.b16 %v1773
        %v2926 = vunpack.c.l.b16 %v1774
        %v2927 = vunpack.c.l.b16 %v1775
        %v2928 = vunpack.c.l.b16 %v1776
        %v2929 = vunpack.c.l.b16 %v1777
        %v2930 = vunpack.c.l.b16 %v1778
        %v2931 = vunpack.c.l.b16 %v1779
        %v2932 = vunpack.c.l.b16 %v1780
        %v2933 = vpack.c.b16 %v2902, %v2901
        %v2934 = vpack.c.b16 %v2904, %v2903
        %v2935 = vpack.c.b16 %v2906, %v2905
        %v2936 = vpack.c.b16 %v2908, %v2907
        %v2937 = vpack.c.b16 %v2910, %v2909
        %v2938 = vpack.c.b16 %v2912, %v2911
        %v2939 = vpack.c.b16 %v2914, %v2913
        %v2940 = vpack.c.b16 %v2916, %v2915
        %v2941 = vpack.c.b16 %v2918, %v2917
        %v2942 = vpack.c.b16 %v2920, %v2919
        %v2943 = vpack.c.b16 %v2922, %v2921
        %v2944 = vpack.c.b16 %v2924, %v2923
        %v2945 = vpack.c.b16 %v2926, %v2925
        %v2946 = vpack.c.b16 %v2928, %v2927
        %v2947 = vpack.c.b16 %v2930, %v2929
        %v2948 = vpack.c.b16 %v2932, %v2931
        %v2997 = vunpack.c.l.b16 %v1781
        %v2998 = vunpack.c.l.b16 %v1782
        %v2999 = vunpack.c.l.b16 %v1783
        %v3000 = vunpack.c.l.b16 %v1784
        %v3001 = vunpack.c.l.b16 %v1785
        %v3002 = vunpack.c.l.b16 %v1786
        %v3003 = vunpack.c.l.b16 %v1787
        %v3004 = vunpack.c.l.b16 %v1788
        %v3005 = vunpack.c.l.b16 %v1789
        %v3006 = vunpack.c.l.b16 %v1790
        %v3007 = vunpack.c.l.b16 %v1791
        %v3008 = vunpack.c.l.b16 %v1792
        %v3009 = vunpack.c.l.b16 %v1793
        %v3010 = vunpack.c.l.b16 %v1794
        %v3011 = vunpack.c.l.b16 %v1795
        %v3012 = vunpack.c.l.b16 %v1796
        %v3013 = vunpack.c.l.b16 %v1797
        %v3014 = vunpack.c.l.b16 %v1798
        %v3015 = vunpack.c.l.b16 %v1799
        %v3016 = vunpack.c.l.b16 %v1800
        %v3017 = vunpack.c.l.b16 %v1801
        %v3018 = vunpack.c.l.b16 %v1802
        %v3019 = vunpack.c.l.b16 %v1803
        %v3020 = vunpack.c.l.b16 %v1804
        %v3021 = vunpack.c.l.b16 %v1805
        %v3022 = vunpack.c.l.b16 %v1806
        %v3023 = vunpack.c.l.b16 %v1807
        %v3024 = vunpack.c.l.b16 %v1808
        %v3025 = vunpack.c.l.b16 %v1809
        %v3026 = vunpack.c.l.b16 %v1810
        %v3027 = vunpack.c.l.b16 %v1811
        %v3028 = vunpack.c.l.b16 %v1812
        %v3029 = vpack.c.b16 %v2998, %v2997
        %v3030 = vpack.c.b16 %v3000, %v2999
        %v3031 = vpack.c.b16 %v3002, %v3001
        %v3032 = vpack.c.b16 %v3004, %v3003
        %v3033 = vpack.c.b16 %v3006, %v3005
        %v3034 = vpack.c.b16 %v3008, %v3007
        %v3035 = vpack.c.b16 %v3010, %v3009
        %v3036 = vpack.c.b16 %v3012, %v3011
        %v3037 = vpack.c.b16 %v3014, %v3013
        %v3038 = vpack.c.b16 %v3016, %v3015
        %v3039 = vpack.c.b16 %v3018, %v3017
        %v3040 = vpack.c.b16 %v3020, %v3019
        %v3041 = vpack.c.b16 %v3022, %v3021
        %v3042 = vpack.c.b16 %v3024, %v3023
        %v3043 = vpack.c.b16 %v3026, %v3025
        %v3044 = vpack.c.b16 %v3028, %v3027
        %v3093 = vunpack.c.l.b16 %v1973
        %v3094 = vunpack.c.l.b16 %v1974
        %v3095 = vunpack.c.l.b16 %v1975
        %v3096 = vunpack.c.l.b16 %v1976
        %v3097 = vunpack.c.l.b16 %v1977
        %v3098 = vunpack.c.l.b16 %v1978
        %v3099 = vunpack.c.l.b16 %v1979
        %v3100 = vunpack.c.l.b16 %v1980
        %v3101 = vunpack.c.l.b16 %v1981
        %v3102 = vunpack.c.l.b16 %v1982
        %v3103 = vunpack.c.l.b16 %v1983
        %v3104 = vunpack.c.l.b16 %v1984
        %v3105 = vunpack.c.l.b16 %v1985
        %v3106 = vunpack.c.l.b16 %v1986
        %v3107 = vunpack.c.l.b16 %v1987
        %v3108 = vunpack.c.l.b16 %v1988
        %v3109 = vunpack.c.l.b16 %v1989
        %v3110 = vunpack.c.l.b16 %v1990
        %v3111 = vunpack.c.l.b16 %v1991
        %v3112 = vunpack.c.l.b16 %v1992
        %v3113 = vunpack.c.l.b16 %v1993
        %v3114 = vunpack.c.l.b16 %v1994
        %v3115 = vunpack.c.l.b16 %v1995
        %v3116 = vunpack.c.l.b16 %v1996
        %v3117 = vunpack.c.l.b16 %v1997
        %v3118 = vunpack.c.l.b16 %v1998
        %v3119 = vunpack.c.l.b16 %v1999
        %v3120 = vunpack.c.l.b16 %v2000
        %v3121 = vunpack.c.l.b16 %v2001
        %v3122 = vunpack.c.l.b16 %v2002
        %v3123 = vunpack.c.l.b16 %v2003
        %v3124 = vunpack.c.l.b16 %v2004
        %v3125 = vpack.c.b16 %v3094, %v3093
        %v3126 = vpack.c.b16 %v3096, %v3095
        %v3127 = vpack.c.b16 %v3098, %v3097
        %v3128 = vpack.c.b16 %v3100, %v3099
        %v3129 = vpack.c.b16 %v3102, %v3101
        %v3130 = vpack.c.b16 %v3104, %v3103
        %v3131 = vpack.c.b16 %v3106, %v3105
        %v3132 = vpack.c.b16 %v3108, %v3107
        %v3133 = vpack.c.b16 %v3110, %v3109
        %v3134 = vpack.c.b16 %v3112, %v3111
        %v3135 = vpack.c.b16 %v3114, %v3113
        %v3136 = vpack.c.b16 %v3116, %v3115
        %v3137 = vpack.c.b16 %v3118, %v3117
        %v3138 = vpack.c.b16 %v3120, %v3119
        %v3139 = vpack.c.b16 %v3122, %v3121
        %v3140 = vpack.c.b16 %v3124, %v3123
        %v3189 = vunpack.c.l.b16 %v2165
        %v3190 = vunpack.c.l.b16 %v2166
        %v3191 = vunpack.c.l.b16 %v2167
        %v3192 = vunpack.c.l.b16 %v2168
        %v3193 = vunpack.c.l.b16 %v2169
        %v3194 = vunpack.c.l.b16 %v2170
        %v3195 = vunpack.c.l.b16 %v2171
        %v3196 = vunpack.c.l.b16 %v2172
        %v3197 = vunpack.c.l.b16 %v2173
        %v3198 = vunpack.c.l.b16 %v2174
        %v3199 = vunpack.c.l.b16 %v2175
        %v3200 = vunpack.c.l.b16 %v2176
        %v3201 = vunpack.c.l.b16 %v2177
        %v3202 = vunpack.c.l.b16 %v2178
        %v3203 = vunpack.c.l.b16 %v2179
        %v3204 = vunpack.c.l.b16 %v2180
        %v3205 = vunpack.c.l.b16 %v2181
        %v3206 = vunpack.c.l.b16 %v2182
        %v3207 = vunpack.c.l.b16 %v2183
        %v3208 = vunpack.c.l.b16 %v2184
        %v3209 = vunpack.c.l.b16 %v2185
        %v3210 = vunpack.c.l.b16 %v2186
        %v3211 = vunpack.c.l.b16 %v2187
        %v3212 = vunpack.c.l.b16 %v2188
        %v3213 = vunpack.c.l.b16 %v2189
        %v3214 = vunpack.c.l.b16 %v2190
        %v3215 = vunpack.c.l.b16 %v2191
        %v3216 = vunpack.c.l.b16 %v2192
        %v3217 = vunpack.c.l.b16 %v2193
        %v3218 = vunpack.c.l.b16 %v2194
        %v3219 = vunpack.c.l.b16 %v2195
        %v3220 = vunpack.c.l.b16 %v2196
        %v3221 = vpack.c.b16 %v3190, %v3189
        %v3222 = vpack.c.b16 %v3192, %v3191
        %v3223 = vpack.c.b16 %v3194, %v3193
        %v3224 = vpack.c.b16 %v3196, %v3195
        %v3225 = vpack.c.b16 %v3198, %v3197
        %v3226 = vpack.c.b16 %v3200, %v3199
        %v3227 = vpack.c.b16 %v3202, %v3201
        %v3228 = vpack.c.b16 %v3204, %v3203
        %v3229 = vpack.c.b16 %v3206, %v3205
        %v3230 = vpack.c.b16 %v3208, %v3207
        %v3231 = vpack.c.b16 %v3210, %v3209
        %v3232 = vpack.c.b16 %v3212, %v3211
        %v3233 = vpack.c.b16 %v3214, %v3213
        %v3234 = vpack.c.b16 %v3216, %v3215
        %v3235 = vpack.c.b16 %v3218, %v3217
        %v3236 = vpack.c.b16 %v3220, %v3219
        %v3285 = vunpack.c.l.b16 %v2357
        %v3286 = vunpack.c.l.b16 %v2358
        %v3287 = vunpack.c.l.b16 %v2359
        %v3288 = vunpack.c.l.b16 %v2360
        %v3289 = vunpack.c.l.b16 %v2361
        %v3290 = vunpack.c.l.b16 %v2362
        %v3291 = vunpack.c.l.b16 %v2363
        %v3292 = vunpack.c.l.b16 %v2364
        %v3293 = vunpack.c.l.b16 %v2365
        %v3294 = vunpack.c.l.b16 %v2366
        %v3295 = vunpack.c.l.b16 %v2367
        %v3296 = vunpack.c.l.b16 %v2368
        %v3297 = vunpack.c.l.b16 %v2369
        %v3298 = vunpack.c.l.b16 %v2370
        %v3299 = vunpack.c.l.b16 %v2371
        %v3300 = vunpack.c.l.b16 %v2372
        %v3301 = vunpack.c.l.b16 %v2373
        %v3302 = vunpack.c.l.b16 %v2374
        %v3303 = vunpack.c.l.b16 %v2375
        %v3304 = vunpack.c.l.b16 %v2376
        %v3305 = vunpack.c.l.b16 %v2377
        %v3306 = vunpack.c.l.b16 %v2378
        %v3307 = vunpack.c.l.b16 %v2379
        %v3308 = vunpack.c.l.b16 %v2380
        %v3309 = vunpack.c.l.b16 %v2381
        %v3310 = vunpack.c.l.b16 %v2382
        %v3311 = vunpack.c.l.b16 %v2383
        %v3312 = vunpack.c.l.b16 %v2384
        %v3313 = vunpack.c.l.b16 %v2385
        %v3314 = vunpack.c.l.b16 %v2386
        %v3315 = vunpack.c.l.b16 %v2387
        %v3316 = vunpack.c.l.b16 %v2388
        %v3317 = vpack.c.b16 %v3286, %v3285
        %v3318 = vpack.c.b16 %v3288, %v3287
        %v3319 = vpack.c.b16 %v3290, %v3289
        %v3320 = vpack.c.b16 %v3292, %v3291
        %v3321 = vpack.c.b16 %v3294, %v3293
        %v3322 = vpack.c.b16 %v3296, %v3295
        %v3323 = vpack.c.b16 %v3298, %v3297
        %v3324 = vpack.c.b16 %v3300, %v3299
        %v3325 = vpack.c.b16 %v3302, %v3301
        %v3326 = vpack.c.b16 %v3304, %v3303
        %v3327 = vpack.c.b16 %v3306, %v3305
        %v3328 = vpack.c.b16 %v3308, %v3307
        %v3329 = vpack.c.b16 %v3310, %v3309
        %v3330 = vpack.c.b16 %v3312, %v3311
        %v3331 = vpack.c.b16 %v3314, %v3313
        %v3332 = vpack.c.b16 %v3316, %v3315
        %v3381 = vunpack.c.l.b16 %v2549
        %v3382 = vunpack.c.l.b16 %v2550
        %v3383 = vunpack.c.l.b16 %v2551
        %v3384 = vunpack.c.l.b16 %v2552
        %v3385 = vunpack.c.l.b16 %v2553
        %v3386 = vunpack.c.l.b16 %v2554
        %v3387 = vunpack.c.l.b16 %v2555
        %v3388 = vunpack.c.l.b16 %v2556
        %v3389 = vunpack.c.l.b16 %v2557
        %v3390 = vunpack.c.l.b16 %v2558
        %v3391 = vunpack.c.l.b16 %v2559
        %v3392 = vunpack.c.l.b16 %v2560
        %v3393 = vunpack.c.l.b16 %v2561
        %v3394 = vunpack.c.l.b16 %v2562
        %v3395 = vunpack.c.l.b16 %v2563
        %v3396 = vunpack.c.l.b16 %v2564
        %v3397 = vunpack.c.l.b16 %v2565
        %v3398 = vunpack.c.l.b16 %v2566
        %v3399 = vunpack.c.l.b16 %v2567
        %v3400 = vunpack.c.l.b16 %v2568
        %v3401 = vunpack.c.l.b16 %v2569
        %v3402 = vunpack.c.l.b16 %v2570
        %v3403 = vunpack.c.l.b16 %v2571
        %v3404 = vunpack.c.l.b16 %v2572
        %v3405 = vunpack.c.l.b16 %v2573
        %v3406 = vunpack.c.l.b16 %v2574
        %v3407 = vunpack.c.l.b16 %v2575
        %v3408 = vunpack.c.l.b16 %v2576
        %v3409 = vunpack.c.l.b16 %v2577
        %v3410 = vunpack.c.l.b16 %v2578
        %v3411 = vunpack.c.l.b16 %v2579
        %v3412 = vunpack.c.l.b16 %v2580
        %v3413 = vpack.c.b16 %v3382, %v3381
        %v3414 = vpack.c.b16 %v3384, %v3383
        %v3415 = vpack.c.b16 %v3386, %v3385
        %v3416 = vpack.c.b16 %v3388, %v3387
        %v3417 = vpack.c.b16 %v3390, %v3389
        %v3418 = vpack.c.b16 %v3392, %v3391
        %v3419 = vpack.c.b16 %v3394, %v3393
        %v3420 = vpack.c.b16 %v3396, %v3395
        %v3421 = vpack.c.b16 %v3398, %v3397
        %v3422 = vpack.c.b16 %v3400, %v3399
        %v3423 = vpack.c.b16 %v3402, %v3401
        %v3424 = vpack.c.b16 %v3404, %v3403
        %v3425 = vpack.c.b16 %v3406, %v3405
        %v3426 = vpack.c.b16 %v3408, %v3407
        %v3427 = vpack.c.b16 %v3410, %v3409
        %v3428 = vpack.c.b16 %v3412, %v3411
        %v3445 = vld [vmem:[%s4] sm:$0xf]
        %v3446 = vld [vmem:[%s4 + $0x4] sm:$0xf]
        %v3447 = vld [vmem:[%s4 + $0x8] sm:$0xf]
        %v3448 = vld [vmem:[%s4 + $0xc] sm:$0xf]
        %v3449 = vld [vmem:[%s4 + $0x10] sm:$0xf]
        %v3450 = vld [vmem:[%s4 + $0x14] sm:$0xf]
        %v3451 = vld [vmem:[%s4 + $0x18] sm:$0xf]
        %v3452 = vld [vmem:[%s4 + $0x1c] sm:$0xf]
        %v3453 = vld [vmem:[%s4 + $0x20] sm:$0xf]
        %v3454 = vld [vmem:[%s4 + $0x24] sm:$0xf]
        %v3455 = vld [vmem:[%s4 + $0x28] sm:$0xf]
        %v3456 = vld [vmem:[%s4 + $0x2c] sm:$0xf]
        %v3457 = vld [vmem:[%s4 + $0x30] sm:$0xf]
        %v3458 = vld [vmem:[%s4 + $0x34] sm:$0xf]
        %v3459 = vld [vmem:[%s4 + $0x38] sm:$0xf]
        %v3460 = vld [vmem:[%s4 + $0x3c] sm:$0xf]
        %v3461 = vld [vmem:[%s4 + $0x40] sm:$0xf]
        %v3462 = vld [vmem:[%s4 + $0x44] sm:$0xf]
        %v3463 = vld [vmem:[%s4 + $0x48] sm:$0xf]
        %v3464 = vld [vmem:[%s4 + $0x4c] sm:$0xf]
        %v3465 = vld [vmem:[%s4 + $0x50] sm:$0xf]
        %v3466 = vld [vmem:[%s4 + $0x54] sm:$0xf]
        %v3467 = vld [vmem:[%s4 + $0x58] sm:$0xf]
        %v3468 = vld [vmem:[%s4 + $0x5c] sm:$0xf]
        %v3469 = vld [vmem:[%s4 + $0x60] sm:$0xf]
        %v3470 = vld [vmem:[%s4 + $0x64] sm:$0xf]
        %v3471 = vld [vmem:[%s4 + $0x68] sm:$0xf]
        %v3472 = vld [vmem:[%s4 + $0x6c] sm:$0xf]
        %v3473 = vld [vmem:[%s4 + $0x70] sm:$0xf]
        %v3474 = vld [vmem:[%s4 + $0x74] sm:$0xf]
        %v3475 = vld [vmem:[%s4 + $0x78] sm:$0xf]
        %v3476 = vld [vmem:[%s4 + $0x7c] sm:$0xf]
        %v3477 = vld [vmem:[%s4 + $0x80] sm:$0xf]
        %v3478 = vld [vmem:[%s4 + $0x84] sm:$0xf]
        %v3479 = vld [vmem:[%s4 + $0x88] sm:$0xf]
        %v3480 = vld [vmem:[%s4 + $0x8c] sm:$0xf]
        %v3481 = vld [vmem:[%s4 + $0x90] sm:$0xf]
        %v3482 = vld [vmem:[%s4 + $0x94] sm:$0xf]
        %v3483 = vld [vmem:[%s4 + $0x98] sm:$0xf]
        %v3484 = vld [vmem:[%s4 + $0x9c] sm:$0xf]
        %v3485 = vld [vmem:[%s4 + $0xa0] sm:$0xf]
        %v3486 = vld [vmem:[%s4 + $0xa4] sm:$0xf]
        %v3487 = vld [vmem:[%s4 + $0xa8] sm:$0xf]
        %v3488 = vld [vmem:[%s4 + $0xac] sm:$0xf]
        %v3489 = vld [vmem:[%s4 + $0xb0] sm:$0xf]
        %v3490 = vld [vmem:[%s4 + $0xb4] sm:$0xf]
        %v3491 = vld [vmem:[%s4 + $0xb8] sm:$0xf]
        %v3492 = vld [vmem:[%s4 + $0xbc] sm:$0xf]
        %v3493 = vld [vmem:[%s4 + $0xc0] sm:$0xf]
        %v3494 = vld [vmem:[%s4 + $0xc4] sm:$0xf]
        %v3495 = vld [vmem:[%s4 + $0xc8] sm:$0xf]
        %v3496 = vld [vmem:[%s4 + $0xcc] sm:$0xf]
        %v3497 = vld [vmem:[%s4 + $0xd0] sm:$0xf]
        %v3498 = vld [vmem:[%s4 + $0xd4] sm:$0xf]
        %v3499 = vld [vmem:[%s4 + $0xd8] sm:$0xf]
        %v3500 = vld [vmem:[%s4 + $0xdc] sm:$0xf]
        %v3501 = vld [vmem:[%s4 + $0xe0] sm:$0xf]
        %v3502 = vld [vmem:[%s4 + $0xe4] sm:$0xf]
        %v3503 = vld [vmem:[%s4 + $0xe8] sm:$0xf]
        %v3504 = vld [vmem:[%s4 + $0xec] sm:$0xf]
        %v3505 = vld [vmem:[%s4 + $0xf0] sm:$0xf]
        %v3506 = vld [vmem:[%s4 + $0xf4] sm:$0xf]
        %v3507 = vld [vmem:[%s4 + $0xf8] sm:$0xf]
        %v3508 = vld [vmem:[%s4 + $0xfc] sm:$0xf]
        %v3509 = vld [vmem:[%s4 + $0x100] sm:$0xf]
        %v3510 = vld [vmem:[%s4 + $0x104] sm:$0xf]
        %v3511 = vld [vmem:[%s4 + $0x108] sm:$0xf]
        %v3512 = vld [vmem:[%s4 + $0x10c] sm:$0xf]
        %v3513 = vld [vmem:[%s4 + $0x110] sm:$0xf]
        %v3514 = vld [vmem:[%s4 + $0x114] sm:$0xf]
        %v3515 = vld [vmem:[%s4 + $0x118] sm:$0xf]
        %v3516 = vld [vmem:[%s4 + $0x11c] sm:$0xf]
        %v3517 = vld [vmem:[%s4 + $0x120] sm:$0xf]
        %v3518 = vld [vmem:[%s4 + $0x124] sm:$0xf]
        %v3519 = vld [vmem:[%s4 + $0x128] sm:$0xf]
        %v3520 = vld [vmem:[%s4 + $0x12c] sm:$0xf]
        %v3521 = vld [vmem:[%s4 + $0x130] sm:$0xf]
        %v3522 = vld [vmem:[%s4 + $0x134] sm:$0xf]
        %v3523 = vld [vmem:[%s4 + $0x138] sm:$0xf]
        %v3524 = vld [vmem:[%s4 + $0x13c] sm:$0xf]
        %v3525 = vld [vmem:[%s4 + $0x140] sm:$0xf]
        %v3526 = vld [vmem:[%s4 + $0x144] sm:$0xf]
        %v3527 = vld [vmem:[%s4 + $0x148] sm:$0xf]
        %v3528 = vld [vmem:[%s4 + $0x14c] sm:$0xf]
        %v3529 = vld [vmem:[%s4 + $0x150] sm:$0xf]
        %v3530 = vld [vmem:[%s4 + $0x154] sm:$0xf]
        %v3531 = vld [vmem:[%s4 + $0x158] sm:$0xf]
        %v3532 = vld [vmem:[%s4 + $0x15c] sm:$0xf]
        %v3533 = vld [vmem:[%s4 + $0x160] sm:$0xf]
        %v3534 = vld [vmem:[%s4 + $0x164] sm:$0xf]
        %v3535 = vld [vmem:[%s4 + $0x168] sm:$0xf]
        %v3536 = vld [vmem:[%s4 + $0x16c] sm:$0xf]
        %v3537 = vld [vmem:[%s4 + $0x170] sm:$0xf]
        %v3538 = vld [vmem:[%s4 + $0x174] sm:$0xf]
        %v3539 = vld [vmem:[%s4 + $0x178] sm:$0xf]
        %v3540 = vld [vmem:[%s4 + $0x17c] sm:$0xf]
        %v3541 = vld [vmem:[%s4 + $0x180] sm:$0xf]
        %v3542 = vld [vmem:[%s4 + $0x184] sm:$0xf]
        %v3543 = vld [vmem:[%s4 + $0x188] sm:$0xf]
        %v3544 = vld [vmem:[%s4 + $0x18c] sm:$0xf]
        %v3545 = vld [vmem:[%s4 + $0x190] sm:$0xf]
        %v3546 = vld [vmem:[%s4 + $0x194] sm:$0xf]
        %v3547 = vld [vmem:[%s4 + $0x198] sm:$0xf]
        %v3548 = vld [vmem:[%s4 + $0x19c] sm:$0xf]
        %v3549 = vld [vmem:[%s4 + $0x1a0] sm:$0xf]
        %v3550 = vld [vmem:[%s4 + $0x1a4] sm:$0xf]
        %v3551 = vld [vmem:[%s4 + $0x1a8] sm:$0xf]
        %v3552 = vld [vmem:[%s4 + $0x1ac] sm:$0xf]
        %v3553 = vld [vmem:[%s4 + $0x1b0] sm:$0xf]
        %v3554 = vld [vmem:[%s4 + $0x1b4] sm:$0xf]
        %v3555 = vld [vmem:[%s4 + $0x1b8] sm:$0xf]
        %v3556 = vld [vmem:[%s4 + $0x1bc] sm:$0xf]
        %v3557 = vld [vmem:[%s4 + $0x1c0] sm:$0xf]
        %v3558 = vld [vmem:[%s4 + $0x1c4] sm:$0xf]
        %v3559 = vld [vmem:[%s4 + $0x1c8] sm:$0xf]
        %v3560 = vld [vmem:[%s4 + $0x1cc] sm:$0xf]
        %v3561 = vld [vmem:[%s4 + $0x1d0] sm:$0xf]
        %v3562 = vld [vmem:[%s4 + $0x1d4] sm:$0xf]
        %v3563 = vld [vmem:[%s4 + $0x1d8] sm:$0xf]
        %v3564 = vld [vmem:[%s4 + $0x1dc] sm:$0xf]
        %v3565 = vld [vmem:[%s4 + $0x1e0] sm:$0xf]
        %v3566 = vld [vmem:[%s4 + $0x1e4] sm:$0xf]
        %v3567 = vld [vmem:[%s4 + $0x1e8] sm:$0xf]
        %v3568 = vld [vmem:[%s4 + $0x1ec] sm:$0xf]
        %v3569 = vld [vmem:[%s4 + $0x1f0] sm:$0xf]
        %v3570 = vld [vmem:[%s4 + $0x1f4] sm:$0xf]
        %v3571 = vld [vmem:[%s4 + $0x1f8] sm:$0xf]
        %v3572 = vld [vmem:[%s4 + $0x1fc] sm:$0xf]
        %v3573 = vld [vmem:[%s4 + $0x200] sm:$0xf]
        %v3574 = vld [vmem:[%s4 + $0x204] sm:$0xf]
        %v3575 = vld [vmem:[%s4 + $0x208] sm:$0xf]
        %v3576 = vld [vmem:[%s4 + $0x20c] sm:$0xf]
        %v3577 = vld [vmem:[%s4 + $0x210] sm:$0xf]
        %v3578 = vld [vmem:[%s4 + $0x214] sm:$0xf]
        %v3579 = vld [vmem:[%s4 + $0x218] sm:$0xf]
        %v3580 = vld [vmem:[%s4 + $0x21c] sm:$0xf]
        %v3581 = vld [vmem:[%s4 + $0x220] sm:$0xf]
        %v3582 = vld [vmem:[%s4 + $0x224] sm:$0xf]
        %v3583 = vld [vmem:[%s4 + $0x228] sm:$0xf]
        %v3584 = vld [vmem:[%s4 + $0x22c] sm:$0xf]
        %v3585 = vld [vmem:[%s4 + $0x230] sm:$0xf]
        %v3586 = vld [vmem:[%s4 + $0x234] sm:$0xf]
        %v3587 = vld [vmem:[%s4 + $0x238] sm:$0xf]
        %v3588 = vld [vmem:[%s4 + $0x23c] sm:$0xf]
        %v3589 = vld [vmem:[%s5] sm:$0x1]
        %v3591 = vperm.slane %v3589, 0
        %v3737 = vunpack.c.l.b16 %v3445
        %v3738 = vunpack.c.l.b16 %v3446
        %v3739 = vunpack.c.l.b16 %v3447
        %v3740 = vunpack.c.l.b16 %v3448
        %v3741 = vunpack.c.l.b16 %v3449
        %v3742 = vunpack.c.l.b16 %v3450
        %v3743 = vunpack.c.l.b16 %v3451
        %v3744 = vunpack.c.l.b16 %v3452
        %v3745 = vunpack.c.l.b16 %v3453
        %v3746 = vunpack.c.l.b16 %v3454
        %v3747 = vunpack.c.l.b16 %v3455
        %v3748 = vunpack.c.l.b16 %v3456
        %v3749 = vunpack.c.l.b16 %v3457
        %v3750 = vunpack.c.l.b16 %v3458
        %v3751 = vunpack.c.l.b16 %v3459
        %v3752 = vunpack.c.l.b16 %v3460
        %v3753 = vunpack.c.l.b16 %v3461
        %v3754 = vunpack.c.l.b16 %v3462
        %v3755 = vunpack.c.l.b16 %v3463
        %v3756 = vunpack.c.l.b16 %v3464
        %v3757 = vunpack.c.l.b16 %v3465
        %v3758 = vunpack.c.l.b16 %v3466
        %v3759 = vunpack.c.l.b16 %v3467
        %v3760 = vunpack.c.l.b16 %v3468
        %v3761 = vunpack.c.l.b16 %v3469
        %v3762 = vunpack.c.l.b16 %v3470
        %v3763 = vunpack.c.l.b16 %v3471
        %v3764 = vunpack.c.l.b16 %v3472
        %v3765 = vunpack.c.l.b16 %v3473
        %v3766 = vunpack.c.l.b16 %v3474
        %v3767 = vunpack.c.l.b16 %v3475
        %v3768 = vunpack.c.l.b16 %v3476
        %v3769 = vunpack.c.l.b16 %v3477
        %v3770 = vunpack.c.l.b16 %v3478
        %v3771 = vunpack.c.l.b16 %v3479
        %v3772 = vunpack.c.l.b16 %v3480
        %v3773 = vunpack.c.l.b16 %v3481
        %v3774 = vunpack.c.l.b16 %v3482
        %v3775 = vunpack.c.l.b16 %v3483
        %v3776 = vunpack.c.l.b16 %v3484
        %v3777 = vunpack.c.l.b16 %v3485
        %v3778 = vunpack.c.l.b16 %v3486
        %v3779 = vunpack.c.l.b16 %v3487
        %v3780 = vunpack.c.l.b16 %v3488
        %v3781 = vunpack.c.l.b16 %v3489
        %v3782 = vunpack.c.l.b16 %v3490
        %v3783 = vunpack.c.l.b16 %v3491
        %v3784 = vunpack.c.l.b16 %v3492
        %v3785 = vunpack.c.l.b16 %v3493
        %v3786 = vunpack.c.l.b16 %v3494
        %v3787 = vunpack.c.l.b16 %v3495
        %v3788 = vunpack.c.l.b16 %v3496
        %v3789 = vunpack.c.l.b16 %v3497
        %v3790 = vunpack.c.l.b16 %v3498
        %v3791 = vunpack.c.l.b16 %v3499
        %v3792 = vunpack.c.l.b16 %v3500
        %v3793 = vunpack.c.l.b16 %v3501
        %v3794 = vunpack.c.l.b16 %v3502
        %v3795 = vunpack.c.l.b16 %v3503
        %v3796 = vunpack.c.l.b16 %v3504
        %v3797 = vunpack.c.l.b16 %v3505
        %v3798 = vunpack.c.l.b16 %v3506
        %v3799 = vunpack.c.l.b16 %v3507
        %v3800 = vunpack.c.l.b16 %v3508
        %v3801 = vunpack.c.l.b16 %v3509
        %v3802 = vunpack.c.l.b16 %v3510
        %v3803 = vunpack.c.l.b16 %v3511
        %v3804 = vunpack.c.l.b16 %v3512
        %v3805 = vunpack.c.l.b16 %v3513
        %v3806 = vunpack.c.l.b16 %v3514
        %v3807 = vunpack.c.l.b16 %v3515
        %v3808 = vunpack.c.l.b16 %v3516
        %v3809 = vunpack.c.l.b16 %v3517
        %v3810 = vunpack.c.l.b16 %v3518
        %v3811 = vunpack.c.l.b16 %v3519
        %v3812 = vunpack.c.l.b16 %v3520
        %v3813 = vunpack.c.l.b16 %v3521
        %v3814 = vunpack.c.l.b16 %v3522
        %v3815 = vunpack.c.l.b16 %v3523
        %v3816 = vunpack.c.l.b16 %v3524
        %v3817 = vunpack.c.l.b16 %v3525
        %v3818 = vunpack.c.l.b16 %v3526
        %v3819 = vunpack.c.l.b16 %v3527
        %v3820 = vunpack.c.l.b16 %v3528
        %v3821 = vunpack.c.l.b16 %v3529
        %v3822 = vunpack.c.l.b16 %v3530
        %v3823 = vunpack.c.l.b16 %v3531
        %v3824 = vunpack.c.l.b16 %v3532
        %v3825 = vunpack.c.l.b16 %v3533
        %v3826 = vunpack.c.l.b16 %v3534
        %v3827 = vunpack.c.l.b16 %v3535
        %v3828 = vunpack.c.l.b16 %v3536
        %v3829 = vunpack.c.l.b16 %v3537
        %v3830 = vunpack.c.l.b16 %v3538
        %v3831 = vunpack.c.l.b16 %v3539
        %v3832 = vunpack.c.l.b16 %v3540
        %v3833 = vunpack.c.l.b16 %v3541
        %v3834 = vunpack.c.l.b16 %v3542
        %v3835 = vunpack.c.l.b16 %v3543
        %v3836 = vunpack.c.l.b16 %v3544
        %v3837 = vunpack.c.l.b16 %v3545
        %v3838 = vunpack.c.l.b16 %v3546
        %v3839 = vunpack.c.l.b16 %v3547
        %v3840 = vunpack.c.l.b16 %v3548
        %v3841 = vunpack.c.l.b16 %v3549
        %v3842 = vunpack.c.l.b16 %v3550
        %v3843 = vunpack.c.l.b16 %v3551
        %v3844 = vunpack.c.l.b16 %v3552
        %v3845 = vunpack.c.l.b16 %v3553
        %v3846 = vunpack.c.l.b16 %v3554
        %v3847 = vunpack.c.l.b16 %v3555
        %v3848 = vunpack.c.l.b16 %v3556
        %v3849 = vunpack.c.l.b16 %v3557
        %v3850 = vunpack.c.l.b16 %v3558
        %v3851 = vunpack.c.l.b16 %v3559
        %v3852 = vunpack.c.l.b16 %v3560
        %v3853 = vunpack.c.l.b16 %v3561
        %v3854 = vunpack.c.l.b16 %v3562
        %v3855 = vunpack.c.l.b16 %v3563
        %v3856 = vunpack.c.l.b16 %v3564
        %v3857 = vunpack.c.l.b16 %v3565
        %v3858 = vunpack.c.l.b16 %v3566
        %v3859 = vunpack.c.l.b16 %v3567
        %v3860 = vunpack.c.l.b16 %v3568
        %v3861 = vunpack.c.l.b16 %v3569
        %v3862 = vunpack.c.l.b16 %v3570
        %v3863 = vunpack.c.l.b16 %v3571
        %v3864 = vunpack.c.l.b16 %v3572
        %v3865 = vunpack.c.l.b16 %v3573
        %v3866 = vunpack.c.l.b16 %v3574
        %v3867 = vunpack.c.l.b16 %v3575
        %v3868 = vunpack.c.l.b16 %v3576
        %v3869 = vunpack.c.l.b16 %v3577
        %v3870 = vunpack.c.l.b16 %v3578
        %v3871 = vunpack.c.l.b16 %v3579
        %v3872 = vunpack.c.l.b16 %v3580
        %v3873 = vunpack.c.l.b16 %v3581
        %v3874 = vunpack.c.l.b16 %v3582
        %v3875 = vunpack.c.l.b16 %v3583
        %v3876 = vunpack.c.l.b16 %v3584
        %v3877 = vunpack.c.l.b16 %v3585
        %v3878 = vunpack.c.l.b16 %v3586
        %v3879 = vunpack.c.l.b16 %v3587
        %v3880 = vunpack.c.l.b16 %v3588
        %v3881 = vpack.c.b16 %v3738, %v3737
        %v3882 = vpack.c.b16 %v3740, %v3739
        %v3883 = vpack.c.b16 %v3742, %v3741
        %v3884 = vpack.c.b16 %v3744, %v3743
        %v3885 = vpack.c.b16 %v3746, %v3745
        %v3886 = vpack.c.b16 %v3748, %v3747
        %v3887 = vpack.c.b16 %v3750, %v3749
        %v3888 = vpack.c.b16 %v3752, %v3751
        %v3889 = vpack.c.b16 %v3754, %v3753
        %v3890 = vpack.c.b16 %v3756, %v3755
        %v3891 = vpack.c.b16 %v3758, %v3757
        %v3892 = vpack.c.b16 %v3760, %v3759
        %v3893 = vpack.c.b16 %v3762, %v3761
        %v3894 = vpack.c.b16 %v3764, %v3763
        %v3895 = vpack.c.b16 %v3766, %v3765
        %v3896 = vpack.c.b16 %v3768, %v3767
        %v3897 = vpack.c.b16 %v3770, %v3769
        %v3898 = vpack.c.b16 %v3772, %v3771
        %v3899 = vpack.c.b16 %v3774, %v3773
        %v3900 = vpack.c.b16 %v3776, %v3775
        %v3901 = vpack.c.b16 %v3778, %v3777
        %v3902 = vpack.c.b16 %v3780, %v3779
        %v3903 = vpack.c.b16 %v3782, %v3781
        %v3904 = vpack.c.b16 %v3784, %v3783
        %v3905 = vpack.c.b16 %v3786, %v3785
        %v3906 = vpack.c.b16 %v3788, %v3787
        %v3907 = vpack.c.b16 %v3790, %v3789
        %v3908 = vpack.c.b16 %v3792, %v3791
        %v3909 = vpack.c.b16 %v3794, %v3793
        %v3910 = vpack.c.b16 %v3796, %v3795
        %v3911 = vpack.c.b16 %v3798, %v3797
        %v3912 = vpack.c.b16 %v3800, %v3799
        %v3913 = vpack.c.b16 %v3802, %v3801
        %v3914 = vpack.c.b16 %v3804, %v3803
        %v3915 = vpack.c.b16 %v3806, %v3805
        %v3916 = vpack.c.b16 %v3808, %v3807
        %v3917 = vpack.c.b16 %v3810, %v3809
        %v3918 = vpack.c.b16 %v3812, %v3811
        %v3919 = vpack.c.b16 %v3814, %v3813
        %v3920 = vpack.c.b16 %v3816, %v3815
        %v3921 = vpack.c.b16 %v3818, %v3817
        %v3922 = vpack.c.b16 %v3820, %v3819
        %v3923 = vpack.c.b16 %v3822, %v3821
        %v3924 = vpack.c.b16 %v3824, %v3823
        %v3925 = vpack.c.b16 %v3826, %v3825
        %v3926 = vpack.c.b16 %v3828, %v3827
        %v3927 = vpack.c.b16 %v3830, %v3829
        %v3928 = vpack.c.b16 %v3832, %v3831
        %v3929 = vpack.c.b16 %v3834, %v3833
        %v3930 = vpack.c.b16 %v3836, %v3835
        %v3931 = vpack.c.b16 %v3838, %v3837
        %v3932 = vpack.c.b16 %v3840, %v3839
        %v3933 = vpack.c.b16 %v3842, %v3841
        %v3934 = vpack.c.b16 %v3844, %v3843
        %v3935 = vpack.c.b16 %v3846, %v3845
        %v3936 = vpack.c.b16 %v3848, %v3847
        %v3937 = vpack.c.b16 %v3850, %v3849
        %v3938 = vpack.c.b16 %v3852, %v3851
        %v3939 = vpack.c.b16 %v3854, %v3853
        %v3940 = vpack.c.b16 %v3856, %v3855
        %v3941 = vpack.c.b16 %v3858, %v3857
        %v3942 = vpack.c.b16 %v3860, %v3859
        %v3943 = vpack.c.b16 %v3862, %v3861
        %v3944 = vpack.c.b16 %v3864, %v3863
        %v3945 = vpack.c.b16 %v3866, %v3865
        %v3946 = vpack.c.b16 %v3868, %v3867
        %v3947 = vpack.c.b16 %v3870, %v3869
        %v3948 = vpack.c.b16 %v3872, %v3871
        %v3949 = vpack.c.b16 %v3874, %v3873
        %v3950 = vpack.c.b16 %v3876, %v3875
        %v3951 = vpack.c.b16 %v3878, %v3877
        %v3952 = vpack.c.b16 %v3880, %v3879
        %4025 = vmatpush.bf16.msra.mxu0 %v3888
        %4026 = vmatpush.bf16.msra.mxu0 %v3887
        %4027 = vmatpush.bf16.msra.mxu0 %v3886
        %4028 = vmatpush.bf16.msra.mxu0 %v3885
        %4029 = vmatpush.bf16.msra.mxu0 %v3884
        %4030 = vmatpush.bf16.msra.mxu0 %v3883
        %4031 = vmatpush.bf16.msra.mxu0 %v3882
        %4032 = vmatpush.bf16.msra.mxu0 %v3881
        %4033 = vmatmul.bf16.gmra.mxu0 %v2645
        %v4034 = vpop.f32.mrf.mxu0
        %v4035 = vadd.f32 %v3591, %v4034
        %v4036 = vpop.f32.mrf.mxu0
        %v4037 = vadd.f32 %v3591, %v4036
        %4038 = vmatmul.bf16.gmra.mxu0 %v2646
        %v4039 = vpop.f32.mrf.mxu0
        %v4040 = vadd.f32 %v3591, %v4039
        %v4041 = vpop.f32.mrf.mxu0
        %v4042 = vadd.f32 %v3591, %v4041
        %4043 = vmatmul.bf16.gmra.mxu0 %v2647
        %v4044 = vpop.f32.mrf.mxu0
        %v4045 = vadd.f32 %v3591, %v4044
        %v4046 = vpop.f32.mrf.mxu0
        %v4047 = vadd.f32 %v3591, %v4046
        %4048 = vmatmul.bf16.gmra.mxu0 %v2648
        %v4049 = vpop.f32.mrf.mxu0
        %v4050 = vadd.f32 %v3591, %v4049
        %v4051 = vpop.f32.mrf.mxu0
        %v4052 = vadd.f32 %v3591, %v4051
        %4053 = vmatmul.bf16.gmra.mxu0 %v2649
        %v4054 = vpop.f32.mrf.mxu0
        %v4055 = vadd.f32 %v3591, %v4054
        %v4056 = vpop.f32.mrf.mxu0
        %v4057 = vadd.f32 %v3591, %v4056
        %4058 = vmatmul.bf16.gmra.mxu0 %v2650
        %v4059 = vpop.f32.mrf.mxu0
        %v4060 = vadd.f32 %v3591, %v4059
        %v4061 = vpop.f32.mrf.mxu0
        %v4062 = vadd.f32 %v3591, %v4061
        %4063 = vmatmul.bf16.gmra.mxu0 %v2651
        %v4064 = vpop.f32.mrf.mxu0
        %v4065 = vadd.f32 %v3591, %v4064
        %v4066 = vpop.f32.mrf.mxu0
        %v4067 = vadd.f32 %v3591, %v4066
        %4068 = vmatmul.bf16.gmra.mxu0 %v2652
        %v4069 = vpop.f32.mrf.mxu0
        %v4070 = vadd.f32 %v3591, %v4069
        %v4071 = vpop.f32.mrf.mxu0
        %v4072 = vadd.f32 %v3591, %v4071
        %4073 = vmatmul.bf16.gmra.mxu0 %v2653
        %v4074 = vpop.f32.mrf.mxu0
        %v4075 = vadd.f32 %v3591, %v4074
        %v4076 = vpop.f32.mrf.mxu0
        %v4077 = vadd.f32 %v3591, %v4076
        %4078 = vmatmul.bf16.gmra.mxu0 %v2654
        %v4079 = vpop.f32.mrf.mxu0
        %v4080 = vadd.f32 %v3591, %v4079
        %v4081 = vpop.f32.mrf.mxu0
        %v4082 = vadd.f32 %v3591, %v4081
        %4083 = vmatmul.bf16.gmra.mxu0 %v2655
        %v4084 = vpop.f32.mrf.mxu0
        %v4085 = vadd.f32 %v3591, %v4084
        %v4086 = vpop.f32.mrf.mxu0
        %v4087 = vadd.f32 %v3591, %v4086
        %4088 = vmatmul.bf16.gmra.mxu0 %v2656
        %v4089 = vpop.f32.mrf.mxu0
        %v4090 = vadd.f32 %v3591, %v4089
        %v4091 = vpop.f32.mrf.mxu0
        %v4092 = vadd.f32 %v3591, %v4091
        %4093 = vmatmul.bf16.gmra.mxu0 %v2657
        %v4094 = vpop.f32.mrf.mxu0
        %v4095 = vadd.f32 %v3591, %v4094
        %v4096 = vpop.f32.mrf.mxu0
        %v4097 = vadd.f32 %v3591, %v4096
        %4098 = vmatmul.bf16.gmra.mxu0 %v2658
        %v4099 = vpop.f32.mrf.mxu0
        %v4100 = vadd.f32 %v3591, %v4099
        %v4101 = vpop.f32.mrf.mxu0
        %v4102 = vadd.f32 %v3591, %v4101
        %4103 = vmatmul.bf16.gmra.mxu0 %v2659
        %v4104 = vpop.f32.mrf.mxu0
        %v4105 = vadd.f32 %v3591, %v4104
        %v4106 = vpop.f32.mrf.mxu0
        %v4107 = vadd.f32 %v3591, %v4106
        %4108 = vmatmul.bf16.gmra.mxu0 %v2660
        %v4109 = vpop.f32.mrf.mxu0
        %v4110 = vadd.f32 %v3591, %v4109
        %v4111 = vpop.f32.mrf.mxu0
        %v4112 = vadd.f32 %v3591, %v4111
        %4113 = vdwg.mxu0
        %4114 = vmatpush.bf16.msra.mxu0 %v3896
        %4115 = vmatpush.bf16.msra.mxu0 %v3895
        %4116 = vmatpush.bf16.msra.mxu0 %v3894
        %4117 = vmatpush.bf16.msra.mxu0 %v3893
        %4118 = vmatpush.bf16.msra.mxu0 %v3892
        %4119 = vmatpush.bf16.msra.mxu0 %v3891
        %4120 = vmatpush.bf16.msra.mxu0 %v3890
        %4121 = vmatpush.bf16.msra.mxu0 %v3889
        %4122 = vmatmul.bf16.gmra.mxu0 %v2741
        %v4123 = vpop.f32.mrf.mxu0
        %v4124 = vadd.f32 %v4035, %v4123
        %v4125 = vpop.f32.mrf.mxu0
        %v4126 = vadd.f32 %v4037, %v4125
        %4127 = vmatmul.bf16.gmra.mxu0 %v2742
        %v4128 = vpop.f32.mrf.mxu0
        %v4129 = vadd.f32 %v4040, %v4128
        %v4130 = vpop.f32.mrf.mxu0
        %v4131 = vadd.f32 %v4042, %v4130
        %4132 = vmatmul.bf16.gmra.mxu0 %v2743
        %v4133 = vpop.f32.mrf.mxu0
        %v4134 = vadd.f32 %v4045, %v4133
        %v4135 = vpop.f32.mrf.mxu0
        %v4136 = vadd.f32 %v4047, %v4135
        %4137 = vmatmul.bf16.gmra.mxu0 %v2744
        %v4138 = vpop.f32.mrf.mxu0
        %v4139 = vadd.f32 %v4050, %v4138
        %v4140 = vpop.f32.mrf.mxu0
        %v4141 = vadd.f32 %v4052, %v4140
        %4142 = vmatmul.bf16.gmra.mxu0 %v2745
        %v4143 = vpop.f32.mrf.mxu0
        %v4144 = vadd.f32 %v4055, %v4143
        %v4145 = vpop.f32.mrf.mxu0
        %v4146 = vadd.f32 %v4057, %v4145
        %4147 = vmatmul.bf16.gmra.mxu0 %v2746
        %v4148 = vpop.f32.mrf.mxu0
        %v4149 = vadd.f32 %v4060, %v4148
        %v4150 = vpop.f32.mrf.mxu0
        %v4151 = vadd.f32 %v4062, %v4150
        %4152 = vmatmul.bf16.gmra.mxu0 %v2747
        %v4153 = vpop.f32.mrf.mxu0
        %v4154 = vadd.f32 %v4065, %v4153
        %v4155 = vpop.f32.mrf.mxu0
        %v4156 = vadd.f32 %v4067, %v4155
        %4157 = vmatmul.bf16.gmra.mxu0 %v2748
        %v4158 = vpop.f32.mrf.mxu0
        %v4159 = vadd.f32 %v4070, %v4158
        %v4160 = vpop.f32.mrf.mxu0
        %v4161 = vadd.f32 %v4072, %v4160
        %4162 = vmatmul.bf16.gmra.mxu0 %v2749
        %v4163 = vpop.f32.mrf.mxu0
        %v4164 = vadd.f32 %v4075, %v4163
        %v4165 = vpop.f32.mrf.mxu0
        %v4166 = vadd.f32 %v4077, %v4165
        %4167 = vmatmul.bf16.gmra.mxu0 %v2750
        %v4168 = vpop.f32.mrf.mxu0
        %v4169 = vadd.f32 %v4080, %v4168
        %v4170 = vpop.f32.mrf.mxu0
        %v4171 = vadd.f32 %v4082, %v4170
        %4172 = vmatmul.bf16.gmra.mxu0 %v2751
        %v4173 = vpop.f32.mrf.mxu0
        %v4174 = vadd.f32 %v4085, %v4173
        %v4175 = vpop.f32.mrf.mxu0
        %v4176 = vadd.f32 %v4087, %v4175
        %4177 = vmatmul.bf16.gmra.mxu0 %v2752
        %v4178 = vpop.f32.mrf.mxu0
        %v4179 = vadd.f32 %v4090, %v4178
        %v4180 = vpop.f32.mrf.mxu0
        %v4181 = vadd.f32 %v4092, %v4180
        %4182 = vmatmul.bf16.gmra.mxu0 %v2753
        %v4183 = vpop.f32.mrf.mxu0
        %v4184 = vadd.f32 %v4095, %v4183
        %v4185 = vpop.f32.mrf.mxu0
        %v4186 = vadd.f32 %v4097, %v4185
        %4187 = vmatmul.bf16.gmra.mxu0 %v2754
        %v4188 = vpop.f32.mrf.mxu0
        %v4189 = vadd.f32 %v4100, %v4188
        %v4190 = vpop.f32.mrf.mxu0
        %v4191 = vadd.f32 %v4102, %v4190
        %4192 = vmatmul.bf16.gmra.mxu0 %v2755
        %v4193 = vpop.f32.mrf.mxu0
        %v4194 = vadd.f32 %v4105, %v4193
        %v4195 = vpop.f32.mrf.mxu0
        %v4196 = vadd.f32 %v4107, %v4195
        %4197 = vmatmul.bf16.gmra.mxu0 %v2756
        %v4198 = vpop.f32.mrf.mxu0
        %v4199 = vadd.f32 %v4110, %v4198
        %v4200 = vpop.f32.mrf.mxu0
        %v4201 = vadd.f32 %v4112, %v4200
        %4202 = vdwg.mxu0
        %4203 = vmatpush.bf16.msra.mxu0 %v3904
        %4204 = vmatpush.bf16.msra.mxu0 %v3903
        %4205 = vmatpush.bf16.msra.mxu0 %v3902
        %4206 = vmatpush.bf16.msra.mxu0 %v3901
        %4207 = vmatpush.bf16.msra.mxu0 %v3900
        %4208 = vmatpush.bf16.msra.mxu0 %v3899
        %4209 = vmatpush.bf16.msra.mxu0 %v3898
        %4210 = vmatpush.bf16.msra.mxu0 %v3897
        %4211 = vmatmul.bf16.gmra.mxu0 %v2837
        %v4212 = vpop.f32.mrf.mxu0
        %v4213 = vadd.f32 %v4124, %v4212
        %v4214 = vpop.f32.mrf.mxu0
        %v4215 = vadd.f32 %v4126, %v4214
        %4216 = vmatmul.bf16.gmra.mxu0 %v2838
        %v4217 = vpop.f32.mrf.mxu0
        %v4218 = vadd.f32 %v4129, %v4217
        %v4219 = vpop.f32.mrf.mxu0
        %v4220 = vadd.f32 %v4131, %v4219
        %4221 = vmatmul.bf16.gmra.mxu0 %v2839
        %v4222 = vpop.f32.mrf.mxu0
        %v4223 = vadd.f32 %v4134, %v4222
        %v4224 = vpop.f32.mrf.mxu0
        %v4225 = vadd.f32 %v4136, %v4224
        %4226 = vmatmul.bf16.gmra.mxu0 %v2840
        %v4227 = vpop.f32.mrf.mxu0
        %v4228 = vadd.f32 %v4139, %v4227
        %v4229 = vpop.f32.mrf.mxu0
        %v4230 = vadd.f32 %v4141, %v4229
        %4231 = vmatmul.bf16.gmra.mxu0 %v2841
        %v4232 = vpop.f32.mrf.mxu0
        %v4233 = vadd.f32 %v4144, %v4232
        %v4234 = vpop.f32.mrf.mxu0
        %v4235 = vadd.f32 %v4146, %v4234
        %4236 = vmatmul.bf16.gmra.mxu0 %v2842
        %v4237 = vpop.f32.mrf.mxu0
        %v4238 = vadd.f32 %v4149, %v4237
        %v4239 = vpop.f32.mrf.mxu0
        %v4240 = vadd.f32 %v4151, %v4239
        %4241 = vmatmul.bf16.gmra.mxu0 %v2843
        %v4242 = vpop.f32.mrf.mxu0
        %v4243 = vadd.f32 %v4154, %v4242
        %v4244 = vpop.f32.mrf.mxu0
        %v4245 = vadd.f32 %v4156, %v4244
        %4246 = vmatmul.bf16.gmra.mxu0 %v2844
        %v4247 = vpop.f32.mrf.mxu0
        %v4248 = vadd.f32 %v4159, %v4247
        %v4249 = vpop.f32.mrf.mxu0
        %v4250 = vadd.f32 %v4161, %v4249
        %4251 = vmatmul.bf16.gmra.mxu0 %v2845
        %v4252 = vpop.f32.mrf.mxu0
        %v4253 = vadd.f32 %v4164, %v4252
        %v4254 = vpop.f32.mrf.mxu0
        %v4255 = vadd.f32 %v4166, %v4254
        %4256 = vmatmul.bf16.gmra.mxu0 %v2846
        %v4257 = vpop.f32.mrf.mxu0
        %v4258 = vadd.f32 %v4169, %v4257
        %v4259 = vpop.f32.mrf.mxu0
        %v4260 = vadd.f32 %v4171, %v4259
        %4261 = vmatmul.bf16.gmra.mxu0 %v2847
        %v4262 = vpop.f32.mrf.mxu0
        %v4263 = vadd.f32 %v4174, %v4262
        %v4264 = vpop.f32.mrf.mxu0
        %v4265 = vadd.f32 %v4176, %v4264
        %4266 = vmatmul.bf16.gmra.mxu0 %v2848
        %v4267 = vpop.f32.mrf.mxu0
        %v4268 = vadd.f32 %v4179, %v4267
        %v4269 = vpop.f32.mrf.mxu0
        %v4270 = vadd.f32 %v4181, %v4269
        %4271 = vmatmul.bf16.gmra.mxu0 %v2849
        %v4272 = vpop.f32.mrf.mxu0
        %v4273 = vadd.f32 %v4184, %v4272
        %v4274 = vpop.f32.mrf.mxu0
        %v4275 = vadd.f32 %v4186, %v4274
        %4276 = vmatmul.bf16.gmra.mxu0 %v2850
        %v4277 = vpop.f32.mrf.mxu0
        %v4278 = vadd.f32 %v4189, %v4277
        %v4279 = vpop.f32.mrf.mxu0
        %v4280 = vadd.f32 %v4191, %v4279
        %4281 = vmatmul.bf16.gmra.mxu0 %v2851
        %v4282 = vpop.f32.mrf.mxu0
        %v4283 = vadd.f32 %v4194, %v4282
        %v4284 = vpop.f32.mrf.mxu0
        %v4285 = vadd.f32 %v4196, %v4284
        %4286 = vmatmul.bf16.gmra.mxu0 %v2852
        %v4287 = vpop.f32.mrf.mxu0
        %v4288 = vadd.f32 %v4199, %v4287
        %v4289 = vpop.f32.mrf.mxu0
        %v4290 = vadd.f32 %v4201, %v4289
        %4291 = vdwg.mxu0
        %4292 = vmatpush.bf16.msra.mxu0 %v3912
        %4293 = vmatpush.bf16.msra.mxu0 %v3911
        %4294 = vmatpush.bf16.msra.mxu0 %v3910
        %4295 = vmatpush.bf16.msra.mxu0 %v3909
        %4296 = vmatpush.bf16.msra.mxu0 %v3908
        %4297 = vmatpush.bf16.msra.mxu0 %v3907
        %4298 = vmatpush.bf16.msra.mxu0 %v3906
        %4299 = vmatpush.bf16.msra.mxu0 %v3905
        %4300 = vmatmul.bf16.gmra.mxu0 %v2933
        %v4301 = vpop.f32.mrf.mxu0
        %v4302 = vadd.f32 %v4213, %v4301
        %v4303 = vpop.f32.mrf.mxu0
        %v4304 = vadd.f32 %v4215, %v4303
        %4305 = vmatmul.bf16.gmra.mxu0 %v2934
        %v4306 = vpop.f32.mrf.mxu0
        %v4307 = vadd.f32 %v4218, %v4306
        %v4308 = vpop.f32.mrf.mxu0
        %v4309 = vadd.f32 %v4220, %v4308
        %4310 = vmatmul.bf16.gmra.mxu0 %v2935
        %v4311 = vpop.f32.mrf.mxu0
        %v4312 = vadd.f32 %v4223, %v4311
        %v4313 = vpop.f32.mrf.mxu0
        %v4314 = vadd.f32 %v4225, %v4313
        %4315 = vmatmul.bf16.gmra.mxu0 %v2936
        %v4316 = vpop.f32.mrf.mxu0
        %v4317 = vadd.f32 %v4228, %v4316
        %v4318 = vpop.f32.mrf.mxu0
        %v4319 = vadd.f32 %v4230, %v4318
        %4320 = vmatmul.bf16.gmra.mxu0 %v2937
        %v4321 = vpop.f32.mrf.mxu0
        %v4322 = vadd.f32 %v4233, %v4321
        %v4323 = vpop.f32.mrf.mxu0
        %v4324 = vadd.f32 %v4235, %v4323
        %4325 = vmatmul.bf16.gmra.mxu0 %v2938
        %v4326 = vpop.f32.mrf.mxu0
        %v4327 = vadd.f32 %v4238, %v4326
        %v4328 = vpop.f32.mrf.mxu0
        %v4329 = vadd.f32 %v4240, %v4328
        %4330 = vmatmul.bf16.gmra.mxu0 %v2939
        %v4331 = vpop.f32.mrf.mxu0
        %v4332 = vadd.f32 %v4243, %v4331
        %v4333 = vpop.f32.mrf.mxu0
        %v4334 = vadd.f32 %v4245, %v4333
        %4335 = vmatmul.bf16.gmra.mxu0 %v2940
        %v4336 = vpop.f32.mrf.mxu0
        %v4337 = vadd.f32 %v4248, %v4336
        %v4338 = vpop.f32.mrf.mxu0
        %v4339 = vadd.f32 %v4250, %v4338
        %4340 = vmatmul.bf16.gmra.mxu0 %v2941
        %v4341 = vpop.f32.mrf.mxu0
        %v4342 = vadd.f32 %v4253, %v4341
        %v4343 = vpop.f32.mrf.mxu0
        %v4344 = vadd.f32 %v4255, %v4343
        %4345 = vmatmul.bf16.gmra.mxu0 %v2942
        %v4346 = vpop.f32.mrf.mxu0
        %v4347 = vadd.f32 %v4258, %v4346
        %v4348 = vpop.f32.mrf.mxu0
        %v4349 = vadd.f32 %v4260, %v4348
        %4350 = vmatmul.bf16.gmra.mxu0 %v2943
        %v4351 = vpop.f32.mrf.mxu0
        %v4352 = vadd.f32 %v4263, %v4351
        %v4353 = vpop.f32.mrf.mxu0
        %v4354 = vadd.f32 %v4265, %v4353
        %4355 = vmatmul.bf16.gmra.mxu0 %v2944
        %v4356 = vpop.f32.mrf.mxu0
        %v4357 = vadd.f32 %v4268, %v4356
        %v4358 = vpop.f32.mrf.mxu0
        %v4359 = vadd.f32 %v4270, %v4358
        %4360 = vmatmul.bf16.gmra.mxu0 %v2945
        %v4361 = vpop.f32.mrf.mxu0
        %v4362 = vadd.f32 %v4273, %v4361
        %v4363 = vpop.f32.mrf.mxu0
        %v4364 = vadd.f32 %v4275, %v4363
        %4365 = vmatmul.bf16.gmra.mxu0 %v2946
        %v4366 = vpop.f32.mrf.mxu0
        %v4367 = vadd.f32 %v4278, %v4366
        %v4368 = vpop.f32.mrf.mxu0
        %v4369 = vadd.f32 %v4280, %v4368
        %4370 = vmatmul.bf16.gmra.mxu0 %v2947
        %v4371 = vpop.f32.mrf.mxu0
        %v4372 = vadd.f32 %v4283, %v4371
        %v4373 = vpop.f32.mrf.mxu0
        %v4374 = vadd.f32 %v4285, %v4373
        %4375 = vmatmul.bf16.gmra.mxu0 %v2948
        %v4376 = vpop.f32.mrf.mxu0
        %v4377 = vadd.f32 %v4288, %v4376
        %v4378 = vpop.f32.mrf.mxu0
        %v4379 = vadd.f32 %v4290, %v4378
        %4380 = vdwg.mxu0
        %4381 = vmatpush.bf16.msra.mxu0 %v3920
        %4382 = vmatpush.bf16.msra.mxu0 %v3919
        %4383 = vmatpush.bf16.msra.mxu0 %v3918
        %4384 = vmatpush.bf16.msra.mxu0 %v3917
        %4385 = vmatpush.bf16.msra.mxu0 %v3916
        %4386 = vmatpush.bf16.msra.mxu0 %v3915
        %4387 = vmatpush.bf16.msra.mxu0 %v3914
        %4388 = vmatpush.bf16.msra.mxu0 %v3913
        %4389 = vmatmul.bf16.gmra.mxu0 %v3029
        %v4390 = vpop.f32.mrf.mxu0
        %v4391 = vadd.f32 %v4302, %v4390
        %v4392 = vpop.f32.mrf.mxu0
        %v4393 = vadd.f32 %v4304, %v4392
        %4394 = vmatmul.bf16.gmra.mxu0 %v3030
        %v4395 = vpop.f32.mrf.mxu0
        %v4396 = vadd.f32 %v4307, %v4395
        %v4397 = vpop.f32.mrf.mxu0
        %v4398 = vadd.f32 %v4309, %v4397
        %4399 = vmatmul.bf16.gmra.mxu0 %v3031
        %v4400 = vpop.f32.mrf.mxu0
        %v4401 = vadd.f32 %v4312, %v4400
        %v4402 = vpop.f32.mrf.mxu0
        %v4403 = vadd.f32 %v4314, %v4402
        %4404 = vmatmul.bf16.gmra.mxu0 %v3032
        %v4405 = vpop.f32.mrf.mxu0
        %v4406 = vadd.f32 %v4317, %v4405
        %v4407 = vpop.f32.mrf.mxu0
        %v4408 = vadd.f32 %v4319, %v4407
        %4409 = vmatmul.bf16.gmra.mxu0 %v3033
        %v4410 = vpop.f32.mrf.mxu0
        %v4411 = vadd.f32 %v4322, %v4410
        %v4412 = vpop.f32.mrf.mxu0
        %v4413 = vadd.f32 %v4324, %v4412
        %4414 = vmatmul.bf16.gmra.mxu0 %v3034
        %v4415 = vpop.f32.mrf.mxu0
        %v4416 = vadd.f32 %v4327, %v4415
        %v4417 = vpop.f32.mrf.mxu0
        %v4418 = vadd.f32 %v4329, %v4417
        %4419 = vmatmul.bf16.gmra.mxu0 %v3035
        %v4420 = vpop.f32.mrf.mxu0
        %v4421 = vadd.f32 %v4332, %v4420
        %v4422 = vpop.f32.mrf.mxu0
        %v4423 = vadd.f32 %v4334, %v4422
        %4424 = vmatmul.bf16.gmra.mxu0 %v3036
        %v4425 = vpop.f32.mrf.mxu0
        %v4426 = vadd.f32 %v4337, %v4425
        %v4427 = vpop.f32.mrf.mxu0
        %v4428 = vadd.f32 %v4339, %v4427
        %4429 = vmatmul.bf16.gmra.mxu0 %v3037
        %v4430 = vpop.f32.mrf.mxu0
        %v4431 = vadd.f32 %v4342, %v4430
        %v4432 = vpop.f32.mrf.mxu0
        %v4433 = vadd.f32 %v4344, %v4432
        %4434 = vmatmul.bf16.gmra.mxu0 %v3038
        %v4435 = vpop.f32.mrf.mxu0
        %v4436 = vadd.f32 %v4347, %v4435
        %v4437 = vpop.f32.mrf.mxu0
        %v4438 = vadd.f32 %v4349, %v4437
        %4439 = vmatmul.bf16.gmra.mxu0 %v3039
        %v4440 = vpop.f32.mrf.mxu0
        %v4441 = vadd.f32 %v4352, %v4440
        %v4442 = vpop.f32.mrf.mxu0
        %v4443 = vadd.f32 %v4354, %v4442
        %4444 = vmatmul.bf16.gmra.mxu0 %v3040
        %v4445 = vpop.f32.mrf.mxu0
        %v4446 = vadd.f32 %v4357, %v4445
        %v4447 = vpop.f32.mrf.mxu0
        %v4448 = vadd.f32 %v4359, %v4447
        %4449 = vmatmul.bf16.gmra.mxu0 %v3041
        %v4450 = vpop.f32.mrf.mxu0
        %v4451 = vadd.f32 %v4362, %v4450
        %v4452 = vpop.f32.mrf.mxu0
        %v4453 = vadd.f32 %v4364, %v4452
        %4454 = vmatmul.bf16.gmra.mxu0 %v3042
        %v4455 = vpop.f32.mrf.mxu0
        %v4456 = vadd.f32 %v4367, %v4455
        %v4457 = vpop.f32.mrf.mxu0
        %v4458 = vadd.f32 %v4369, %v4457
        %4459 = vmatmul.bf16.gmra.mxu0 %v3043
        %v4460 = vpop.f32.mrf.mxu0
        %v4461 = vadd.f32 %v4372, %v4460
        %v4462 = vpop.f32.mrf.mxu0
        %v4463 = vadd.f32 %v4374, %v4462
        %4464 = vmatmul.bf16.gmra.mxu0 %v3044
        %v4465 = vpop.f32.mrf.mxu0
        %v4466 = vadd.f32 %v4377, %v4465
        %v4467 = vpop.f32.mrf.mxu0
        %v4468 = vadd.f32 %v4379, %v4467
        %4469 = vdwg.mxu0
        %4470 = vmatpush.bf16.msra.mxu0 %v3928
        %4471 = vmatpush.bf16.msra.mxu0 %v3927
        %4472 = vmatpush.bf16.msra.mxu0 %v3926
        %4473 = vmatpush.bf16.msra.mxu0 %v3925
        %4474 = vmatpush.bf16.msra.mxu0 %v3924
        %4475 = vmatpush.bf16.msra.mxu0 %v3923
        %4476 = vmatpush.bf16.msra.mxu0 %v3922
        %4477 = vmatpush.bf16.msra.mxu0 %v3921
        %4478 = vmatmul.bf16.gmra.mxu0 %v3125
        %v4479 = vpop.f32.mrf.mxu0
        %v4480 = vadd.f32 %v4391, %v4479
        %v4481 = vpop.f32.mrf.mxu0
        %v4482 = vadd.f32 %v4393, %v4481
        %4483 = vmatmul.bf16.gmra.mxu0 %v3126
        %v4484 = vpop.f32.mrf.mxu0
        %v4485 = vadd.f32 %v4396, %v4484
        %v4486 = vpop.f32.mrf.mxu0
        %v4487 = vadd.f32 %v4398, %v4486
        %4488 = vmatmul.bf16.gmra.mxu0 %v3127
        %v4489 = vpop.f32.mrf.mxu0
        %v4490 = vadd.f32 %v4401, %v4489
        %v4491 = vpop.f32.mrf.mxu0
        %v4492 = vadd.f32 %v4403, %v4491
        %4493 = vmatmul.bf16.gmra.mxu0 %v3128
        %v4494 = vpop.f32.mrf.mxu0
        %v4495 = vadd.f32 %v4406, %v4494
        %v4496 = vpop.f32.mrf.mxu0
        %v4497 = vadd.f32 %v4408, %v4496
        %4498 = vmatmul.bf16.gmra.mxu0 %v3129
        %v4499 = vpop.f32.mrf.mxu0
        %v4500 = vadd.f32 %v4411, %v4499
        %v4501 = vpop.f32.mrf.mxu0
        %v4502 = vadd.f32 %v4413, %v4501
        %4503 = vmatmul.bf16.gmra.mxu0 %v3130
        %v4504 = vpop.f32.mrf.mxu0
        %v4505 = vadd.f32 %v4416, %v4504
        %v4506 = vpop.f32.mrf.mxu0
        %v4507 = vadd.f32 %v4418, %v4506
        %4508 = vmatmul.bf16.gmra.mxu0 %v3131
        %v4509 = vpop.f32.mrf.mxu0
        %v4510 = vadd.f32 %v4421, %v4509
        %v4511 = vpop.f32.mrf.mxu0
        %v4512 = vadd.f32 %v4423, %v4511
        %4513 = vmatmul.bf16.gmra.mxu0 %v3132
        %v4514 = vpop.f32.mrf.mxu0
        %v4515 = vadd.f32 %v4426, %v4514
        %v4516 = vpop.f32.mrf.mxu0
        %v4517 = vadd.f32 %v4428, %v4516
        %4518 = vmatmul.bf16.gmra.mxu0 %v3133
        %v4519 = vpop.f32.mrf.mxu0
        %v4520 = vadd.f32 %v4431, %v4519
        %v4521 = vpop.f32.mrf.mxu0
        %v4522 = vadd.f32 %v4433, %v4521
        %4523 = vmatmul.bf16.gmra.mxu0 %v3134
        %v4524 = vpop.f32.mrf.mxu0
        %v4525 = vadd.f32 %v4436, %v4524
        %v4526 = vpop.f32.mrf.mxu0
        %v4527 = vadd.f32 %v4438, %v4526
        %4528 = vmatmul.bf16.gmra.mxu0 %v3135
        %v4529 = vpop.f32.mrf.mxu0
        %v4530 = vadd.f32 %v4441, %v4529
        %v4531 = vpop.f32.mrf.mxu0
        %v4532 = vadd.f32 %v4443, %v4531
        %4533 = vmatmul.bf16.gmra.mxu0 %v3136
        %v4534 = vpop.f32.mrf.mxu0
        %v4535 = vadd.f32 %v4446, %v4534
        %v4536 = vpop.f32.mrf.mxu0
        %v4537 = vadd.f32 %v4448, %v4536
        %4538 = vmatmul.bf16.gmra.mxu0 %v3137
        %v4539 = vpop.f32.mrf.mxu0
        %v4540 = vadd.f32 %v4451, %v4539
        %v4541 = vpop.f32.mrf.mxu0
        %v4542 = vadd.f32 %v4453, %v4541
        %4543 = vmatmul.bf16.gmra.mxu0 %v3138
        %v4544 = vpop.f32.mrf.mxu0
        %v4545 = vadd.f32 %v4456, %v4544
        %v4546 = vpop.f32.mrf.mxu0
        %v4547 = vadd.f32 %v4458, %v4546
        %4548 = vmatmul.bf16.gmra.mxu0 %v3139
        %v4549 = vpop.f32.mrf.mxu0
        %v4550 = vadd.f32 %v4461, %v4549
        %v4551 = vpop.f32.mrf.mxu0
        %v4552 = vadd.f32 %v4463, %v4551
        %4553 = vmatmul.bf16.gmra.mxu0 %v3140
        %v4554 = vpop.f32.mrf.mxu0
        %v4555 = vadd.f32 %v4466, %v4554
        %v4556 = vpop.f32.mrf.mxu0
        %v4557 = vadd.f32 %v4468, %v4556
        %4558 = vdwg.mxu0
        %4559 = vmatpush.bf16.msra.mxu0 %v3936
        %4560 = vmatpush.bf16.msra.mxu0 %v3935
        %4561 = vmatpush.bf16.msra.mxu0 %v3934
        %4562 = vmatpush.bf16.msra.mxu0 %v3933
        %4563 = vmatpush.bf16.msra.mxu0 %v3932
        %4564 = vmatpush.bf16.msra.mxu0 %v3931
        %4565 = vmatpush.bf16.msra.mxu0 %v3930
        %4566 = vmatpush.bf16.msra.mxu0 %v3929
        %4567 = vmatmul.bf16.gmra.mxu0 %v3221
        %v4568 = vpop.f32.mrf.mxu0
        %v4569 = vadd.f32 %v4480, %v4568
        %v4570 = vpop.f32.mrf.mxu0
        %v4571 = vadd.f32 %v4482, %v4570
        %4572 = vmatmul.bf16.gmra.mxu0 %v3222
        %v4573 = vpop.f32.mrf.mxu0
        %v4574 = vadd.f32 %v4485, %v4573
        %v4575 = vpop.f32.mrf.mxu0
        %v4576 = vadd.f32 %v4487, %v4575
        %4577 = vmatmul.bf16.gmra.mxu0 %v3223
        %v4578 = vpop.f32.mrf.mxu0
        %v4579 = vadd.f32 %v4490, %v4578
        %v4580 = vpop.f32.mrf.mxu0
        %v4581 = vadd.f32 %v4492, %v4580
        %4582 = vmatmul.bf16.gmra.mxu0 %v3224
        %v4583 = vpop.f32.mrf.mxu0
        %v4584 = vadd.f32 %v4495, %v4583
        %v4585 = vpop.f32.mrf.mxu0
        %v4586 = vadd.f32 %v4497, %v4585
        %4587 = vmatmul.bf16.gmra.mxu0 %v3225
        %v4588 = vpop.f32.mrf.mxu0
        %v4589 = vadd.f32 %v4500, %v4588
        %v4590 = vpop.f32.mrf.mxu0
        %v4591 = vadd.f32 %v4502, %v4590
        %4592 = vmatmul.bf16.gmra.mxu0 %v3226
        %v4593 = vpop.f32.mrf.mxu0
        %v4594 = vadd.f32 %v4505, %v4593
        %v4595 = vpop.f32.mrf.mxu0
        %v4596 = vadd.f32 %v4507, %v4595
        %4597 = vmatmul.bf16.gmra.mxu0 %v3227
        %v4598 = vpop.f32.mrf.mxu0
        %v4599 = vadd.f32 %v4510, %v4598
        %v4600 = vpop.f32.mrf.mxu0
        %v4601 = vadd.f32 %v4512, %v4600
        %4602 = vmatmul.bf16.gmra.mxu0 %v3228
        %v4603 = vpop.f32.mrf.mxu0
        %v4604 = vadd.f32 %v4515, %v4603
        %v4605 = vpop.f32.mrf.mxu0
        %v4606 = vadd.f32 %v4517, %v4605
        %4607 = vmatmul.bf16.gmra.mxu0 %v3229
        %v4608 = vpop.f32.mrf.mxu0
        %v4609 = vadd.f32 %v4520, %v4608
        %v4610 = vpop.f32.mrf.mxu0
        %v4611 = vadd.f32 %v4522, %v4610
        %4612 = vmatmul.bf16.gmra.mxu0 %v3230
        %v4613 = vpop.f32.mrf.mxu0
        %v4614 = vadd.f32 %v4525, %v4613
        %v4615 = vpop.f32.mrf.mxu0
        %v4616 = vadd.f32 %v4527, %v4615
        %4617 = vmatmul.bf16.gmra.mxu0 %v3231
        %v4618 = vpop.f32.mrf.mxu0
        %v4619 = vadd.f32 %v4530, %v4618
        %v4620 = vpop.f32.mrf.mxu0
        %v4621 = vadd.f32 %v4532, %v4620
        %4622 = vmatmul.bf16.gmra.mxu0 %v3232
        %v4623 = vpop.f32.mrf.mxu0
        %v4624 = vadd.f32 %v4535, %v4623
        %v4625 = vpop.f32.mrf.mxu0
        %v4626 = vadd.f32 %v4537, %v4625
        %4627 = vmatmul.bf16.gmra.mxu0 %v3233
        %v4628 = vpop.f32.mrf.mxu0
        %v4629 = vadd.f32 %v4540, %v4628
        %v4630 = vpop.f32.mrf.mxu0
        %v4631 = vadd.f32 %v4542, %v4630
        %4632 = vmatmul.bf16.gmra.mxu0 %v3234
        %v4633 = vpop.f32.mrf.mxu0
        %v4634 = vadd.f32 %v4545, %v4633
        %v4635 = vpop.f32.mrf.mxu0
        %v4636 = vadd.f32 %v4547, %v4635
        %4637 = vmatmul.bf16.gmra.mxu0 %v3235
        %v4638 = vpop.f32.mrf.mxu0
        %v4639 = vadd.f32 %v4550, %v4638
        %v4640 = vpop.f32.mrf.mxu0
        %v4641 = vadd.f32 %v4552, %v4640
        %4642 = vmatmul.bf16.gmra.mxu0 %v3236
        %v4643 = vpop.f32.mrf.mxu0
        %v4644 = vadd.f32 %v4555, %v4643
        %v4645 = vpop.f32.mrf.mxu0
        %v4646 = vadd.f32 %v4557, %v4645
        %4647 = vdwg.mxu0
        %4648 = vmatpush.bf16.msra.mxu0 %v3944
        %4649 = vmatpush.bf16.msra.mxu0 %v3943
        %4650 = vmatpush.bf16.msra.mxu0 %v3942
        %4651 = vmatpush.bf16.msra.mxu0 %v3941
        %4652 = vmatpush.bf16.msra.mxu0 %v3940
        %4653 = vmatpush.bf16.msra.mxu0 %v3939
        %4654 = vmatpush.bf16.msra.mxu0 %v3938
        %4655 = vmatpush.bf16.msra.mxu0 %v3937
        %4656 = vmatmul.bf16.gmra.mxu0 %v3317
        %v4657 = vpop.f32.mrf.mxu0
        %v4658 = vadd.f32 %v4569, %v4657
        %v4659 = vpop.f32.mrf.mxu0
        %v4660 = vadd.f32 %v4571, %v4659
        %4661 = vmatmul.bf16.gmra.mxu0 %v3318
        %v4662 = vpop.f32.mrf.mxu0
        %v4663 = vadd.f32 %v4574, %v4662
        %v4664 = vpop.f32.mrf.mxu0
        %v4665 = vadd.f32 %v4576, %v4664
        %4666 = vmatmul.bf16.gmra.mxu0 %v3319
        %v4667 = vpop.f32.mrf.mxu0
        %v4668 = vadd.f32 %v4579, %v4667
        %v4669 = vpop.f32.mrf.mxu0
        %v4670 = vadd.f32 %v4581, %v4669
        %4671 = vmatmul.bf16.gmra.mxu0 %v3320
        %v4672 = vpop.f32.mrf.mxu0
        %v4673 = vadd.f32 %v4584, %v4672
        %v4674 = vpop.f32.mrf.mxu0
        %v4675 = vadd.f32 %v4586, %v4674
        %4676 = vmatmul.bf16.gmra.mxu0 %v3321
        %v4677 = vpop.f32.mrf.mxu0
        %v4678 = vadd.f32 %v4589, %v4677
        %v4679 = vpop.f32.mrf.mxu0
        %v4680 = vadd.f32 %v4591, %v4679
        %4681 = vmatmul.bf16.gmra.mxu0 %v3322
        %v4682 = vpop.f32.mrf.mxu0
        %v4683 = vadd.f32 %v4594, %v4682
        %v4684 = vpop.f32.mrf.mxu0
        %v4685 = vadd.f32 %v4596, %v4684
        %4686 = vmatmul.bf16.gmra.mxu0 %v3323
        %v4687 = vpop.f32.mrf.mxu0
        %v4688 = vadd.f32 %v4599, %v4687
        %v4689 = vpop.f32.mrf.mxu0
        %v4690 = vadd.f32 %v4601, %v4689
        %4691 = vmatmul.bf16.gmra.mxu0 %v3324
        %v4692 = vpop.f32.mrf.mxu0
        %v4693 = vadd.f32 %v4604, %v4692
        %v4694 = vpop.f32.mrf.mxu0
        %v4695 = vadd.f32 %v4606, %v4694
        %4696 = vmatmul.bf16.gmra.mxu0 %v3325
        %v4697 = vpop.f32.mrf.mxu0
        %v4698 = vadd.f32 %v4609, %v4697
        %v4699 = vpop.f32.mrf.mxu0
        %v4700 = vadd.f32 %v4611, %v4699
        %4701 = vmatmul.bf16.gmra.mxu0 %v3326
        %v4702 = vpop.f32.mrf.mxu0
        %v4703 = vadd.f32 %v4614, %v4702
        %v4704 = vpop.f32.mrf.mxu0
        %v4705 = vadd.f32 %v4616, %v4704
        %4706 = vmatmul.bf16.gmra.mxu0 %v3327
        %v4707 = vpop.f32.mrf.mxu0
        %v4708 = vadd.f32 %v4619, %v4707
        %v4709 = vpop.f32.mrf.mxu0
        %v4710 = vadd.f32 %v4621, %v4709
        %4711 = vmatmul.bf16.gmra.mxu0 %v3328
        %v4712 = vpop.f32.mrf.mxu0
        %v4713 = vadd.f32 %v4624, %v4712
        %v4714 = vpop.f32.mrf.mxu0
        %v4715 = vadd.f32 %v4626, %v4714
        %4716 = vmatmul.bf16.gmra.mxu0 %v3329
        %v4717 = vpop.f32.mrf.mxu0
        %v4718 = vadd.f32 %v4629, %v4717
        %v4719 = vpop.f32.mrf.mxu0
        %v4720 = vadd.f32 %v4631, %v4719
        %4721 = vmatmul.bf16.gmra.mxu0 %v3330
        %v4722 = vpop.f32.mrf.mxu0
        %v4723 = vadd.f32 %v4634, %v4722
        %v4724 = vpop.f32.mrf.mxu0
        %v4725 = vadd.f32 %v4636, %v4724
        %4726 = vmatmul.bf16.gmra.mxu0 %v3331
        %v4727 = vpop.f32.mrf.mxu0
        %v4728 = vadd.f32 %v4639, %v4727
        %v4729 = vpop.f32.mrf.mxu0
        %v4730 = vadd.f32 %v4641, %v4729
        %4731 = vmatmul.bf16.gmra.mxu0 %v3332
        %v4732 = vpop.f32.mrf.mxu0
        %v4733 = vadd.f32 %v4644, %v4732
        %v4734 = vpop.f32.mrf.mxu0
        %v4735 = vadd.f32 %v4646, %v4734
        %4736 = vdwg.mxu0
        %4737 = vmatpush.bf16.msra.mxu0 %v3952
        %4738 = vmatpush.bf16.msra.mxu0 %v3951
        %4739 = vmatpush.bf16.msra.mxu0 %v3950
        %4740 = vmatpush.bf16.msra.mxu0 %v3949
        %4741 = vmatpush.bf16.msra.mxu0 %v3948
        %4742 = vmatpush.bf16.msra.mxu0 %v3947
        %4743 = vmatpush.bf16.msra.mxu0 %v3946
        %4744 = vmatpush.bf16.msra.mxu0 %v3945
        %4745 = vmatmul.bf16.gmra.mxu0 %v3413
        %v4746 = vpop.f32.mrf.mxu0
        %v4747 = vadd.f32 %v4658, %v4746
        %v4748 = vpop.f32.mrf.mxu0
        %v4749 = vadd.f32 %v4660, %v4748
        %4750 = vmatmul.bf16.gmra.mxu0 %v3414
        %v4751 = vpop.f32.mrf.mxu0
        %v4752 = vadd.f32 %v4663, %v4751
        %v4753 = vpop.f32.mrf.mxu0
        %v4754 = vadd.f32 %v4665, %v4753
        %4755 = vmatmul.bf16.gmra.mxu0 %v3415
        %v4756 = vpop.f32.mrf.mxu0
        %v4757 = vadd.f32 %v4668, %v4756
        %v4758 = vpop.f32.mrf.mxu0
        %v4759 = vadd.f32 %v4670, %v4758
        %4760 = vmatmul.bf16.gmra.mxu0 %v3416
        %v4761 = vpop.f32.mrf.mxu0
        %v4762 = vadd.f32 %v4673, %v4761
        %v4763 = vpop.f32.mrf.mxu0
        %v4764 = vadd.f32 %v4675, %v4763
        %4765 = vmatmul.bf16.gmra.mxu0 %v3417
        %v4766 = vpop.f32.mrf.mxu0
        %v4767 = vadd.f32 %v4678, %v4766
        %v4768 = vpop.f32.mrf.mxu0
        %v4769 = vadd.f32 %v4680, %v4768
        %4770 = vmatmul.bf16.gmra.mxu0 %v3418
        %v4771 = vpop.f32.mrf.mxu0
        %v4772 = vadd.f32 %v4683, %v4771
        %v4773 = vpop.f32.mrf.mxu0
        %v4774 = vadd.f32 %v4685, %v4773
        %4775 = vmatmul.bf16.gmra.mxu0 %v3419
        %v4776 = vpop.f32.mrf.mxu0
        %v4777 = vadd.f32 %v4688, %v4776
        %v4778 = vpop.f32.mrf.mxu0
        %v4779 = vadd.f32 %v4690, %v4778
        %4780 = vmatmul.bf16.gmra.mxu0 %v3420
        %v4781 = vpop.f32.mrf.mxu0
        %v4782 = vadd.f32 %v4693, %v4781
        %v4783 = vpop.f32.mrf.mxu0
        %v4784 = vadd.f32 %v4695, %v4783
        %4785 = vmatmul.bf16.gmra.mxu0 %v3421
        %v4786 = vpop.f32.mrf.mxu0
        %v4787 = vadd.f32 %v4698, %v4786
        %v4788 = vpop.f32.mrf.mxu0
        %v4789 = vadd.f32 %v4700, %v4788
        %4790 = vmatmul.bf16.gmra.mxu0 %v3422
        %v4791 = vpop.f32.mrf.mxu0
        %v4792 = vadd.f32 %v4703, %v4791
        %v4793 = vpop.f32.mrf.mxu0
        %v4794 = vadd.f32 %v4705, %v4793
        %4795 = vmatmul.bf16.gmra.mxu0 %v3423
        %v4796 = vpop.f32.mrf.mxu0
        %v4797 = vadd.f32 %v4708, %v4796
        %v4798 = vpop.f32.mrf.mxu0
        %v4799 = vadd.f32 %v4710, %v4798
        %4800 = vmatmul.bf16.gmra.mxu0 %v3424
        %v4801 = vpop.f32.mrf.mxu0
        %v4802 = vadd.f32 %v4713, %v4801
        %v4803 = vpop.f32.mrf.mxu0
        %v4804 = vadd.f32 %v4715, %v4803
        %4805 = vmatmul.bf16.gmra.mxu0 %v3425
        %v4806 = vpop.f32.mrf.mxu0
        %v4807 = vadd.f32 %v4718, %v4806
        %v4808 = vpop.f32.mrf.mxu0
        %v4809 = vadd.f32 %v4720, %v4808
        %4810 = vmatmul.bf16.gmra.mxu0 %v3426
        %v4811 = vpop.f32.mrf.mxu0
        %v4812 = vadd.f32 %v4723, %v4811
        %v4813 = vpop.f32.mrf.mxu0
        %v4814 = vadd.f32 %v4725, %v4813
        %4815 = vmatmul.bf16.gmra.mxu0 %v3427
        %v4816 = vpop.f32.mrf.mxu0
        %v4817 = vadd.f32 %v4728, %v4816
        %v4818 = vpop.f32.mrf.mxu0
        %v4819 = vadd.f32 %v4730, %v4818
        %4820 = vmatmul.bf16.gmra.mxu0 %v3428
        %v4821 = vpop.f32.mrf.mxu0
        %v4822 = vadd.f32 %v4733, %v4821
        %v4823 = vpop.f32.mrf.mxu0
        %v4824 = vadd.f32 %v4735, %v4823
        %4825 = vdwg.mxu0
        %v4826 = vadd.f32 %v4747, %v4749
        %v4827 = vadd.f32 %v4826, %v4752
        %v4828 = vadd.f32 %v4827, %v4754
        %v4829 = vadd.f32 %v4828, %v4757
        %v4830 = vadd.f32 %v4829, %v4759
        %v4831 = vadd.f32 %v4830, %v4762
        %v4832 = vadd.f32 %v4831, %v4764
        %v4833 = vadd.f32 %v4832, %v4767
        %v4834 = vadd.f32 %v4833, %v4769
        %v4835 = vadd.f32 %v4834, %v4772
        %v4836 = vadd.f32 %v4835, %v4774
        %v4837 = vadd.f32 %v4836, %v4777
        %v4838 = vadd.f32 %v4837, %v4779
        %v4839 = vadd.f32 %v4838, %v4782
        %v4840 = vadd.f32 %v4839, %v4784
        %v4841 = vadd.f32 %v4840, %v4787
        %v4842 = vadd.f32 %v4841, %v4789
        %v4843 = vadd.f32 %v4842, %v4792
        %v4844 = vadd.f32 %v4843, %v4794
        %v4845 = vadd.f32 %v4844, %v4797
        %v4846 = vadd.f32 %v4845, %v4799
        %v4847 = vadd.f32 %v4846, %v4802
        %v4848 = vadd.f32 %v4847, %v4804
        %v4849 = vadd.f32 %v4848, %v4807
        %v4850 = vadd.f32 %v4849, %v4809
        %v4851 = vadd.f32 %v4850, %v4812
        %v4852 = vadd.f32 %v4851, %v4814
        %v4853 = vadd.f32 %v4852, %v4817
        %v4854 = vadd.f32 %v4853, %v4819
        %v4855 = vadd.f32 %v4854, %v4822
        %v4856 = vadd.f32 %v4855, %v4824
        %v4857 = vrot.slane %v4856, 4
        %v4858 = vadd.f32 %v4856, %v4857
        %v4859 = vrot.slane %v4858, 2
        %v4860 = vadd.f32 %v4858, %v4859
        %v4861 = vrot.slane %v4860, 1
        %v4862 = vadd.f32 %v4860, %v4861
        %v4863 = vmul.f32 %v4747, %v4747
        %v4864 = vmul.f32 %v4749, %v4749
        %v4865 = vmul.f32 %v4752, %v4752
        %v4866 = vmul.f32 %v4754, %v4754
        %v4867 = vmul.f32 %v4757, %v4757
        %v4868 = vmul.f32 %v4759, %v4759
        %v4869 = vmul.f32 %v4762, %v4762
        %v4870 = vmul.f32 %v4764, %v4764
        %v4871 = vmul.f32 %v4767, %v4767
        %v4872 = vmul.f32 %v4769, %v4769
        %v4873 = vmul.f32 %v4772, %v4772
        %v4874 = vmul.f32 %v4774, %v4774
        %v4875 = vmul.f32 %v4777, %v4777
        %v4876 = vmul.f32 %v4779, %v4779
        %v4877 = vmul.f32 %v4782, %v4782
        %v4878 = vmul.f32 %v4784, %v4784
        %v4879 = vmul.f32 %v4787, %v4787
        %v4880 = vmul.f32 %v4789, %v4789
        %v4881 = vmul.f32 %v4792, %v4792
        %v4882 = vmul.f32 %v4794, %v4794
        %v4883 = vmul.f32 %v4797, %v4797
        %v4884 = vmul.f32 %v4799, %v4799
        %v4885 = vmul.f32 %v4802, %v4802
        %v4886 = vmul.f32 %v4804, %v4804
        %v4887 = vmul.f32 %v4807, %v4807
        %v4888 = vmul.f32 %v4809, %v4809
        %v4889 = vmul.f32 %v4812, %v4812
        %v4890 = vmul.f32 %v4814, %v4814
        %v4891 = vmul.f32 %v4817, %v4817
        %v4892 = vmul.f32 %v4819, %v4819
        %v4893 = vmul.f32 %v4822, %v4822
        %v4894 = vmul.f32 %v4824, %v4824
        %v4895 = vadd.f32 %v4863, %v4864
        %v4896 = vadd.f32 %v4895, %v4865
        %v4897 = vadd.f32 %v4896, %v4866
        %v4898 = vadd.f32 %v4897, %v4867
        %v4899 = vadd.f32 %v4898, %v4868
        %v4900 = vadd.f32 %v4899, %v4869
        %v4901 = vadd.f32 %v4900, %v4870
        %v4902 = vadd.f32 %v4901, %v4871
        %v4903 = vadd.f32 %v4902, %v4872
        %v4904 = vadd.f32 %v4903, %v4873
        %v4905 = vadd.f32 %v4904, %v4874
        %v4906 = vadd.f32 %v4905, %v4875
        %v4907 = vadd.f32 %v4906, %v4876
        %v4908 = vadd.f32 %v4907, %v4877
        %v4909 = vadd.f32 %v4908, %v4878
        %v4910 = vadd.f32 %v4909, %v4879
        %v4911 = vadd.f32 %v4910, %v4880
        %v4912 = vadd.f32 %v4911, %v4881
        %v4913 = vadd.f32 %v4912, %v4882
        %v4914 = vadd.f32 %v4913, %v4883
        %v4915 = vadd.f32 %v4914, %v4884
        %v4916 = vadd.f32 %v4915, %v4885
        %v4917 = vadd.f32 %v4916, %v4886
        %v4918 = vadd.f32 %v4917, %v4887
        %v4919 = vadd.f32 %v4918, %v4888
        %v4920 = vadd.f32 %v4919, %v4889
        %v4921 = vadd.f32 %v4920, %v4890
        %v4922 = vadd.f32 %v4921, %v4891
        %v4923 = vadd.f32 %v4922, %v4892
        %v4924 = vadd.f32 %v4923, %v4893
        %v4925 = vadd.f32 %v4924, %v4894
        %v4926 = vrot.slane %v4925, 4
        %v4927 = vadd.f32 %v4925, %v4926
        %v4928 = vrot.slane %v4927, 2
        %v4929 = vadd.f32 %v4927, %v4928
        %v4930 = vrot.slane %v4929, 1
        %v4931 = vadd.f32 %v4929, %v4930
        %v4932 = vmul.f32 %v4862, 0.00390625
        %v4933 = vmul.f32 %v4931, 0.00390625
        %v4934 = vmul.f32 %v4932, %v4932
        %v4935 = vsub.f32 %v4933, %v4934
        %v4936 = vmax.f32 %v4935, 0.0
        %v4937 = vsub.f32 %v4747, %v4932
        %v4938 = vsub.f32 %v4749, %v4932
        %v4939 = vsub.f32 %v4752, %v4932
        %v4940 = vsub.f32 %v4754, %v4932
        %v4941 = vsub.f32 %v4757, %v4932
        %v4942 = vsub.f32 %v4759, %v4932
        %v4943 = vsub.f32 %v4762, %v4932
        %v4944 = vsub.f32 %v4764, %v4932
        %v4945 = vsub.f32 %v4767, %v4932
        %v4946 = vsub.f32 %v4769, %v4932
        %v4947 = vsub.f32 %v4772, %v4932
        %v4948 = vsub.f32 %v4774, %v4932
        %v4949 = vsub.f32 %v4777, %v4932
        %v4950 = vsub.f32 %v4779, %v4932
        %v4951 = vsub.f32 %v4782, %v4932
        %v4952 = vsub.f32 %v4784, %v4932
        %v4953 = vsub.f32 %v4787, %v4932
        %v4954 = vsub.f32 %v4789, %v4932
        %v4955 = vsub.f32 %v4792, %v4932
        %v4956 = vsub.f32 %v4794, %v4932
        %v4957 = vsub.f32 %v4797, %v4932
        %v4958 = vsub.f32 %v4799, %v4932
        %v4959 = vsub.f32 %v4802, %v4932
        %v4960 = vsub.f32 %v4804, %v4932
        %v4961 = vsub.f32 %v4807, %v4932
        %v4962 = vsub.f32 %v4809, %v4932
        %v4963 = vsub.f32 %v4812, %v4932
        %v4964 = vsub.f32 %v4814, %v4932
        %v4965 = vsub.f32 %v4817, %v4932
        %v4966 = vsub.f32 %v4819, %v4932
        %v4967 = vsub.f32 %v4822, %v4932
        %v4968 = vsub.f32 %v4824, %v4932
        %v4969 = vadd.f32 %v4936, 1e-05
        %v4970 = vrsqrt.pop %v4969
        %v4971 = vmul.f32 %v4970, %v4969
        %v4972 = vmul.f32 %v4971, %v4970
        %v4973 = vmul.f32 0.5, %v4972
        %v4974 = vsub.f32 1.5, %v4973
        %v4975 = vmul.f32 %v4970, %v4974
        %vm4976 = vweird.f32 %v4969
        %vm4977 = vweird.f32 %v4970
        %vm4978 = vmor %vm4976, %vm4977
        %v4979 = vsel %vm4978, %v4970, %v4975
        %v4980 = vmul.f32 %v4937, %v4979
        %v4981 = vmul.f32 %v4938, %v4979
        %v4982 = vmul.f32 %v4939, %v4979
        %v4983 = vmul.f32 %v4940, %v4979
        %v4984 = vmul.f32 %v4941, %v4979
        %v4985 = vmul.f32 %v4942, %v4979
        %v4986 = vmul.f32 %v4943, %v4979
        %v4987 = vmul.f32 %v4944, %v4979
        %v4988 = vmul.f32 %v4945, %v4979
        %v4989 = vmul.f32 %v4946, %v4979
        %v4990 = vmul.f32 %v4947, %v4979
        %v4991 = vmul.f32 %v4948, %v4979
        %v4992 = vmul.f32 %v4949, %v4979
        %v4993 = vmul.f32 %v4950, %v4979
        %v4994 = vmul.f32 %v4951, %v4979
        %v4995 = vmul.f32 %v4952, %v4979
        %v4996 = vmul.f32 %v4953, %v4979
        %v4997 = vmul.f32 %v4954, %v4979
        %v4998 = vmul.f32 %v4955, %v4979
        %v4999 = vmul.f32 %v4956, %v4979
        %v5000 = vmul.f32 %v4957, %v4979
        %v5001 = vmul.f32 %v4958, %v4979
        %v5002 = vmul.f32 %v4959, %v4979
        %v5003 = vmul.f32 %v4960, %v4979
        %v5004 = vmul.f32 %v4961, %v4979
        %v5005 = vmul.f32 %v4962, %v4979
        %v5006 = vmul.f32 %v4963, %v4979
        %v5007 = vmul.f32 %v4964, %v4979
        %v5008 = vmul.f32 %v4965, %v4979
        %v5009 = vmul.f32 %v4966, %v4979
        %v5010 = vmul.f32 %v4967, %v4979
        %v5011 = vmul.f32 %v4968, %v4979
        %vm5012 = vcmp.ge.f32.partialorder %v4980, 0.0
        %vm5013 = vcmp.ge.f32.partialorder %v4981, 0.0
        %vm5014 = vcmp.ge.f32.partialorder %v4982, 0.0
        %vm5015 = vcmp.ge.f32.partialorder %v4983, 0.0
        %vm5016 = vcmp.ge.f32.partialorder %v4984, 0.0
        %vm5017 = vcmp.ge.f32.partialorder %v4985, 0.0
        %vm5018 = vcmp.ge.f32.partialorder %v4986, 0.0
        %vm5019 = vcmp.ge.f32.partialorder %v4987, 0.0
        %vm5020 = vcmp.ge.f32.partialorder %v4988, 0.0
        %vm5021 = vcmp.ge.f32.partialorder %v4989, 0.0
        %vm5022 = vcmp.ge.f32.partialorder %v4990, 0.0
        %vm5023 = vcmp.ge.f32.partialorder %v4991, 0.0
        %vm5024 = vcmp.ge.f32.partialorder %v4992, 0.0
        %vm5025 = vcmp.ge.f32.partialorder %v4993, 0.0
        %vm5026 = vcmp.ge.f32.partialorder %v4994, 0.0
        %vm5027 = vcmp.ge.f32.partialorder %v4995, 0.0
        %vm5028 = vcmp.ge.f32.partialorder %v4996, 0.0
        %vm5029 = vcmp.ge.f32.partialorder %v4997, 0.0
        %vm5030 = vcmp.ge.f32.partialorder %v4998, 0.0
        %vm5031 = vcmp.ge.f32.partialorder %v4999, 0.0
        %vm5032 = vcmp.ge.f32.partialorder %v5000, 0.0
        %vm5033 = vcmp.ge.f32.partialorder %v5001, 0.0
        %vm5034 = vcmp.ge.f32.partialorder %v5002, 0.0
        %vm5035 = vcmp.ge.f32.partialorder %v5003, 0.0
        %vm5036 = vcmp.ge.f32.partialorder %v5004, 0.0
        %vm5037 = vcmp.ge.f32.partialorder %v5005, 0.0
        %vm5038 = vcmp.ge.f32.partialorder %v5006, 0.0
        %vm5039 = vcmp.ge.f32.partialorder %v5007, 0.0
        %vm5040 = vcmp.ge.f32.partialorder %v5008, 0.0
        %vm5041 = vcmp.ge.f32.partialorder %v5009, 0.0
        %vm5042 = vcmp.ge.f32.partialorder %v5010, 0.0
        %vm5043 = vcmp.ge.f32.partialorder %v5011, 0.0
        %v5044 = vmul.f32 %v4980, 0.2
        %v5045 = vmul.f32 %v4981, 0.2
        %v5046 = vmul.f32 %v4982, 0.2
        %v5047 = vmul.f32 %v4983, 0.2
        %v5048 = vmul.f32 %v4984, 0.2
        %v5049 = vmul.f32 %v4985, 0.2
        %v5050 = vmul.f32 %v4986, 0.2
        %v5051 = vmul.f32 %v4987, 0.2
        %v5052 = vmul.f32 %v4988, 0.2
        %v5053 = vmul.f32 %v4989, 0.2
        %v5054 = vmul.f32 %v4990, 0.2
        %v5055 = vmul.f32 %v4991, 0.2
        %v5056 = vmul.f32 %v4992, 0.2
        %v5057 = vmul.f32 %v4993, 0.2
        %v5058 = vmul.f32 %v4994, 0.2
        %v5059 = vmul.f32 %v4995, 0.2
        %v5060 = vmul.f32 %v4996, 0.2
        %v5061 = vmul.f32 %v4997, 0.2
        %v5062 = vmul.f32 %v4998, 0.2
        %v5063 = vmul.f32 %v4999, 0.2
        %v5064 = vmul.f32 %v5000, 0.2
        %v5065 = vmul.f32 %v5001, 0.2
        %v5066 = vmul.f32 %v5002, 0.2
        %v5067 = vmul.f32 %v5003, 0.2
        %v5068 = vmul.f32 %v5004, 0.2
        %v5069 = vmul.f32 %v5005, 0.2
        %v5070 = vmul.f32 %v5006, 0.2
        %v5071 = vmul.f32 %v5007, 0.2
        %v5072 = vmul.f32 %v5008, 0.2
        %v5073 = vmul.f32 %v5009, 0.2
        %v5074 = vmul.f32 %v5010, 0.2
        %v5075 = vmul.f32 %v5011, 0.2
        %v5076 = vsel %vm5012, %v4980, %v5044
        %v5077 = vsel %vm5013, %v4981, %v5045
        %v5078 = vsel %vm5014, %v4982, %v5046
        %v5079 = vsel %vm5015, %v4983, %v5047
        %v5080 = vsel %vm5016, %v4984, %v5048
        %v5081 = vsel %vm5017, %v4985, %v5049
        %v5082 = vsel %vm5018, %v4986, %v5050
        %v5083 = vsel %vm5019, %v4987, %v5051
        %v5084 = vsel %vm5020, %v4988, %v5052
        %v5085 = vsel %vm5021, %v4989, %v5053
        %v5086 = vsel %vm5022, %v4990, %v5054
        %v5087 = vsel %vm5023, %v4991, %v5055
        %v5088 = vsel %vm5024, %v4992, %v5056
        %v5089 = vsel %vm5025, %v4993, %v5057
        %v5090 = vsel %vm5026, %v4994, %v5058
        %v5091 = vsel %vm5027, %v4995, %v5059
        %v5092 = vsel %vm5028, %v4996, %v5060
        %v5093 = vsel %vm5029, %v4997, %v5061
        %v5094 = vsel %vm5030, %v4998, %v5062
        %v5095 = vsel %vm5031, %v4999, %v5063
        %v5096 = vsel %vm5032, %v5000, %v5064
        %v5097 = vsel %vm5033, %v5001, %v5065
        %v5098 = vsel %vm5034, %v5002, %v5066
        %v5099 = vsel %vm5035, %v5003, %v5067
        %v5100 = vsel %vm5036, %v5004, %v5068
        %v5101 = vsel %vm5037, %v5005, %v5069
        %v5102 = vsel %vm5038, %v5006, %v5070
        %v5103 = vsel %vm5039, %v5007, %v5071
        %v5104 = vsel %vm5040, %v5008, %v5072
        %v5105 = vsel %vm5041, %v5009, %v5073
        %v5106 = vsel %vm5042, %v5010, %v5074
        %v5107 = vsel %vm5043, %v5011, %v5075
        %5108 = vst [vmem:[%s244] sm:$0xff] %v5076
        %5109 = vst [vmem:[%s244 + $0x8] sm:$0xff] %v5077
        %5110 = vst [vmem:[%s244 + $0x10] sm:$0xff] %v5078
        %5111 = vst [vmem:[%s244 + $0x18] sm:$0xff] %v5079
        %5112 = vst [vmem:[%s244 + $0x20] sm:$0xff] %v5080
        %5113 = vst [vmem:[%s244 + $0x28] sm:$0xff] %v5081
        %5114 = vst [vmem:[%s244 + $0x30] sm:$0xff] %v5082
        %5115 = vst [vmem:[%s244 + $0x38] sm:$0xff] %v5083
        %5116 = vst [vmem:[%s244 + $0x40] sm:$0xff] %v5084
        %5117 = vst [vmem:[%s244 + $0x48] sm:$0xff] %v5085
        %5118 = vst [vmem:[%s244 + $0x50] sm:$0xff] %v5086
        %5119 = vst [vmem:[%s244 + $0x58] sm:$0xff] %v5087
        %5120 = vst [vmem:[%s244 + $0x60] sm:$0xff] %v5088
        %5121 = vst [vmem:[%s244 + $0x68] sm:$0xff] %v5089
        %5122 = vst [vmem:[%s244 + $0x70] sm:$0xff] %v5090
        %5123 = vst [vmem:[%s244 + $0x78] sm:$0xff] %v5091
        %5124 = vst [vmem:[%s244 + $0x80] sm:$0xff] %v5092
        %5125 = vst [vmem:[%s244 + $0x88] sm:$0xff] %v5093
        %5126 = vst [vmem:[%s244 + $0x90] sm:$0xff] %v5094
        %5127 = vst [vmem:[%s244 + $0x98] sm:$0xff] %v5095
        %5128 = vst [vmem:[%s244 + $0xa0] sm:$0xff] %v5096
        %5129 = vst [vmem:[%s244 + $0xa8] sm:$0xff] %v5097
        %5130 = vst [vmem:[%s244 + $0xb0] sm:$0xff] %v5098
        %5131 = vst [vmem:[%s244 + $0xb8] sm:$0xff] %v5099
        %5132 = vst [vmem:[%s244 + $0xc0] sm:$0xff] %v5100
        %5133 = vst [vmem:[%s244 + $0xc8] sm:$0xff] %v5101
        %5134 = vst [vmem:[%s244 + $0xd0] sm:$0xff] %v5102
        %5135 = vst [vmem:[%s244 + $0xd8] sm:$0xff] %v5103
        %5136 = vst [vmem:[%s244 + $0xe0] sm:$0xff] %v5104
        %5137 = vst [vmem:[%s244 + $0xe8] sm:$0xff] %v5105
        %5138 = vst [vmem:[%s244 + $0xf0] sm:$0xff] %v5106
        %5139 = vst [vmem:[%s244 + $0xf8] sm:$0xff] %v5107
        %s5140 = sand.u32 %s159, 1
        %s5141 = scalar_lea.sflag [#allocation3], %s5140
        %s5142 = sand.u32 %s159, 1
        %s5143 = smul.addr %s5142, 256
        %s5144 = scalar_lea.vmem [#allocation2], %s5143
        // Predicated region
        $region45: #{double_conv_block.1} parent=43 // pred_check
          %p5145 = pneg %p169
        $region46: #{double_conv_block.1} parent=43 // pred_check_branch
          %5147 = sbr.rel (%p5145) target = $region48
        $region47: #{double_conv_block.1} parent=43 // pred_region
          %5149 = vsyncadd %s5141, 0
          %s5150 = smul.addr %s20, 32
          %s5151 = smul.addr %s5150, 8
          %s5152 = scalar_lea.hbm %s6, %s5151
          %s5153 = sshll.u32 %s5144, 4
          %s5154 = int_to_ptr.vmem [resolvable:$true] %s5153
          %s5155 = sshll.u32 %s5152, 4
          %s5156 = int_to_ptr.hbm [resolvable:$true] %s5155
          %5161 = dma.vmem_to_hbm [thread:$0]  %s5154, 4096, %s5156, %s5141, 128, 128, 8
        $region48: #{double_conv_block.1} parent=43 // pred_fallthru
          _
      $region44: #{double_conv_block.1} parent=5 // pred_fallthru
        _
      %p5162 = scmp.le.s32.totalorder 2, %s15
      // Predicated region
      $region49: #{double_conv_block.1} parent=5 // pred_check
        %p5163 = pneg %p5162
      $region50: #{double_conv_block.1} parent=5 // pred_check_branch
        %5165 = sbr.rel (%p5163) target = $region52
      $region51: #{double_conv_block.1} parent=5 // pred_region
        %s5166 = ssub.s32 %s15, 2
        // Predicated region
        $region53: #{double_conv_block.1} parent=51 // pred_check
          %p5167 = pneg %p175
        $region54: #{double_conv_block.1} parent=51 // pred_check_branch
          %5169 = sbr.rel (%p5167) target = $region56
        $region55: #{double_conv_block.1} parent=51 // pred_region
          %s5170 = sand.u32 %s160, 1
          %s5171 = scalar_lea.sflag [#allocation3], %s5170
          %s5172 = sand.u32 %s160, 1
          %s5173 = smul.addr %s5172, 256
          %s5174 = scalar_lea.vmem [#allocation2], %s5173
          %5176 = dma.done %s5171, 4096
        $region56: #{double_conv_block.1} parent=51 // pred_fallthru
          _
      $region52: #{double_conv_block.1} parent=5 // pred_fallthru
        _
    $region6: #{double_conv_block.1} parent=1 // loop_footer
      %s19 = sadd.s32 1, %s15
    $region7: #{double_conv_block.1} parent=1 // loop_footer_branch
      %14 = sbr.rel target = $region3
    $region8: #{double_conv_block.1} parent=1 // loop_exit
      _
    %5177 = vsyncpa [#allocation3], 1
    %s5178 = scalar_lea.sflag [#allocation3], 1
    %5179 = vsyncpa %s5178, 1

</llo_original>
